<compile_context>
chip_gen: v5e
topology: v5e:2x2
jax: 0.10.0
libtpu: 0.0.40
codegen_flags: <defaults>
</compile_context>

<pallas_src>
import jax
import jax.numpy as jnp
from jax import lax
from jax.experimental import pallas as pl
from jax.experimental.pallas import tpu as pltpu

F_IN = 1000      # feature count fixed by the module
F_PAD = 1024     # lane-aligned padded feature count
BN_EPS = 1e-5


def _num_w1_blocks():
    """2 W1 blocks on v7x (one per TensorCore), 1 on single-TC chips."""
    # On single-TC chips a grid of 2 is just a serial loop paying per-step
    # overhead on a ~1-2.5 us kernel, so use one block there.
    try:
        kind = jax.devices()[0].device_kind.lower()
    except Exception:
        return 1
    return 2 if "7" in kind else 1


def mlp_bn_kernel(x_ref, w1_ref, w2g_ref, part_ref):
    # x_ref:    [B, F_PAD]       bf16  (same block for every grid step)
    # w1_ref:   [F_PAD, F_HALF]  bf16  (this block's contiguous slice of W1^T,
    #                                   leading block axis squeezed away)
    # w2g_ref:  [1, F_HALF]      f32   (gamma * w2, this block's slice)
    # part_ref: [1, B, 1]        f32   (partial l2 result for this block)

    # l1: bf16 x bf16 -> f32 on the MXU (no up-cast materialized).
    # l1 bias omitted: training-mode BN subtracts the per-feature batch mean,
    # so a per-feature additive bias is a mathematical no-op.
    h = jnp.dot(x_ref[...], w1_ref[...],
                preferred_element_type=jnp.float32)          # [B, F_HALF]

    # BatchNorm1d (training mode): per-feature stats over the batch axis.
    mean = jnp.mean(h, axis=0, keepdims=True)                # [1, F_HALF]
    diff = h - mean
    var = jnp.mean(diff * diff, axis=0, keepdims=True)       # biased variance

    # Padded features (1000..1023): their W1 columns are zero, so diff == 0
    # and w2g == 0; rsqrt(eps) is finite and they contribute exactly 0.
    # Intentional -- do not "fix".
    scale = w2g_ref[...] * lax.rsqrt(var + BN_EPS)           # gamma folded in

    # l2 partial contraction as a VPU multiply + lane reduction (N=1 output,
    # no point using the MXU). beta/b2 terms are added in the wrapper.
    part_ref[...] = jnp.sum(diff * scale, axis=-1, keepdims=True)[None]


def prepare_params(w1, b1, gamma, beta, w2, b2, n_blocks):
    """One-time parameter prep: PyTorch layouts in, kernel layouts out."""
    del b1  # no-op under training-mode BatchNorm (see kernel comment)
    w1 = jnp.asarray(w1, jnp.float32)                 # [F_out, F_in]
    gamma = jnp.asarray(gamma, jnp.float32)           # [F_in]
    beta = jnp.asarray(beta, jnp.float32)             # [F_in]
    w2 = jnp.asarray(w2, jnp.float32).reshape(-1)     # [F_in]
    b2 = jnp.asarray(b2, jnp.float32).reshape(1, 1)

    # W1^T, zero-padded to [F_PAD, F_PAD], stored bf16, then pre-split into a
    # contiguous [n_blocks, F_PAD, F_HALF] slab -> one linear DMA per block.
    w1_t = (jnp.zeros((F_PAD, F_PAD), jnp.bfloat16)
            .at[:F_IN, :F_IN].set(w1.T.astype(jnp.bfloat16)))
    f_half = F_PAD // n_blocks
    w1_blocks = w1_t.reshape(F_PAD, n_blocks, f_half).transpose(1, 0, 2)

    # Fold gamma into the l2 row and (beta, b2) into a single scalar constant.
    w2g = jnp.zeros((1, F_PAD), jnp.float32).at[0, :F_IN].set(gamma * w2)
    const = b2 + jnp.dot(beta, w2)                    # [1, 1]
    return dict(w1=w1_blocks, w2g=w2g, const=const)


def prepare_input(x):
    """Pad 1000->1024 and cast to bf16 once, outside the hot path."""
    x = jnp.asarray(x, jnp.float32)
    B = x.shape[0]
    return (jnp.zeros((B, F_PAD), jnp.bfloat16)
            .at[:, :F_IN].set(x.astype(jnp.bfloat16)))


def model_forward(x_pad, params):
    n_blocks, _, f_half = params["w1"].shape
    B = x_pad.shape[0]

    parts = pl.pallas_call(
        mlp_bn_kernel,
        out_shape=jax.ShapeDtypeStruct((n_blocks, B, 1), jnp.float32),
        grid=(n_blocks,),
        in_specs=[
            pl.BlockSpec((B, F_PAD), lambda j: (0, 0)),            # x (resident, bf16)
            pl.BlockSpec((None, F_PAD, f_half), lambda j: (j, 0, 0)),  # W1^T block (bf16)
            pl.BlockSpec((1, f_half), lambda j: (0, j)),           # gamma*w2 slice
        ],
        out_specs=pl.BlockSpec((1, B, 1), lambda j: (j, 0, 0)),
        compiler_params=pltpu.CompilerParams(
            # On v7x the 2-block grid is intended to shard across both
            # TensorCores; on 1-TC chips n_blocks == 1 so this is moot.
            # (If xprof shows no core sharding on v7x, switch to
            #  pltpu.CORE_PARALLEL / pl.core_map.)
            dimension_semantics=("parallel",),
            vmem_limit_bytes=32 << 20,
        ),
    )(x_pad, params["w1"], params["w2g"])

    out = parts[0] if n_blocks == 1 else jnp.sum(parts, axis=0)   # [B, 1]
    return out + params["const"]


def reference_forward(x, w1, b1, gamma, beta, w2, b2):
    """Pure-JAX f32 reference matching PyTorch training-mode semantics."""
    h = jnp.dot(x, w1.T, precision=lax.Precision.HIGHEST) + b1
    mean = jnp.mean(h, axis=0, keepdims=True)
    var = jnp.mean((h - mean) ** 2, axis=0, keepdims=True)
    y = (h - mean) * lax.rsqrt(var + BN_EPS) * gamma + beta
    return jnp.dot(y, w2.T, precision=lax.Precision.HIGHEST) + b2


if __name__ == "__main__":
    B = 8
    key = jax.random.PRNGKey(0)
    x = jax.random.normal(key, (B, F_IN), dtype=jnp.float32)

    # Parameters exactly as the PyTorch module's __init__ leaves them.
    w1 = jnp.ones((F_IN, F_IN), jnp.float32)   # l1.weight = ones
    b1 = jnp.ones((F_IN,), jnp.float32)        # l1.bias   = ones
    gamma = jnp.ones((F_IN,), jnp.float32)     # bn.weight = ones
    beta = jnp.zeros((F_IN,), jnp.float32)     # bn.bias   = zeros
    w2 = jnp.ones((1, F_IN), jnp.float32)      # l2.weight = ones
    b2 = jnp.ones((1,), jnp.float32)           # l2.bias   = ones

    n_blocks = _num_w1_blocks()
    params = prepare_params(w1, b1, gamma, beta, w2, b2, n_blocks)
    x_pad = prepare_input(x)

    forward = jax.jit(model_forward)
    out = jax.block_until_ready(forward(x_pad, params))
    assert out.shape == (B, 1)

    # Tight check: f32 reference evaluated on the same bf16-quantized input
    # (verifies the kernel math independently of the input-precision choice).
    x_q = x.astype(jnp.bfloat16).astype(jnp.float32)
    ref_q = reference_forward(x_q, w1, b1, gamma, beta, w2, b2)
    assert jnp.allclose(out, ref_q, atol=1e-1, rtol=1e-3), (out, ref_q)

    # Loose sanity check vs the pure f32-input reference: outputs are O(1e3),
    # so this only guards against gross errors beyond bf16 input quantization.
    ref_f32 = reference_forward(x, w1, b1, gamma, beta, w2, b2)
    assert jnp.allclose(out, ref_f32, atol=100.0, rtol=5e-2), (out, ref_f32)

    print("KERNEL_OK")
</pallas_src>

<mosaic_0001>
module attributes {stable_mosaic.version = 11 : i64} {
  func.func @mlp_bn_kernel(%arg0: i32, %arg1: memref<8x1024xbf16, #tpu.memory_space<vmem>>, %arg2: memref<1x1024x1024xbf16, #tpu.memory_space<vmem>>, %arg3: memref<1x1024xf32, #tpu.memory_space<vmem>>, %arg4: memref<1x8x1xf32, #tpu.memory_space<vmem>>) attributes {dimension_semantics = [#tpu.dimension_semantics<parallel>], iteration_bounds = array<i64: 1>, scalar_prefetch = 0 : i64, scratch_operands = 0 : i64, tpu.core_type = #tpu.core_type<tc>, window_params = [{pipeline_mode = #tpu.pipeline_mode<synchronous>, transform_indices = @transform_0, window_bounds = array<i64: 8, 1024>}, {transform_indices = @transform_1, window_bounds = array<i64: 1, 1024, 1024>}, {transform_indices = @transform_2, window_bounds = array<i64: 1, 1024>}, {transform_indices = @transform_3, window_bounds = array<i64: 1, 8, 1>}]} {
    %c0 = arith.constant 0 : index
    %c0_0 = arith.constant 0 : index
    %0 = vector.load %arg1[%c0, %c0_0] : memref<8x1024xbf16, #tpu.memory_space<vmem>>, vector<8x1024xbf16>
    %c0_1 = arith.constant 0 : index
    %c0_2 = arith.constant 0 : index
    %c0_3 = arith.constant 0 : index
    %1 = vector.load %arg2[%c0_1, %c0_2, %c0_3] : memref<1x1024x1024xbf16, #tpu.memory_space<vmem>>, vector<1x1024x1024xbf16>
    %2 = vector.shape_cast %1 : vector<1x1024x1024xbf16> to vector<1024x1024xbf16>
    %cst = arith.constant dense<0.000000e+00> : vector<8x1024xf32>
    %3 = tpu.matmul %0, %2, %cst {dimension_numbers = #tpu.dot_dimension_numbers<[1], [0], [0], [1], [0, 0, 1, 1], [], []>} : vector<8x1024xbf16>, vector<1024x1024xbf16>, vector<8x1024xf32> -> vector<8x1024xf32>
    %cst_4 = arith.constant dense<0.000000e+00> : vector<1024xf32>
    %4 = vector.multi_reduction <add>, %3, %cst_4 [0] : vector<8x1024xf32> to vector<1024xf32>
    %5 = vector.shape_cast %4 : vector<1024xf32> to vector<1x1024xf32>
    %cst_5 = arith.constant 8.000000e+00 : f32
    %6 = vector.broadcast %cst_5 : f32 to vector<1x1024xf32>
    %7 = arith.divf %5, %6 : vector<1x1024xf32>
    %8 = vector.broadcast %7 : vector<1x1024xf32> to vector<8x1024xf32>
    %9 = arith.subf %3, %8 : vector<8x1024xf32>
    %10 = arith.mulf %9, %9 : vector<8x1024xf32>
    %cst_6 = arith.constant dense<0.000000e+00> : vector<1024xf32>
    %11 = vector.multi_reduction <add>, %10, %cst_6 [0] : vector<8x1024xf32> to vector<1024xf32>
    %12 = vector.shape_cast %11 : vector<1024xf32> to vector<1x1024xf32>
    %cst_7 = arith.constant 8.000000e+00 : f32
    %13 = vector.broadcast %cst_7 : f32 to vector<1x1024xf32>
    %14 = arith.divf %12, %13 : vector<1x1024xf32>
    %c0_8 = arith.constant 0 : index
    %c0_9 = arith.constant 0 : index
    %15 = vector.load %arg3[%c0_8, %c0_9] : memref<1x1024xf32, #tpu.memory_space<vmem>>, vector<1x1024xf32>
    %cst_10 = arith.constant 9.99999974E-6 : f32
    %16 = vector.broadcast %cst_10 : f32 to vector<1x1024xf32>
    %17 = arith.addf %14, %16 : vector<1x1024xf32>
    %18 = math.rsqrt %17 : vector<1x1024xf32>
    %19 = arith.mulf %15, %18 : vector<1x1024xf32>
    %20 = vector.broadcast %19 : vector<1x1024xf32> to vector<8x1024xf32>
    %21 = arith.mulf %9, %20 : vector<8x1024xf32>
    %cst_11 = arith.constant dense<0.000000e+00> : vector<8xf32>
    %22 = vector.multi_reduction <add>, %21, %cst_11 [1] : vector<8x1024xf32> to vector<8xf32>
    %23 = vector.shape_cast %22 : vector<8xf32> to vector<8x1xf32>
    %24 = vector.shape_cast %23 : vector<8x1xf32> to vector<1x8x1xf32>
    %c0_12 = arith.constant 0 : index
    %c0_13 = arith.constant 0 : index
    %c0_14 = arith.constant 0 : index
    %25 = vector.load %arg4[%c0_12, %c0_13, %c0_14] : memref<1x8x1xf32, #tpu.memory_space<vmem>>, vector<1x8x1xf32>
    tpu.vector_store %arg4[%c0_12, %c0_13, %c0_14], %24 {strides = array<i32>} : memref<1x8x1xf32, #tpu.memory_space<vmem>>, vector<1x8x1xf32>,
    return
  }
  func.func @transform_0(%arg0: i32) -> (i32, i32) {
    %c0_i32 = arith.constant 0 : i32
    %c0_i32_0 = arith.constant 0 : i32
    %c0_i32_1 = arith.constant 0 : i32
    return %c0_i32, %c0_i32_0 : i32, i32
  }
  func.func @transform_1(%arg0: i32) -> (i32, i32, i32) {
    %c0_i32 = arith.constant 0 : i32
    %c0_i32_0 = arith.constant 0 : i32
    %c0_i32_1 = arith.constant 0 : i32
    return %arg0, %c0_i32, %c0_i32_0 : i32, i32, i32
  }
  func.func @transform_2(%arg0: i32) -> (i32, i32) {
    %c0_i32 = arith.constant 0 : i32
    %c0_i32_0 = arith.constant 0 : i32
    return %c0_i32, %arg0 : i32, i32
  }
  func.func @transform_3(%arg0: i32) -> (i32, i32, i32) {
    %c0_i32 = arith.constant 0 : i32
    %c0_i32_0 = arith.constant 0 : i32
    %c0_i32_1 = arith.constant 0 : i32
    return %arg0, %c0_i32, %c0_i32_0 : i32, i32, i32
  }
}

</mosaic_0001>

<llo_original>
// kernel: model_forward.1
$region0: #{model_forward.1}
  #allocation0 [shape = 'u32[]', space=smem, size = 0x4, offset = 0x4, fixed_abs, tag = 'smem constant byte address 0x4 - core index']
  #allocation1 [shape = 'u32[72,128]{1,0:T(1,128)}', space=vmem, size = 0x9000, scoped, tag = 'internal scratch']
  %s0 = inlined_call_operand.hbm [shape: bf16[8,1024], index: 0, kind: input, shape index: {}]
  %s1 = inlined_call_operand.hbm [shape: bf16[1,1024,1024], index: 1, kind: input, shape index: {}]
  %s2 = inlined_call_operand.hbm [shape: f32[1,1024], index: 2, kind: input, shape index: {}]
  %s3 = inlined_call_operand.vmem [shape: f32[1,8,1], index: 3, kind: output, shape index: {}]
  %s4 = sld [smem:[#allocation0]]
  $region34: #{model_forward.1} parent=0
    _
  %s6 = ssub.s32 1, %s4
  %s7 = scalar_select 0, %s6, %s4
  $region1: #{model_forward.1} parent=0
    #allocation2 [shape = 'u8[16384]{0}', space=vmem, size = 0x4000, scoped, tag = 'input window, operand 0, single buffered']
    #allocation3 [shape = 's32[1]{0}', space=sflag, size = 0x4, scoped, tag = 'scoped memory for model_forward.1']
    #allocation4 [shape = 'u8[2097152]{0}', space=vmem, size = 0x200000, scoped, tag = 'input window, operand 1, single buffered']
    #allocation5 [shape = 's32[1]{0}', space=sflag, size = 0x4, scoped, tag = 'scoped memory for model_forward.1']
    #allocation6 [shape = 'u8[4096]{0}', space=vmem, size = 0x1000, scoped, tag = 'input window, operand 2, single buffered']
    %8 = vsyncpa [#allocation3], 0
    %9 = vsyncpa [#allocation5], 0
    // Predicated region
    $region2: #{model_forward.1} parent=1 // pred_check
      _
    $region3: #{model_forward.1} parent=1 // pred_check_branch
      %11 = sbr.rel (0) target = $region5
    $region4: #{model_forward.1} parent=1 // pred_region
      %13 = vsyncadd [#allocation3], 0
      %s15 = sshll.u32 %s0, 4
      %s16 = int_to_ptr.hbm [resolvable:$true] %s15
      %s17 = sshll.u32 [#allocation2], 4
      %s18 = int_to_ptr.vmem [resolvable:$true] %s17
      %20 = dma.hbm_to_vmem [thread:$0]  %s16, 512, %s18, [#allocation3]
    $region5: #{model_forward.1} parent=1 // pred_fallthru
      _
    // Predicated region
    $region6: #{model_forward.1} parent=1 // pred_check
      _
    $region7: #{model_forward.1} parent=1 // pred_check_branch
      %22 = sbr.rel (0) target = $region9
    $region8: #{model_forward.1} parent=1 // pred_region
      %24 = vsyncadd [#allocation5], 0
      %s25 = sshll.u32 %s1, 4
      %s26 = int_to_ptr.hbm [resolvable:$true] %s25
      %s27 = sshll.u32 [#allocation4], 4
      %s28 = int_to_ptr.vmem [resolvable:$true] %s27
      %33 = dma.hbm_to_vmem [thread:$0]  %s26, 65536, %s28, [#allocation5], 512, 512, 32
    $region9: #{model_forward.1} parent=1 // pred_fallthru
      _
    // Predicated region
    $region10: #{model_forward.1} parent=1 // pred_check
      _
    $region11: #{model_forward.1} parent=1 // pred_check_branch
      %35 = sbr.rel (0) target = $region13
    $region12: #{model_forward.1} parent=1 // pred_region
      %37 = vsyncadd [#allocation5], 0
      %s39 = sshll.u32 %s2, 4
      %s40 = int_to_ptr.hbm [resolvable:$true] %s39
      %s41 = sshll.u32 [#allocation6], 4
      %s42 = int_to_ptr.vmem [resolvable:$true] %s41
      %44 = dma.hbm_to_vmem [thread:$0]  %s40, 128, %s42, [#allocation5]
    $region13: #{model_forward.1} parent=1 // pred_fallthru
      _
    // Predicated region
    $region14: #{model_forward.1} parent=1 // pred_check
      _
    $region15: #{model_forward.1} parent=1 // pred_check_branch
      %46 = sbr.rel (0) target = $region17
    $region16: #{model_forward.1} parent=1 // pred_region
      %48 = dma.done [#allocation3], 512
    $region17: #{model_forward.1} parent=1 // pred_fallthru
      _
    // Predicated region
    $region18: #{model_forward.1} parent=1 // pred_check
      _
    $region19: #{model_forward.1} parent=1 // pred_check_branch
      %50 = sbr.rel (0) target = $region21
    $region20: #{model_forward.1} parent=1 // pred_region
      %52 = dma.done [#allocation5], 65536
    $region21: #{model_forward.1} parent=1 // pred_fallthru
      _
    // Predicated region
    $region22: #{model_forward.1} parent=1 // pred_check
      _
    $region23: #{model_forward.1} parent=1 // pred_check_branch
      %54 = sbr.rel (0) target = $region25
    $region24: #{model_forward.1} parent=1 // pred_region
      %56 = dma.done [#allocation5], 128
    $region25: #{model_forward.1} parent=1 // pred_fallthru
      _
    %v57 = vld [vmem:[#allocation2] sm:$0xff]
    %v58 = vld [vmem:[#allocation2 + $0x8] sm:$0xff]
    %v59 = vld [vmem:[#allocation2 + $0x10] sm:$0xff]
    %v60 = vld [vmem:[#allocation2 + $0x18] sm:$0xff]
    %v61 = vld [vmem:[#allocation4] sm:$0xff]
    %v62 = vld [vmem:[#allocation4 + $0x8] sm:$0xff]
    %v63 = vld [vmem:[#allocation4 + $0x10] sm:$0xff]
    %v64 = vld [vmem:[#allocation4 + $0x18] sm:$0xff]
    %v65 = vld [vmem:[#allocation4 + $0x20] sm:$0xff]
    %v66 = vld [vmem:[#allocation4 + $0x28] sm:$0xff]
    %v67 = vld [vmem:[#allocation4 + $0x30] sm:$0xff]
    %v68 = vld [vmem:[#allocation4 + $0x38] sm:$0xff]
    %v69 = vld [vmem:[#allocation4 + $0x40] sm:$0xff]
    %v70 = vld [vmem:[#allocation4 + $0x48] sm:$0xff]
    %v71 = vld [vmem:[#allocation4 + $0x50] sm:$0xff]
    %v72 = vld [vmem:[#allocation4 + $0x58] sm:$0xff]
    %v73 = vld [vmem:[#allocation4 + $0x60] sm:$0xff]
    %v74 = vld [vmem:[#allocation4 + $0x68] sm:$0xff]
    %v75 = vld [vmem:[#allocation4 + $0x70] sm:$0xff]
    %v76 = vld [vmem:[#allocation4 + $0x78] sm:$0xff]
    %v77 = vld [vmem:[#allocation4 + $0x80] sm:$0xff]
    %v78 = vld [vmem:[#allocation4 + $0x88] sm:$0xff]
    %v79 = vld [vmem:[#allocation4 + $0x90] sm:$0xff]
    %v80 = vld [vmem:[#allocation4 + $0x98] sm:$0xff]
    %v81 = vld [vmem:[#allocation4 + $0xa0] sm:$0xff]
    %v82 = vld [vmem:[#allocation4 + $0xa8] sm:$0xff]
    %v83 = vld [vmem:[#allocation4 + $0xb0] sm:$0xff]
    %v84 = vld [vmem:[#allocation4 + $0xb8] sm:$0xff]
    %v85 = vld [vmem:[#allocation4 + $0xc0] sm:$0xff]
    %v86 = vld [vmem:[#allocation4 + $0xc8] sm:$0xff]
    %v87 = vld [vmem:[#allocation4 + $0xd0] sm:$0xff]
    %v88 = vld [vmem:[#allocation4 + $0xd8] sm:$0xff]
    %v89 = vld [vmem:[#allocation4 + $0xe0] sm:$0xff]
    %v90 = vld [vmem:[#allocation4 + $0xe8] sm:$0xff]
    %v91 = vld [vmem:[#allocation4 + $0xf0] sm:$0xff]
    %v92 = vld [vmem:[#allocation4 + $0xf8] sm:$0xff]
    %v93 = vld [vmem:[#allocation4 + $0x100] sm:$0xff]
    %v94 = vld [vmem:[#allocation4 + $0x108] sm:$0xff]
    %v95 = vld [vmem:[#allocation4 + $0x110] sm:$0xff]
    %v96 = vld [vmem:[#allocation4 + $0x118] sm:$0xff]
    %v97 = vld [vmem:[#allocation4 + $0x120] sm:$0xff]
    %v98 = vld [vmem:[#allocation4 + $0x128] sm:$0xff]
    %v99 = vld [vmem:[#allocation4 + $0x130] sm:$0xff]
    %v100 = vld [vmem:[#allocation4 + $0x138] sm:$0xff]
    %v101 = vld [vmem:[#allocation4 + $0x140] sm:$0xff]
    %v102 = vld [vmem:[#allocation4 + $0x148] sm:$0xff]
    %v103 = vld [vmem:[#allocation4 + $0x150] sm:$0xff]
    %v104 = vld [vmem:[#allocation4 + $0x158] sm:$0xff]
    %v105 = vld [vmem:[#allocation4 + $0x160] sm:$0xff]
    %v106 = vld [vmem:[#allocation4 + $0x168] sm:$0xff]
    %v107 = vld [vmem:[#allocation4 + $0x170] sm:$0xff]
    %v108 = vld [vmem:[#allocation4 + $0x178] sm:$0xff]
    %v109 = vld [vmem:[#allocation4 + $0x180] sm:$0xff]
    %v110 = vld [vmem:[#allocation4 + $0x188] sm:$0xff]
    %v111 = vld [vmem:[#allocation4 + $0x190] sm:$0xff]
    %v112 = vld [vmem:[#allocation4 + $0x198] sm:$0xff]
    %v113 = vld [vmem:[#allocation4 + $0x1a0] sm:$0xff]
    %v114 = vld [vmem:[#allocation4 + $0x1a8] sm:$0xff]
    %v115 = vld [vmem:[#allocation4 + $0x1b0] sm:$0xff]
    %v116 = vld [vmem:[#allocation4 + $0x1b8] sm:$0xff]
    %v117 = vld [vmem:[#allocation4 + $0x1c0] sm:$0xff]
    %v118 = vld [vmem:[#allocation4 + $0x1c8] sm:$0xff]
    %v119 = vld [vmem:[#allocation4 + $0x1d0] sm:$0xff]
    %v120 = vld [vmem:[#allocation4 + $0x1d8] sm:$0xff]
    %v121 = vld [vmem:[#allocation4 + $0x1e0] sm:$0xff]
    %v122 = vld [vmem:[#allocation4 + $0x1e8] sm:$0xff]
    %v123 = vld [vmem:[#allocation4 + $0x1f0] sm:$0xff]
    %v124 = vld [vmem:[#allocation4 + $0x1f8] sm:$0xff]
    %v125 = vld [vmem:[#allocation4 + $0x200] sm:$0xff]
    %v126 = vld [vmem:[#allocation4 + $0x208] sm:$0xff]
    %v127 = vld [vmem:[#allocation4 + $0x210] sm:$0xff]
    %v128 = vld [vmem:[#allocation4 + $0x218] sm:$0xff]
    %v129 = vld [vmem:[#allocation4 + $0x220] sm:$0xff]
    %v130 = vld [vmem:[#allocation4 + $0x228] sm:$0xff]
    %v131 = vld [vmem:[#allocation4 + $0x230] sm:$0xff]
    %v132 = vld [vmem:[#allocation4 + $0x238] sm:$0xff]
    %v133 = vld [vmem:[#allocation4 + $0x240] sm:$0xff]
    %v134 = vld [vmem:[#allocation4 + $0x248] sm:$0xff]
    %v135 = vld [vmem:[#allocation4 + $0x250] sm:$0xff]
    %v136 = vld [vmem:[#allocation4 + $0x258] sm:$0xff]
    %v137 = vld [vmem:[#allocation4 + $0x260] sm:$0xff]
    %v138 = vld [vmem:[#allocation4 + $0x268] sm:$0xff]
    %v139 = vld [vmem:[#allocation4 + $0x270] sm:$0xff]
    %v140 = vld [vmem:[#allocation4 + $0x278] sm:$0xff]
    %v141 = vld [vmem:[#allocation4 + $0x280] sm:$0xff]
    %v142 = vld [vmem:[#allocation4 + $0x288] sm:$0xff]
    %v143 = vld [vmem:[#allocation4 + $0x290] sm:$0xff]
    %v144 = vld [vmem:[#allocation4 + $0x298] sm:$0xff]
    %v145 = vld [vmem:[#allocation4 + $0x2a0] sm:$0xff]
    %v146 = vld [vmem:[#allocation4 + $0x2a8] sm:$0xff]
    %v147 = vld [vmem:[#allocation4 + $0x2b0] sm:$0xff]
    %v148 = vld [vmem:[#allocation4 + $0x2b8] sm:$0xff]
    %v149 = vld [vmem:[#allocation4 + $0x2c0] sm:$0xff]
    %v150 = vld [vmem:[#allocation4 + $0x2c8] sm:$0xff]
    %v151 = vld [vmem:[#allocation4 + $0x2d0] sm:$0xff]
    %v152 = vld [vmem:[#allocation4 + $0x2d8] sm:$0xff]
    %v153 = vld [vmem:[#allocation4 + $0x2e0] sm:$0xff]
    %v154 = vld [vmem:[#allocation4 + $0x2e8] sm:$0xff]
    %v155 = vld [vmem:[#allocation4 + $0x2f0] sm:$0xff]
    %v156 = vld [vmem:[#allocation4 + $0x2f8] sm:$0xff]
    %v157 = vld [vmem:[#allocation4 + $0x300] sm:$0xff]
    %v158 = vld [vmem:[#allocation4 + $0x308] sm:$0xff]
    %v159 = vld [vmem:[#allocation4 + $0x310] sm:$0xff]
    %v160 = vld [vmem:[#allocation4 + $0x318] sm:$0xff]
    %v161 = vld [vmem:[#allocation4 + $0x320] sm:$0xff]
    %v162 = vld [vmem:[#allocation4 + $0x328] sm:$0xff]
    %v163 = vld [vmem:[#allocation4 + $0x330] sm:$0xff]
    %v164 = vld [vmem:[#allocation4 + $0x338] sm:$0xff]
    %v165 = vld [vmem:[#allocation4 + $0x340] sm:$0xff]
    %v166 = vld [vmem:[#allocation4 + $0x348] sm:$0xff]
    %v167 = vld [vmem:[#allocation4 + $0x350] sm:$0xff]
    %v168 = vld [vmem:[#allocation4 + $0x358] sm:$0xff]
    %v169 = vld [vmem:[#allocation4 + $0x360] sm:$0xff]
    %v170 = vld [vmem:[#allocation4 + $0x368] sm:$0xff]
    %v171 = vld [vmem:[#allocation4 + $0x370] sm:$0xff]
    %v172 = vld [vmem:[#allocation4 + $0x378] sm:$0xff]
    %v173 = vld [vmem:[#allocation4 + $0x380] sm:$0xff]
    %v174 = vld [vmem:[#allocation4 + $0x388] sm:$0xff]
    %v175 = vld [vmem:[#allocation4 + $0x390] sm:$0xff]
    %v176 = vld [vmem:[#allocation4 + $0x398] sm:$0xff]
    %v177 = vld [vmem:[#allocation4 + $0x3a0] sm:$0xff]
    %v178 = vld [vmem:[#allocation4 + $0x3a8] sm:$0xff]
    %v179 = vld [vmem:[#allocation4 + $0x3b0] sm:$0xff]
    %v180 = vld [vmem:[#allocation4 + $0x3b8] sm:$0xff]
    %v181 = vld [vmem:[#allocation4 + $0x3c0] sm:$0xff]
    %v182 = vld [vmem:[#allocation4 + $0x3c8] sm:$0xff]
    %v183 = vld [vmem:[#allocation4 + $0x3d0] sm:$0xff]
    %v184 = vld [vmem:[#allocation4 + $0x3d8] sm:$0xff]
    %v185 = vld [vmem:[#allocation4 + $0x3e0] sm:$0xff]
    %v186 = vld [vmem:[#allocation4 + $0x3e8] sm:$0xff]
    %v187 = vld [vmem:[#allocation4 + $0x3f0] sm:$0xff]
    %v188 = vld [vmem:[#allocation4 + $0x3f8] sm:$0xff]
    %v189 = vld [vmem:[#allocation4 + $0x400] sm:$0xff]
    %v190 = vld [vmem:[#allocation4 + $0x408] sm:$0xff]
    %v191 = vld [vmem:[#allocation4 + $0x410] sm:$0xff]
    %v192 = vld [vmem:[#allocation4 + $0x418] sm:$0xff]
    %v193 = vld [vmem:[#allocation4 + $0x420] sm:$0xff]
    %v194 = vld [vmem:[#allocation4 + $0x428] sm:$0xff]
    %v195 = vld [vmem:[#allocation4 + $0x430] sm:$0xff]
    %v196 = vld [vmem:[#allocation4 + $0x438] sm:$0xff]
    %v197 = vld [vmem:[#allocation4 + $0x440] sm:$0xff]
    %v198 = vld [vmem:[#allocation4 + $0x448] sm:$0xff]
    %v199 = vld [vmem:[#allocation4 + $0x450] sm:$0xff]
    %v200 = vld [vmem:[#allocation4 + $0x458] sm:$0xff]
    %v201 = vld [vmem:[#allocation4 + $0x460] sm:$0xff]
    %v202 = vld [vmem:[#allocation4 + $0x468] sm:$0xff]
    %v203 = vld [vmem:[#allocation4 + $0x470] sm:$0xff]
    %v204 = vld [vmem:[#allocation4 + $0x478] sm:$0xff]
    %v205 = vld [vmem:[#allocation4 + $0x480] sm:$0xff]
    %v206 = vld [vmem:[#allocation4 + $0x488] sm:$0xff]
    %v207 = vld [vmem:[#allocation4 + $0x490] sm:$0xff]
    %v208 = vld [vmem:[#allocation4 + $0x498] sm:$0xff]
    %v209 = vld [vmem:[#allocation4 + $0x4a0] sm:$0xff]
    %v210 = vld [vmem:[#allocation4 + $0x4a8] sm:$0xff]
    %v211 = vld [vmem:[#allocation4 + $0x4b0] sm:$0xff]
    %v212 = vld [vmem:[#allocation4 + $0x4b8] sm:$0xff]
    %v213 = vld [vmem:[#allocation4 + $0x4c0] sm:$0xff]
    %v214 = vld [vmem:[#allocation4 + $0x4c8] sm:$0xff]
    %v215 = vld [vmem:[#allocation4 + $0x4d0] sm:$0xff]
    %v216 = vld [vmem:[#allocation4 + $0x4d8] sm:$0xff]
    %v217 = vld [vmem:[#allocation4 + $0x4e0] sm:$0xff]
    %v218 = vld [vmem:[#allocation4 + $0x4e8] sm:$0xff]
    %v219 = vld [vmem:[#allocation4 + $0x4f0] sm:$0xff]
    %v220 = vld [vmem:[#allocation4 + $0x4f8] sm:$0xff]
    %v221 = vld [vmem:[#allocation4 + $0x500] sm:$0xff]
    %v222 = vld [vmem:[#allocation4 + $0x508] sm:$0xff]
    %v223 = vld [vmem:[#allocation4 + $0x510] sm:$0xff]
    %v224 = vld [vmem:[#allocation4 + $0x518] sm:$0xff]
    %v225 = vld [vmem:[#allocation4 + $0x520] sm:$0xff]
    %v226 = vld [vmem:[#allocation4 + $0x528] sm:$0xff]
    %v227 = vld [vmem:[#allocation4 + $0x530] sm:$0xff]
    %v228 = vld [vmem:[#allocation4 + $0x538] sm:$0xff]
    %v229 = vld [vmem:[#allocation4 + $0x540] sm:$0xff]
    %v230 = vld [vmem:[#allocation4 + $0x548] sm:$0xff]
    %v231 = vld [vmem:[#allocation4 + $0x550] sm:$0xff]
    %v232 = vld [vmem:[#allocation4 + $0x558] sm:$0xff]
    %v233 = vld [vmem:[#allocation4 + $0x560] sm:$0xff]
    %v234 = vld [vmem:[#allocation4 + $0x568] sm:$0xff]
    %v235 = vld [vmem:[#allocation4 + $0x570] sm:$0xff]
    %v236 = vld [vmem:[#allocation4 + $0x578] sm:$0xff]
    %v237 = vld [vmem:[#allocation4 + $0x580] sm:$0xff]
    %v238 = vld [vmem:[#allocation4 + $0x588] sm:$0xff]
    %v239 = vld [vmem:[#allocation4 + $0x590] sm:$0xff]
    %v240 = vld [vmem:[#allocation4 + $0x598] sm:$0xff]
    %v241 = vld [vmem:[#allocation4 + $0x5a0] sm:$0xff]
    %v242 = vld [vmem:[#allocation4 + $0x5a8] sm:$0xff]
    %v243 = vld [vmem:[#allocation4 + $0x5b0] sm:$0xff]
    %v244 = vld [vmem:[#allocation4 + $0x5b8] sm:$0xff]
    %v245 = vld [vmem:[#allocation4 + $0x5c0] sm:$0xff]
    %v246 = vld [vmem:[#allocation4 + $0x5c8] sm:$0xff]
    %v247 = vld [vmem:[#allocation4 + $0x5d0] sm:$0xff]
    %v248 = vld [vmem:[#allocation4 + $0x5d8] sm:$0xff]
    %v249 = vld [vmem:[#allocation4 + $0x5e0] sm:$0xff]
    %v250 = vld [vmem:[#allocation4 + $0x5e8] sm:$0xff]
    %v251 = vld [vmem:[#allocation4 + $0x5f0] sm:$0xff]
    %v252 = vld [vmem:[#allocation4 + $0x5f8] sm:$0xff]
    %v253 = vld [vmem:[#allocation4 + $0x600] sm:$0xff]
    %v254 = vld [vmem:[#allocation4 + $0x608] sm:$0xff]
    %v255 = vld [vmem:[#allocation4 + $0x610] sm:$0xff]
    %v256 = vld [vmem:[#allocation4 + $0x618] sm:$0xff]
    %v257 = vld [vmem:[#allocation4 + $0x620] sm:$0xff]
    %v258 = vld [vmem:[#allocation4 + $0x628] sm:$0xff]
    %v259 = vld [vmem:[#allocation4 + $0x630] sm:$0xff]
    %v260 = vld [vmem:[#allocation4 + $0x638] sm:$0xff]
    %v261 = vld [vmem:[#allocation4 + $0x640] sm:$0xff]
    %v262 = vld [vmem:[#allocation4 + $0x648] sm:$0xff]
    %v263 = vld [vmem:[#allocation4 + $0x650] sm:$0xff]
    %v264 = vld [vmem:[#allocation4 + $0x658] sm:$0xff]
    %v265 = vld [vmem:[#allocation4 + $0x660] sm:$0xff]
    %v266 = vld [vmem:[#allocation4 + $0x668] sm:$0xff]
    %v267 = vld [vmem:[#allocation4 + $0x670] sm:$0xff]
    %v268 = vld [vmem:[#allocation4 + $0x678] sm:$0xff]
    %v269 = vld [vmem:[#allocation4 + $0x680] sm:$0xff]
    %v270 = vld [vmem:[#allocation4 + $0x688] sm:$0xff]
    %v271 = vld [vmem:[#allocation4 + $0x690] sm:$0xff]
    %v272 = vld [vmem:[#allocation4 + $0x698] sm:$0xff]
    %v273 = vld [vmem:[#allocation4 + $0x6a0] sm:$0xff]
    %v274 = vld [vmem:[#allocation4 + $0x6a8] sm:$0xff]
    %v275 = vld [vmem:[#allocation4 + $0x6b0] sm:$0xff]
    %v276 = vld [vmem:[#allocation4 + $0x6b8] sm:$0xff]
    %v277 = vld [vmem:[#allocation4 + $0x6c0] sm:$0xff]
    %v278 = vld [vmem:[#allocation4 + $0x6c8] sm:$0xff]
    %v279 = vld [vmem:[#allocation4 + $0x6d0] sm:$0xff]
    %v280 = vld [vmem:[#allocation4 + $0x6d8] sm:$0xff]
    %v281 = vld [vmem:[#allocation4 + $0x6e0] sm:$0xff]
    %v282 = vld [vmem:[#allocation4 + $0x6e8] sm:$0xff]
    %v283 = vld [vmem:[#allocation4 + $0x6f0] sm:$0xff]
    %v284 = vld [vmem:[#allocation4 + $0x6f8] sm:$0xff]
    %v285 = vld [vmem:[#allocation4 + $0x700] sm:$0xff]
    %v286 = vld [vmem:[#allocation4 + $0x708] sm:$0xff]
    %v287 = vld [vmem:[#allocation4 + $0x710] sm:$0xff]
    %v288 = vld [vmem:[#allocation4 + $0x718] sm:$0xff]
    %v289 = vld [vmem:[#allocation4 + $0x720] sm:$0xff]
    %v290 = vld [vmem:[#allocation4 + $0x728] sm:$0xff]
    %v291 = vld [vmem:[#allocation4 + $0x730] sm:$0xff]
    %v292 = vld [vmem:[#allocation4 + $0x738] sm:$0xff]
    %v293 = vld [vmem:[#allocation4 + $0x740] sm:$0xff]
    %v294 = vld [vmem:[#allocation4 + $0x748] sm:$0xff]
    %v295 = vld [vmem:[#allocation4 + $0x750] sm:$0xff]
    %v296 = vld [vmem:[#allocation4 + $0x758] sm:$0xff]
    %v297 = vld [vmem:[#allocation4 + $0x760] sm:$0xff]
    %v298 = vld [vmem:[#allocation4 + $0x768] sm:$0xff]
    %v299 = vld [vmem:[#allocation4 + $0x770] sm:$0xff]
    %v300 = vld [vmem:[#allocation4 + $0x778] sm:$0xff]
    %v301 = vld [vmem:[#allocation4 + $0x780] sm:$0xff]
    %v302 = vld [vmem:[#allocation4 + $0x788] sm:$0xff]
    %v303 = vld [vmem:[#allocation4 + $0x790] sm:$0xff]
    %v304 = vld [vmem:[#allocation4 + $0x798] sm:$0xff]
    %v305 = vld [vmem:[#allocation4 + $0x7a0] sm:$0xff]
    %v306 = vld [vmem:[#allocation4 + $0x7a8] sm:$0xff]
    %v307 = vld [vmem:[#allocation4 + $0x7b0] sm:$0xff]
    %v308 = vld [vmem:[#allocation4 + $0x7b8] sm:$0xff]
    %v309 = vld [vmem:[#allocation4 + $0x7c0] sm:$0xff]
    %v310 = vld [vmem:[#allocation4 + $0x7c8] sm:$0xff]
    %v311 = vld [vmem:[#allocation4 + $0x7d0] sm:$0xff]
    %v312 = vld [vmem:[#allocation4 + $0x7d8] sm:$0xff]
    %v313 = vld [vmem:[#allocation4 + $0x7e0] sm:$0xff]
    %v314 = vld [vmem:[#allocation4 + $0x7e8] sm:$0xff]
    %v315 = vld [vmem:[#allocation4 + $0x7f0] sm:$0xff]
    %v316 = vld [vmem:[#allocation4 + $0x7f8] sm:$0xff]
    %v317 = vld [vmem:[#allocation4 + $0x800] sm:$0xff]
    %v318 = vld [vmem:[#allocation4 + $0x808] sm:$0xff]
    %v319 = vld [vmem:[#allocation4 + $0x810] sm:$0xff]
    %v320 = vld [vmem:[#allocation4 + $0x818] sm:$0xff]
    %v321 = vld [vmem:[#allocation4 + $0x820] sm:$0xff]
    %v322 = vld [vmem:[#allocation4 + $0x828] sm:$0xff]
    %v323 = vld [vmem:[#allocation4 + $0x830] sm:$0xff]
    %v324 = vld [vmem:[#allocation4 + $0x838] sm:$0xff]
    %v325 = vld [vmem:[#allocation4 + $0x840] sm:$0xff]
    %v326 = vld [vmem:[#allocation4 + $0x848] sm:$0xff]
    %v327 = vld [vmem:[#allocation4 + $0x850] sm:$0xff]
    %v328 = vld [vmem:[#allocation4 + $0x858] sm:$0xff]
    %v329 = vld [vmem:[#allocation4 + $0x860] sm:$0xff]
    %v330 = vld [vmem:[#allocation4 + $0x868] sm:$0xff]
    %v331 = vld [vmem:[#allocation4 + $0x870] sm:$0xff]
    %v332 = vld [vmem:[#allocation4 + $0x878] sm:$0xff]
    %v333 = vld [vmem:[#allocation4 + $0x880] sm:$0xff]
    %v334 = vld [vmem:[#allocation4 + $0x888] sm:$0xff]
    %v335 = vld [vmem:[#allocation4 + $0x890] sm:$0xff]
    %v336 = vld [vmem:[#allocation4 + $0x898] sm:$0xff]
    %v337 = vld [vmem:[#allocation4 + $0x8a0] sm:$0xff]
    %v338 = vld [vmem:[#allocation4 + $0x8a8] sm:$0xff]
    %v339 = vld [vmem:[#allocation4 + $0x8b0] sm:$0xff]
    %v340 = vld [vmem:[#allocation4 + $0x8b8] sm:$0xff]
    %v341 = vld [vmem:[#allocation4 + $0x8c0] sm:$0xff]
    %v342 = vld [vmem:[#allocation4 + $0x8c8] sm:$0xff]
    %v343 = vld [vmem:[#allocation4 + $0x8d0] sm:$0xff]
    %v344 = vld [vmem:[#allocation4 + $0x8d8] sm:$0xff]
    %v345 = vld [vmem:[#allocation4 + $0x8e0] sm:$0xff]
    %v346 = vld [vmem:[#allocation4 + $0x8e8] sm:$0xff]
    %v347 = vld [vmem:[#allocation4 + $0x8f0] sm:$0xff]
    %v348 = vld [vmem:[#allocation4 + $0x8f8] sm:$0xff]
    %v349 = vld [vmem:[#allocation4 + $0x900] sm:$0xff]
    %v350 = vld [vmem:[#allocation4 + $0x908] sm:$0xff]
    %v351 = vld [vmem:[#allocation4 + $0x910] sm:$0xff]
    %v352 = vld [vmem:[#allocation4 + $0x918] sm:$0xff]
    %v353 = vld [vmem:[#allocation4 + $0x920] sm:$0xff]
    %v354 = vld [vmem:[#allocation4 + $0x928] sm:$0xff]
    %v355 = vld [vmem:[#allocation4 + $0x930] sm:$0xff]
    %v356 = vld [vmem:[#allocation4 + $0x938] sm:$0xff]
    %v357 = vld [vmem:[#allocation4 + $0x940] sm:$0xff]
    %v358 = vld [vmem:[#allocation4 + $0x948] sm:$0xff]
    %v359 = vld [vmem:[#allocation4 + $0x950] sm:$0xff]
    %v360 = vld [vmem:[#allocation4 + $0x958] sm:$0xff]
    %v361 = vld [vmem:[#allocation4 + $0x960] sm:$0xff]
    %v362 = vld [vmem:[#allocation4 + $0x968] sm:$0xff]
    %v363 = vld [vmem:[#allocation4 + $0x970] sm:$0xff]
    %v364 = vld [vmem:[#allocation4 + $0x978] sm:$0xff]
    %v365 = vld [vmem:[#allocation4 + $0x980] sm:$0xff]
    %v366 = vld [vmem:[#allocation4 + $0x988] sm:$0xff]
    %v367 = vld [vmem:[#allocation4 + $0x990] sm:$0xff]
    %v368 = vld [vmem:[#allocation4 + $0x998] sm:$0xff]
    %v369 = vld [vmem:[#allocation4 + $0x9a0] sm:$0xff]
    %v370 = vld [vmem:[#allocation4 + $0x9a8] sm:$0xff]
    %v371 = vld [vmem:[#allocation4 + $0x9b0] sm:$0xff]
    %v372 = vld [vmem:[#allocation4 + $0x9b8] sm:$0xff]
    %v373 = vld [vmem:[#allocation4 + $0x9c0] sm:$0xff]
    %v374 = vld [vmem:[#allocation4 + $0x9c8] sm:$0xff]
    %v375 = vld [vmem:[#allocation4 + $0x9d0] sm:$0xff]
    %v376 = vld [vmem:[#allocation4 + $0x9d8] sm:$0xff]
    %v377 = vld [vmem:[#allocation4 + $0x9e0] sm:$0xff]
    %v378 = vld [vmem:[#allocation4 + $0x9e8] sm:$0xff]
    %v379 = vld [vmem:[#allocation4 + $0x9f0] sm:$0xff]
    %v380 = vld [vmem:[#allocation4 + $0x9f8] sm:$0xff]
    %v381 = vld [vmem:[#allocation4 + $0xa00] sm:$0xff]
    %v382 = vld [vmem:[#allocation4 + $0xa08] sm:$0xff]
    %v383 = vld [vmem:[#allocation4 + $0xa10] sm:$0xff]
    %v384 = vld [vmem:[#allocation4 + $0xa18] sm:$0xff]
    %v385 = vld [vmem:[#allocation4 + $0xa20] sm:$0xff]
    %v386 = vld [vmem:[#allocation4 + $0xa28] sm:$0xff]
    %v387 = vld [vmem:[#allocation4 + $0xa30] sm:$0xff]
    %v388 = vld [vmem:[#allocation4 + $0xa38] sm:$0xff]
    %v389 = vld [vmem:[#allocation4 + $0xa40] sm:$0xff]
    %v390 = vld [vmem:[#allocation4 + $0xa48] sm:$0xff]
    %v391 = vld [vmem:[#allocation4 + $0xa50] sm:$0xff]
    %v392 = vld [vmem:[#allocation4 + $0xa58] sm:$0xff]
    %v393 = vld [vmem:[#allocation4 + $0xa60] sm:$0xff]
    %v394 = vld [vmem:[#allocation4 + $0xa68] sm:$0xff]
    %v395 = vld [vmem:[#allocation4 + $0xa70] sm:$0xff]
    %v396 = vld [vmem:[#allocation4 + $0xa78] sm:$0xff]
    %v397 = vld [vmem:[#allocation4 + $0xa80] sm:$0xff]
    %v398 = vld [vmem:[#allocation4 + $0xa88] sm:$0xff]
    %v399 = vld [vmem:[#allocation4 + $0xa90] sm:$0xff]
    %v400 = vld [vmem:[#allocation4 + $0xa98] sm:$0xff]
    %v401 = vld [vmem:[#allocation4 + $0xaa0] sm:$0xff]
    %v402 = vld [vmem:[#allocation4 + $0xaa8] sm:$0xff]
    %v403 = vld [vmem:[#allocation4 + $0xab0] sm:$0xff]
    %v404 = vld [vmem:[#allocation4 + $0xab8] sm:$0xff]
    %v405 = vld [vmem:[#allocation4 + $0xac0] sm:$0xff]
    %v406 = vld [vmem:[#allocation4 + $0xac8] sm:$0xff]
    %v407 = vld [vmem:[#allocation4 + $0xad0] sm:$0xff]
    %v408 = vld [vmem:[#allocation4 + $0xad8] sm:$0xff]
    %v409 = vld [vmem:[#allocation4 + $0xae0] sm:$0xff]
    %v410 = vld [vmem:[#allocation4 + $0xae8] sm:$0xff]
    %v411 = vld [vmem:[#allocation4 + $0xaf0] sm:$0xff]
    %v412 = vld [vmem:[#allocation4 + $0xaf8] sm:$0xff]
    %v413 = vld [vmem:[#allocation4 + $0xb00] sm:$0xff]
    %v414 = vld [vmem:[#allocation4 + $0xb08] sm:$0xff]
    %v415 = vld [vmem:[#allocation4 + $0xb10] sm:$0xff]
    %v416 = vld [vmem:[#allocation4 + $0xb18] sm:$0xff]
    %v417 = vld [vmem:[#allocation4 + $0xb20] sm:$0xff]
    %v418 = vld [vmem:[#allocation4 + $0xb28] sm:$0xff]
    %v419 = vld [vmem:[#allocation4 + $0xb30] sm:$0xff]
    %v420 = vld [vmem:[#allocation4 + $0xb38] sm:$0xff]
    %v421 = vld [vmem:[#allocation4 + $0xb40] sm:$0xff]
    %v422 = vld [vmem:[#allocation4 + $0xb48] sm:$0xff]
    %v423 = vld [vmem:[#allocation4 + $0xb50] sm:$0xff]
    %v424 = vld [vmem:[#allocation4 + $0xb58] sm:$0xff]
    %v425 = vld [vmem:[#allocation4 + $0xb60] sm:$0xff]
    %v426 = vld [vmem:[#allocation4 + $0xb68] sm:$0xff]
    %v427 = vld [vmem:[#allocation4 + $0xb70] sm:$0xff]
    %v428 = vld [vmem:[#allocation4 + $0xb78] sm:$0xff]
    %v429 = vld [vmem:[#allocation4 + $0xb80] sm:$0xff]
    %v430 = vld [vmem:[#allocation4 + $0xb88] sm:$0xff]
    %v431 = vld [vmem:[#allocation4 + $0xb90] sm:$0xff]
    %v432 = vld [vmem:[#allocation4 + $0xb98] sm:$0xff]
    %v433 = vld [vmem:[#allocation4 + $0xba0] sm:$0xff]
    %v434 = vld [vmem:[#allocation4 + $0xba8] sm:$0xff]
    %v435 = vld [vmem:[#allocation4 + $0xbb0] sm:$0xff]
    %v436 = vld [vmem:[#allocation4 + $0xbb8] sm:$0xff]
    %v437 = vld [vmem:[#allocation4 + $0xbc0] sm:$0xff]
    %v438 = vld [vmem:[#allocation4 + $0xbc8] sm:$0xff]
    %v439 = vld [vmem:[#allocation4 + $0xbd0] sm:$0xff]
    %v440 = vld [vmem:[#allocation4 + $0xbd8] sm:$0xff]
    %v441 = vld [vmem:[#allocation4 + $0xbe0] sm:$0xff]
    %v442 = vld [vmem:[#allocation4 + $0xbe8] sm:$0xff]
    %v443 = vld [vmem:[#allocation4 + $0xbf0] sm:$0xff]
    %v444 = vld [vmem:[#allocation4 + $0xbf8] sm:$0xff]
    %v445 = vld [vmem:[#allocation4 + $0xc00] sm:$0xff]
    %v446 = vld [vmem:[#allocation4 + $0xc08] sm:$0xff]
    %v447 = vld [vmem:[#allocation4 + $0xc10] sm:$0xff]
    %v448 = vld [vmem:[#allocation4 + $0xc18] sm:$0xff]
    %v449 = vld [vmem:[#allocation4 + $0xc20] sm:$0xff]
    %v450 = vld [vmem:[#allocation4 + $0xc28] sm:$0xff]
    %v451 = vld [vmem:[#allocation4 + $0xc30] sm:$0xff]
    %v452 = vld [vmem:[#allocation4 + $0xc38] sm:$0xff]
    %v453 = vld [vmem:[#allocation4 + $0xc40] sm:$0xff]
    %v454 = vld [vmem:[#allocation4 + $0xc48] sm:$0xff]
    %v455 = vld [vmem:[#allocation4 + $0xc50] sm:$0xff]
    %v456 = vld [vmem:[#allocation4 + $0xc58] sm:$0xff]
    %v457 = vld [vmem:[#allocation4 + $0xc60] sm:$0xff]
    %v458 = vld [vmem:[#allocation4 + $0xc68] sm:$0xff]
    %v459 = vld [vmem:[#allocation4 + $0xc70] sm:$0xff]
    %v460 = vld [vmem:[#allocation4 + $0xc78] sm:$0xff]
    %v461 = vld [vmem:[#allocation4 + $0xc80] sm:$0xff]
    %v462 = vld [vmem:[#allocation4 + $0xc88] sm:$0xff]
    %v463 = vld [vmem:[#allocation4 + $0xc90] sm:$0xff]
    %v464 = vld [vmem:[#allocation4 + $0xc98] sm:$0xff]
    %v465 = vld [vmem:[#allocation4 + $0xca0] sm:$0xff]
    %v466 = vld [vmem:[#allocation4 + $0xca8] sm:$0xff]
    %v467 = vld [vmem:[#allocation4 + $0xcb0] sm:$0xff]
    %v468 = vld [vmem:[#allocation4 + $0xcb8] sm:$0xff]
    %v469 = vld [vmem:[#allocation4 + $0xcc0] sm:$0xff]
    %v470 = vld [vmem:[#allocation4 + $0xcc8] sm:$0xff]
    %v471 = vld [vmem:[#allocation4 + $0xcd0] sm:$0xff]
    %v472 = vld [vmem:[#allocation4 + $0xcd8] sm:$0xff]
    %v473 = vld [vmem:[#allocation4 + $0xce0] sm:$0xff]
    %v474 = vld [vmem:[#allocation4 + $0xce8] sm:$0xff]
    %v475 = vld [vmem:[#allocation4 + $0xcf0] sm:$0xff]
    %v476 = vld [vmem:[#allocation4 + $0xcf8] sm:$0xff]
    %v477 = vld [vmem:[#allocation4 + $0xd00] sm:$0xff]
    %v478 = vld [vmem:[#allocation4 + $0xd08] sm:$0xff]
    %v479 = vld [vmem:[#allocation4 + $0xd10] sm:$0xff]
    %v480 = vld [vmem:[#allocation4 + $0xd18] sm:$0xff]
    %v481 = vld [vmem:[#allocation4 + $0xd20] sm:$0xff]
    %v482 = vld [vmem:[#allocation4 + $0xd28] sm:$0xff]
    %v483 = vld [vmem:[#allocation4 + $0xd30] sm:$0xff]
    %v484 = vld [vmem:[#allocation4 + $0xd38] sm:$0xff]
    %v485 = vld [vmem:[#allocation4 + $0xd40] sm:$0xff]
    %v486 = vld [vmem:[#allocation4 + $0xd48] sm:$0xff]
    %v487 = vld [vmem:[#allocation4 + $0xd50] sm:$0xff]
    %v488 = vld [vmem:[#allocation4 + $0xd58] sm:$0xff]
    %v489 = vld [vmem:[#allocation4 + $0xd60] sm:$0xff]
    %v490 = vld [vmem:[#allocation4 + $0xd68] sm:$0xff]
    %v491 = vld [vmem:[#allocation4 + $0xd70] sm:$0xff]
    %v492 = vld [vmem:[#allocation4 + $0xd78] sm:$0xff]
    %v493 = vld [vmem:[#allocation4 + $0xd80] sm:$0xff]
    %v494 = vld [vmem:[#allocation4 + $0xd88] sm:$0xff]
    %v495 = vld [vmem:[#allocation4 + $0xd90] sm:$0xff]
    %v496 = vld [vmem:[#allocation4 + $0xd98] sm:$0xff]
    %v497 = vld [vmem:[#allocation4 + $0xda0] sm:$0xff]
    %v498 = vld [vmem:[#allocation4 + $0xda8] sm:$0xff]
    %v499 = vld [vmem:[#allocation4 + $0xdb0] sm:$0xff]
    %v500 = vld [vmem:[#allocation4 + $0xdb8] sm:$0xff]
    %v501 = vld [vmem:[#allocation4 + $0xdc0] sm:$0xff]
    %v502 = vld [vmem:[#allocation4 + $0xdc8] sm:$0xff]
    %v503 = vld [vmem:[#allocation4 + $0xdd0] sm:$0xff]
    %v504 = vld [vmem:[#allocation4 + $0xdd8] sm:$0xff]
    %v505 = vld [vmem:[#allocation4 + $0xde0] sm:$0xff]
    %v506 = vld [vmem:[#allocation4 + $0xde8] sm:$0xff]
    %v507 = vld [vmem:[#allocation4 + $0xdf0] sm:$0xff]
    %v508 = vld [vmem:[#allocation4 + $0xdf8] sm:$0xff]
    %v509 = vld [vmem:[#allocation4 + $0xe00] sm:$0xff]
    %v510 = vld [vmem:[#allocation4 + $0xe08] sm:$0xff]
    %v511 = vld [vmem:[#allocation4 + $0xe10] sm:$0xff]
    %v512 = vld [vmem:[#allocation4 + $0xe18] sm:$0xff]
    %v513 = vld [vmem:[#allocation4 + $0xe20] sm:$0xff]
    %v514 = vld [vmem:[#allocation4 + $0xe28] sm:$0xff]
    %v515 = vld [vmem:[#allocation4 + $0xe30] sm:$0xff]
    %v516 = vld [vmem:[#allocation4 + $0xe38] sm:$0xff]
    %v517 = vld [vmem:[#allocation4 + $0xe40] sm:$0xff]
    %v518 = vld [vmem:[#allocation4 + $0xe48] sm:$0xff]
    %v519 = vld [vmem:[#allocation4 + $0xe50] sm:$0xff]
    %v520 = vld [vmem:[#allocation4 + $0xe58] sm:$0xff]
    %v521 = vld [vmem:[#allocation4 + $0xe60] sm:$0xff]
    %v522 = vld [vmem:[#allocation4 + $0xe68] sm:$0xff]
    %v523 = vld [vmem:[#allocation4 + $0xe70] sm:$0xff]
    %v524 = vld [vmem:[#allocation4 + $0xe78] sm:$0xff]
    %v525 = vld [vmem:[#allocation4 + $0xe80] sm:$0xff]
    %v526 = vld [vmem:[#allocation4 + $0xe88] sm:$0xff]
    %v527 = vld [vmem:[#allocation4 + $0xe90] sm:$0xff]
    %v528 = vld [vmem:[#allocation4 + $0xe98] sm:$0xff]
    %v529 = vld [vmem:[#allocation4 + $0xea0] sm:$0xff]
    %v530 = vld [vmem:[#allocation4 + $0xea8] sm:$0xff]
    %v531 = vld [vmem:[#allocation4 + $0xeb0] sm:$0xff]
    %v532 = vld [vmem:[#allocation4 + $0xeb8] sm:$0xff]
    %v533 = vld [vmem:[#allocation4 + $0xec0] sm:$0xff]
    %v534 = vld [vmem:[#allocation4 + $0xec8] sm:$0xff]
    %v535 = vld [vmem:[#allocation4 + $0xed0] sm:$0xff]
    %v536 = vld [vmem:[#allocation4 + $0xed8] sm:$0xff]
    %v537 = vld [vmem:[#allocation4 + $0xee0] sm:$0xff]
    %v538 = vld [vmem:[#allocation4 + $0xee8] sm:$0xff]
    %v539 = vld [vmem:[#allocation4 + $0xef0] sm:$0xff]
    %v540 = vld [vmem:[#allocation4 + $0xef8] sm:$0xff]
    %v541 = vld [vmem:[#allocation4 + $0xf00] sm:$0xff]
    %v542 = vld [vmem:[#allocation4 + $0xf08] sm:$0xff]
    %v543 = vld [vmem:[#allocation4 + $0xf10] sm:$0xff]
    %v544 = vld [vmem:[#allocation4 + $0xf18] sm:$0xff]
    %v545 = vld [vmem:[#allocation4 + $0xf20] sm:$0xff]
    %v546 = vld [vmem:[#allocation4 + $0xf28] sm:$0xff]
    %v547 = vld [vmem:[#allocation4 + $0xf30] sm:$0xff]
    %v548 = vld [vmem:[#allocation4 + $0xf38] sm:$0xff]
    %v549 = vld [vmem:[#allocation4 + $0xf40] sm:$0xff]
    %v550 = vld [vmem:[#allocation4 + $0xf48] sm:$0xff]
    %v551 = vld [vmem:[#allocation4 + $0xf50] sm:$0xff]
    %v552 = vld [vmem:[#allocation4 + $0xf58] sm:$0xff]
    %v553 = vld [vmem:[#allocation4 + $0xf60] sm:$0xff]
    %v554 = vld [vmem:[#allocation4 + $0xf68] sm:$0xff]
    %v555 = vld [vmem:[#allocation4 + $0xf70] sm:$0xff]
    %v556 = vld [vmem:[#allocation4 + $0xf78] sm:$0xff]
    %v557 = vld [vmem:[#allocation4 + $0xf80] sm:$0xff]
    %v558 = vld [vmem:[#allocation4 + $0xf88] sm:$0xff]
    %v559 = vld [vmem:[#allocation4 + $0xf90] sm:$0xff]
    %v560 = vld [vmem:[#allocation4 + $0xf98] sm:$0xff]
    %v561 = vld [vmem:[#allocation4 + $0xfa0] sm:$0xff]
    %v562 = vld [vmem:[#allocation4 + $0xfa8] sm:$0xff]
    %v563 = vld [vmem:[#allocation4 + $0xfb0] sm:$0xff]
    %v564 = vld [vmem:[#allocation4 + $0xfb8] sm:$0xff]
    %v565 = vld [vmem:[#allocation4 + $0xfc0] sm:$0xff]
    %v566 = vld [vmem:[#allocation4 + $0xfc8] sm:$0xff]
    %v567 = vld [vmem:[#allocation4 + $0xfd0] sm:$0xff]
    %v568 = vld [vmem:[#allocation4 + $0xfd8] sm:$0xff]
    %v569 = vld [vmem:[#allocation4 + $0xfe0] sm:$0xff]
    %v570 = vld [vmem:[#allocation4 + $0xfe8] sm:$0xff]
    %v571 = vld [vmem:[#allocation4 + $0xff0] sm:$0xff]
    %v572 = vld [vmem:[#allocation4 + $0xff8] sm:$0xff]
    %v577 = vunpack.c.l.b16 %v57
    %v578 = vunpack.c.h.b16 %v57
    %v579 = vunpack.c.l.b16 %v58
    %v580 = vunpack.c.h.b16 %v58
    %v581 = vunpack.c.l.b16 %v59
    %v582 = vunpack.c.h.b16 %v59
    %v583 = vunpack.c.l.b16 %v60
    %v584 = vunpack.c.h.b16 %v60
    %v585 = vpack.c.b16 %v577, %v577
    %v586 = vpack.c.b16 %v578, %v578
    %v587 = vpack.c.b16 %v579, %v579
    %v588 = vpack.c.b16 %v580, %v580
    %v589 = vpack.c.b16 %v581, %v581
    %v590 = vpack.c.b16 %v582, %v582
    %v591 = vpack.c.b16 %v583, %v583
    %v592 = vpack.c.b16 %v584, %v584
    %v1113 = vunpack.c.l.b16 %v61
    %v1114 = vunpack.c.h.b16 %v61
    %v1115 = vunpack.c.l.b16 %v62
    %v1116 = vunpack.c.h.b16 %v62
    %v1117 = vunpack.c.l.b16 %v63
    %v1118 = vunpack.c.h.b16 %v63
    %v1119 = vunpack.c.l.b16 %v64
    %v1120 = vunpack.c.h.b16 %v64
    %v1121 = vunpack.c.l.b16 %v65
    %v1122 = vunpack.c.h.b16 %v65
    %v1123 = vunpack.c.l.b16 %v66
    %v1124 = vunpack.c.h.b16 %v66
    %v1125 = vunpack.c.l.b16 %v67
    %v1126 = vunpack.c.h.b16 %v67
    %v1127 = vunpack.c.l.b16 %v68
    %v1128 = vunpack.c.h.b16 %v68
    %v1129 = vunpack.c.l.b16 %v69
    %v1130 = vunpack.c.h.b16 %v69
    %v1131 = vunpack.c.l.b16 %v70
    %v1132 = vunpack.c.h.b16 %v70
    %v1133 = vunpack.c.l.b16 %v71
    %v1134 = vunpack.c.h.b16 %v71
    %v1135 = vunpack.c.l.b16 %v72
    %v1136 = vunpack.c.h.b16 %v72
    %v1137 = vunpack.c.l.b16 %v73
    %v1138 = vunpack.c.h.b16 %v73
    %v1139 = vunpack.c.l.b16 %v74
    %v1140 = vunpack.c.h.b16 %v74
    %v1141 = vunpack.c.l.b16 %v75
    %v1142 = vunpack.c.h.b16 %v75
    %v1143 = vunpack.c.l.b16 %v76
    %v1144 = vunpack.c.h.b16 %v76
    %v1145 = vunpack.c.l.b16 %v77
    %v1146 = vunpack.c.h.b16 %v77
    %v1147 = vunpack.c.l.b16 %v78
    %v1148 = vunpack.c.h.b16 %v78
    %v1149 = vunpack.c.l.b16 %v79
    %v1150 = vunpack.c.h.b16 %v79
    %v1151 = vunpack.c.l.b16 %v80
    %v1152 = vunpack.c.h.b16 %v80
    %v1153 = vunpack.c.l.b16 %v81
    %v1154 = vunpack.c.h.b16 %v81
    %v1155 = vunpack.c.l.b16 %v82
    %v1156 = vunpack.c.h.b16 %v82
    %v1157 = vunpack.c.l.b16 %v83
    %v1158 = vunpack.c.h.b16 %v83
    %v1159 = vunpack.c.l.b16 %v84
    %v1160 = vunpack.c.h.b16 %v84
    %v1161 = vunpack.c.l.b16 %v85
    %v1162 = vunpack.c.h.b16 %v85
    %v1163 = vunpack.c.l.b16 %v86
    %v1164 = vunpack.c.h.b16 %v86
    %v1165 = vunpack.c.l.b16 %v87
    %v1166 = vunpack.c.h.b16 %v87
    %v1167 = vunpack.c.l.b16 %v88
    %v1168 = vunpack.c.h.b16 %v88
    %v1169 = vunpack.c.l.b16 %v89
    %v1170 = vunpack.c.h.b16 %v89
    %v1171 = vunpack.c.l.b16 %v90
    %v1172 = vunpack.c.h.b16 %v90
    %v1173 = vunpack.c.l.b16 %v91
    %v1174 = vunpack.c.h.b16 %v91
    %v1175 = vunpack.c.l.b16 %v92
    %v1176 = vunpack.c.h.b16 %v92
    %v1177 = vunpack.c.l.b16 %v93
    %v1178 = vunpack.c.h.b16 %v93
    %v1179 = vunpack.c.l.b16 %v94
    %v1180 = vunpack.c.h.b16 %v94
    %v1181 = vunpack.c.l.b16 %v95
    %v1182 = vunpack.c.h.b16 %v95
    %v1183 = vunpack.c.l.b16 %v96
    %v1184 = vunpack.c.h.b16 %v96
    %v1185 = vunpack.c.l.b16 %v97
    %v1186 = vunpack.c.h.b16 %v97
    %v1187 = vunpack.c.l.b16 %v98
    %v1188 = vunpack.c.h.b16 %v98
    %v1189 = vunpack.c.l.b16 %v99
    %v1190 = vunpack.c.h.b16 %v99
    %v1191 = vunpack.c.l.b16 %v100
    %v1192 = vunpack.c.h.b16 %v100
    %v1193 = vunpack.c.l.b16 %v101
    %v1194 = vunpack.c.h.b16 %v101
    %v1195 = vunpack.c.l.b16 %v102
    %v1196 = vunpack.c.h.b16 %v102
    %v1197 = vunpack.c.l.b16 %v103
    %v1198 = vunpack.c.h.b16 %v103
    %v1199 = vunpack.c.l.b16 %v104
    %v1200 = vunpack.c.h.b16 %v104
    %v1201 = vunpack.c.l.b16 %v105
    %v1202 = vunpack.c.h.b16 %v105
    %v1203 = vunpack.c.l.b16 %v106
    %v1204 = vunpack.c.h.b16 %v106
    %v1205 = vunpack.c.l.b16 %v107
    %v1206 = vunpack.c.h.b16 %v107
    %v1207 = vunpack.c.l.b16 %v108
    %v1208 = vunpack.c.h.b16 %v108
    %v1209 = vunpack.c.l.b16 %v109
    %v1210 = vunpack.c.h.b16 %v109
    %v1211 = vunpack.c.l.b16 %v110
    %v1212 = vunpack.c.h.b16 %v110
    %v1213 = vunpack.c.l.b16 %v111
    %v1214 = vunpack.c.h.b16 %v111
    %v1215 = vunpack.c.l.b16 %v112
    %v1216 = vunpack.c.h.b16 %v112
    %v1217 = vunpack.c.l.b16 %v113
    %v1218 = vunpack.c.h.b16 %v113
    %v1219 = vunpack.c.l.b16 %v114
    %v1220 = vunpack.c.h.b16 %v114
    %v1221 = vunpack.c.l.b16 %v115
    %v1222 = vunpack.c.h.b16 %v115
    %v1223 = vunpack.c.l.b16 %v116
    %v1224 = vunpack.c.h.b16 %v116
    %v1225 = vunpack.c.l.b16 %v117
    %v1226 = vunpack.c.h.b16 %v117
    %v1227 = vunpack.c.l.b16 %v118
    %v1228 = vunpack.c.h.b16 %v118
    %v1229 = vunpack.c.l.b16 %v119
    %v1230 = vunpack.c.h.b16 %v119
    %v1231 = vunpack.c.l.b16 %v120
    %v1232 = vunpack.c.h.b16 %v120
    %v1233 = vunpack.c.l.b16 %v121
    %v1234 = vunpack.c.h.b16 %v121
    %v1235 = vunpack.c.l.b16 %v122
    %v1236 = vunpack.c.h.b16 %v122
    %v1237 = vunpack.c.l.b16 %v123
    %v1238 = vunpack.c.h.b16 %v123
    %v1239 = vunpack.c.l.b16 %v124
    %v1240 = vunpack.c.h.b16 %v124
    %v1241 = vunpack.c.l.b16 %v125
    %v1242 = vunpack.c.h.b16 %v125
    %v1243 = vunpack.c.l.b16 %v126
    %v1244 = vunpack.c.h.b16 %v126
    %v1245 = vunpack.c.l.b16 %v127
    %v1246 = vunpack.c.h.b16 %v127
    %v1247 = vunpack.c.l.b16 %v128
    %v1248 = vunpack.c.h.b16 %v128
    %v1249 = vunpack.c.l.b16 %v129
    %v1250 = vunpack.c.h.b16 %v129
    %v1251 = vunpack.c.l.b16 %v130
    %v1252 = vunpack.c.h.b16 %v130
    %v1253 = vunpack.c.l.b16 %v131
    %v1254 = vunpack.c.h.b16 %v131
    %v1255 = vunpack.c.l.b16 %v132
    %v1256 = vunpack.c.h.b16 %v132
    %v1257 = vunpack.c.l.b16 %v133
    %v1258 = vunpack.c.h.b16 %v133
    %v1259 = vunpack.c.l.b16 %v134
    %v1260 = vunpack.c.h.b16 %v134
    %v1261 = vunpack.c.l.b16 %v135
    %v1262 = vunpack.c.h.b16 %v135
    %v1263 = vunpack.c.l.b16 %v136
    %v1264 = vunpack.c.h.b16 %v136
    %v1265 = vunpack.c.l.b16 %v137
    %v1266 = vunpack.c.h.b16 %v137
    %v1267 = vunpack.c.l.b16 %v138
    %v1268 = vunpack.c.h.b16 %v138
    %v1269 = vunpack.c.l.b16 %v139
    %v1270 = vunpack.c.h.b16 %v139
    %v1271 = vunpack.c.l.b16 %v140
    %v1272 = vunpack.c.h.b16 %v140
    %v1273 = vunpack.c.l.b16 %v141
    %v1274 = vunpack.c.h.b16 %v141
    %v1275 = vunpack.c.l.b16 %v142
    %v1276 = vunpack.c.h.b16 %v142
    %v1277 = vunpack.c.l.b16 %v143
    %v1278 = vunpack.c.h.b16 %v143
    %v1279 = vunpack.c.l.b16 %v144
    %v1280 = vunpack.c.h.b16 %v144
    %v1281 = vunpack.c.l.b16 %v145
    %v1282 = vunpack.c.h.b16 %v145
    %v1283 = vunpack.c.l.b16 %v146
    %v1284 = vunpack.c.h.b16 %v146
    %v1285 = vunpack.c.l.b16 %v147
    %v1286 = vunpack.c.h.b16 %v147
    %v1287 = vunpack.c.l.b16 %v148
    %v1288 = vunpack.c.h.b16 %v148
    %v1289 = vunpack.c.l.b16 %v149
    %v1290 = vunpack.c.h.b16 %v149
    %v1291 = vunpack.c.l.b16 %v150
    %v1292 = vunpack.c.h.b16 %v150
    %v1293 = vunpack.c.l.b16 %v151
    %v1294 = vunpack.c.h.b16 %v151
    %v1295 = vunpack.c.l.b16 %v152
    %v1296 = vunpack.c.h.b16 %v152
    %v1297 = vunpack.c.l.b16 %v153
    %v1298 = vunpack.c.h.b16 %v153
    %v1299 = vunpack.c.l.b16 %v154
    %v1300 = vunpack.c.h.b16 %v154
    %v1301 = vunpack.c.l.b16 %v155
    %v1302 = vunpack.c.h.b16 %v155
    %v1303 = vunpack.c.l.b16 %v156
    %v1304 = vunpack.c.h.b16 %v156
    %v1305 = vunpack.c.l.b16 %v157
    %v1306 = vunpack.c.h.b16 %v157
    %v1307 = vunpack.c.l.b16 %v158
    %v1308 = vunpack.c.h.b16 %v158
    %v1309 = vunpack.c.l.b16 %v159
    %v1310 = vunpack.c.h.b16 %v159
    %v1311 = vunpack.c.l.b16 %v160
    %v1312 = vunpack.c.h.b16 %v160
    %v1313 = vunpack.c.l.b16 %v161
    %v1314 = vunpack.c.h.b16 %v161
    %v1315 = vunpack.c.l.b16 %v162
    %v1316 = vunpack.c.h.b16 %v162
    %v1317 = vunpack.c.l.b16 %v163
    %v1318 = vunpack.c.h.b16 %v163
    %v1319 = vunpack.c.l.b16 %v164
    %v1320 = vunpack.c.h.b16 %v164
    %v1321 = vunpack.c.l.b16 %v165
    %v1322 = vunpack.c.h.b16 %v165
    %v1323 = vunpack.c.l.b16 %v166
    %v1324 = vunpack.c.h.b16 %v166
    %v1325 = vunpack.c.l.b16 %v167
    %v1326 = vunpack.c.h.b16 %v167
    %v1327 = vunpack.c.l.b16 %v168
    %v1328 = vunpack.c.h.b16 %v168
    %v1329 = vunpack.c.l.b16 %v169
    %v1330 = vunpack.c.h.b16 %v169
    %v1331 = vunpack.c.l.b16 %v170
    %v1332 = vunpack.c.h.b16 %v170
    %v1333 = vunpack.c.l.b16 %v171
    %v1334 = vunpack.c.h.b16 %v171
    %v1335 = vunpack.c.l.b16 %v172
    %v1336 = vunpack.c.h.b16 %v172
    %v1337 = vunpack.c.l.b16 %v173
    %v1338 = vunpack.c.h.b16 %v173
    %v1339 = vunpack.c.l.b16 %v174
    %v1340 = vunpack.c.h.b16 %v174
    %v1341 = vunpack.c.l.b16 %v175
    %v1342 = vunpack.c.h.b16 %v175
    %v1343 = vunpack.c.l.b16 %v176
    %v1344 = vunpack.c.h.b16 %v176
    %v1345 = vunpack.c.l.b16 %v177
    %v1346 = vunpack.c.h.b16 %v177
    %v1347 = vunpack.c.l.b16 %v178
    %v1348 = vunpack.c.h.b16 %v178
    %v1349 = vunpack.c.l.b16 %v179
    %v1350 = vunpack.c.h.b16 %v179
    %v1351 = vunpack.c.l.b16 %v180
    %v1352 = vunpack.c.h.b16 %v180
    %v1353 = vunpack.c.l.b16 %v181
    %v1354 = vunpack.c.h.b16 %v181
    %v1355 = vunpack.c.l.b16 %v182
    %v1356 = vunpack.c.h.b16 %v182
    %v1357 = vunpack.c.l.b16 %v183
    %v1358 = vunpack.c.h.b16 %v183
    %v1359 = vunpack.c.l.b16 %v184
    %v1360 = vunpack.c.h.b16 %v184
    %v1361 = vunpack.c.l.b16 %v185
    %v1362 = vunpack.c.h.b16 %v185
    %v1363 = vunpack.c.l.b16 %v186
    %v1364 = vunpack.c.h.b16 %v186
    %v1365 = vunpack.c.l.b16 %v187
    %v1366 = vunpack.c.h.b16 %v187
    %v1367 = vunpack.c.l.b16 %v188
    %v1368 = vunpack.c.h.b16 %v188
    %v1369 = vunpack.c.l.b16 %v189
    %v1370 = vunpack.c.h.b16 %v189
    %v1371 = vunpack.c.l.b16 %v190
    %v1372 = vunpack.c.h.b16 %v190
    %v1373 = vunpack.c.l.b16 %v191
    %v1374 = vunpack.c.h.b16 %v191
    %v1375 = vunpack.c.l.b16 %v192
    %v1376 = vunpack.c.h.b16 %v192
    %v1377 = vunpack.c.l.b16 %v193
    %v1378 = vunpack.c.h.b16 %v193
    %v1379 = vunpack.c.l.b16 %v194
    %v1380 = vunpack.c.h.b16 %v194
    %v1381 = vunpack.c.l.b16 %v195
    %v1382 = vunpack.c.h.b16 %v195
    %v1383 = vunpack.c.l.b16 %v196
    %v1384 = vunpack.c.h.b16 %v196
    %v1385 = vunpack.c.l.b16 %v197
    %v1386 = vunpack.c.h.b16 %v197
    %v1387 = vunpack.c.l.b16 %v198
    %v1388 = vunpack.c.h.b16 %v198
    %v1389 = vunpack.c.l.b16 %v199
    %v1390 = vunpack.c.h.b16 %v199
    %v1391 = vunpack.c.l.b16 %v200
    %v1392 = vunpack.c.h.b16 %v200
    %v1393 = vunpack.c.l.b16 %v201
    %v1394 = vunpack.c.h.b16 %v201
    %v1395 = vunpack.c.l.b16 %v202
    %v1396 = vunpack.c.h.b16 %v202
    %v1397 = vunpack.c.l.b16 %v203
    %v1398 = vunpack.c.h.b16 %v203
    %v1399 = vunpack.c.l.b16 %v204
    %v1400 = vunpack.c.h.b16 %v204
    %v1401 = vunpack.c.l.b16 %v205
    %v1402 = vunpack.c.h.b16 %v205
    %v1403 = vunpack.c.l.b16 %v206
    %v1404 = vunpack.c.h.b16 %v206
    %v1405 = vunpack.c.l.b16 %v207
    %v1406 = vunpack.c.h.b16 %v207
    %v1407 = vunpack.c.l.b16 %v208
    %v1408 = vunpack.c.h.b16 %v208
    %v1409 = vunpack.c.l.b16 %v209
    %v1410 = vunpack.c.h.b16 %v209
    %v1411 = vunpack.c.l.b16 %v210
    %v1412 = vunpack.c.h.b16 %v210
    %v1413 = vunpack.c.l.b16 %v211
    %v1414 = vunpack.c.h.b16 %v211
    %v1415 = vunpack.c.l.b16 %v212
    %v1416 = vunpack.c.h.b16 %v212
    %v1417 = vunpack.c.l.b16 %v213
    %v1418 = vunpack.c.h.b16 %v213
    %v1419 = vunpack.c.l.b16 %v214
    %v1420 = vunpack.c.h.b16 %v214
    %v1421 = vunpack.c.l.b16 %v215
    %v1422 = vunpack.c.h.b16 %v215
    %v1423 = vunpack.c.l.b16 %v216
    %v1424 = vunpack.c.h.b16 %v216
    %v1425 = vunpack.c.l.b16 %v217
    %v1426 = vunpack.c.h.b16 %v217
    %v1427 = vunpack.c.l.b16 %v218
    %v1428 = vunpack.c.h.b16 %v218
    %v1429 = vunpack.c.l.b16 %v219
    %v1430 = vunpack.c.h.b16 %v219
    %v1431 = vunpack.c.l.b16 %v220
    %v1432 = vunpack.c.h.b16 %v220
    %v1433 = vunpack.c.l.b16 %v221
    %v1434 = vunpack.c.h.b16 %v221
    %v1435 = vunpack.c.l.b16 %v222
    %v1436 = vunpack.c.h.b16 %v222
    %v1437 = vunpack.c.l.b16 %v223
    %v1438 = vunpack.c.h.b16 %v223
    %v1439 = vunpack.c.l.b16 %v224
    %v1440 = vunpack.c.h.b16 %v224
    %v1441 = vunpack.c.l.b16 %v225
    %v1442 = vunpack.c.h.b16 %v225
    %v1443 = vunpack.c.l.b16 %v226
    %v1444 = vunpack.c.h.b16 %v226
    %v1445 = vunpack.c.l.b16 %v227
    %v1446 = vunpack.c.h.b16 %v227
    %v1447 = vunpack.c.l.b16 %v228
    %v1448 = vunpack.c.h.b16 %v228
    %v1449 = vunpack.c.l.b16 %v229
    %v1450 = vunpack.c.h.b16 %v229
    %v1451 = vunpack.c.l.b16 %v230
    %v1452 = vunpack.c.h.b16 %v230
    %v1453 = vunpack.c.l.b16 %v231
    %v1454 = vunpack.c.h.b16 %v231
    %v1455 = vunpack.c.l.b16 %v232
    %v1456 = vunpack.c.h.b16 %v232
    %v1457 = vunpack.c.l.b16 %v233
    %v1458 = vunpack.c.h.b16 %v233
    %v1459 = vunpack.c.l.b16 %v234
    %v1460 = vunpack.c.h.b16 %v234
    %v1461 = vunpack.c.l.b16 %v235
    %v1462 = vunpack.c.h.b16 %v235
    %v1463 = vunpack.c.l.b16 %v236
    %v1464 = vunpack.c.h.b16 %v236
    %v1465 = vunpack.c.l.b16 %v237
    %v1466 = vunpack.c.h.b16 %v237
    %v1467 = vunpack.c.l.b16 %v238
    %v1468 = vunpack.c.h.b16 %v238
    %v1469 = vunpack.c.l.b16 %v239
    %v1470 = vunpack.c.h.b16 %v239
    %v1471 = vunpack.c.l.b16 %v240
    %v1472 = vunpack.c.h.b16 %v240
    %v1473 = vunpack.c.l.b16 %v241
    %v1474 = vunpack.c.h.b16 %v241
    %v1475 = vunpack.c.l.b16 %v242
    %v1476 = vunpack.c.h.b16 %v242
    %v1477 = vunpack.c.l.b16 %v243
    %v1478 = vunpack.c.h.b16 %v243
    %v1479 = vunpack.c.l.b16 %v244
    %v1480 = vunpack.c.h.b16 %v244
    %v1481 = vunpack.c.l.b16 %v245
    %v1482 = vunpack.c.h.b16 %v245
    %v1483 = vunpack.c.l.b16 %v246
    %v1484 = vunpack.c.h.b16 %v246
    %v1485 = vunpack.c.l.b16 %v247
    %v1486 = vunpack.c.h.b16 %v247
    %v1487 = vunpack.c.l.b16 %v248
    %v1488 = vunpack.c.h.b16 %v248
    %v1489 = vunpack.c.l.b16 %v249
    %v1490 = vunpack.c.h.b16 %v249
    %v1491 = vunpack.c.l.b16 %v250
    %v1492 = vunpack.c.h.b16 %v250
    %v1493 = vunpack.c.l.b16 %v251
    %v1494 = vunpack.c.h.b16 %v251
    %v1495 = vunpack.c.l.b16 %v252
    %v1496 = vunpack.c.h.b16 %v252
    %v1497 = vunpack.c.l.b16 %v253
    %v1498 = vunpack.c.h.b16 %v253
    %v1499 = vunpack.c.l.b16 %v254
    %v1500 = vunpack.c.h.b16 %v254
    %v1501 = vunpack.c.l.b16 %v255
    %v1502 = vunpack.c.h.b16 %v255
    %v1503 = vunpack.c.l.b16 %v256
    %v1504 = vunpack.c.h.b16 %v256
    %v1505 = vunpack.c.l.b16 %v257
    %v1506 = vunpack.c.h.b16 %v257
    %v1507 = vunpack.c.l.b16 %v258
    %v1508 = vunpack.c.h.b16 %v258
    %v1509 = vunpack.c.l.b16 %v259
    %v1510 = vunpack.c.h.b16 %v259
    %v1511 = vunpack.c.l.b16 %v260
    %v1512 = vunpack.c.h.b16 %v260
    %v1513 = vunpack.c.l.b16 %v261
    %v1514 = vunpack.c.h.b16 %v261
    %v1515 = vunpack.c.l.b16 %v262
    %v1516 = vunpack.c.h.b16 %v262
    %v1517 = vunpack.c.l.b16 %v263
    %v1518 = vunpack.c.h.b16 %v263
    %v1519 = vunpack.c.l.b16 %v264
    %v1520 = vunpack.c.h.b16 %v264
    %v1521 = vunpack.c.l.b16 %v265
    %v1522 = vunpack.c.h.b16 %v265
    %v1523 = vunpack.c.l.b16 %v266
    %v1524 = vunpack.c.h.b16 %v266
    %v1525 = vunpack.c.l.b16 %v267
    %v1526 = vunpack.c.h.b16 %v267
    %v1527 = vunpack.c.l.b16 %v268
    %v1528 = vunpack.c.h.b16 %v268
    %v1529 = vunpack.c.l.b16 %v269
    %v1530 = vunpack.c.h.b16 %v269
    %v1531 = vunpack.c.l.b16 %v270
    %v1532 = vunpack.c.h.b16 %v270
    %v1533 = vunpack.c.l.b16 %v271
    %v1534 = vunpack.c.h.b16 %v271
    %v1535 = vunpack.c.l.b16 %v272
    %v1536 = vunpack.c.h.b16 %v272
    %v1537 = vunpack.c.l.b16 %v273
    %v1538 = vunpack.c.h.b16 %v273
    %v1539 = vunpack.c.l.b16 %v274
    %v1540 = vunpack.c.h.b16 %v274
    %v1541 = vunpack.c.l.b16 %v275
    %v1542 = vunpack.c.h.b16 %v275
    %v1543 = vunpack.c.l.b16 %v276
    %v1544 = vunpack.c.h.b16 %v276
    %v1545 = vunpack.c.l.b16 %v277
    %v1546 = vunpack.c.h.b16 %v277
    %v1547 = vunpack.c.l.b16 %v278
    %v1548 = vunpack.c.h.b16 %v278
    %v1549 = vunpack.c.l.b16 %v279
    %v1550 = vunpack.c.h.b16 %v279
    %v1551 = vunpack.c.l.b16 %v280
    %v1552 = vunpack.c.h.b16 %v280
    %v1553 = vunpack.c.l.b16 %v281
    %v1554 = vunpack.c.h.b16 %v281
    %v1555 = vunpack.c.l.b16 %v282
    %v1556 = vunpack.c.h.b16 %v282
    %v1557 = vunpack.c.l.b16 %v283
    %v1558 = vunpack.c.h.b16 %v283
    %v1559 = vunpack.c.l.b16 %v284
    %v1560 = vunpack.c.h.b16 %v284
    %v1561 = vunpack.c.l.b16 %v285
    %v1562 = vunpack.c.h.b16 %v285
    %v1563 = vunpack.c.l.b16 %v286
    %v1564 = vunpack.c.h.b16 %v286
    %v1565 = vunpack.c.l.b16 %v287
    %v1566 = vunpack.c.h.b16 %v287
    %v1567 = vunpack.c.l.b16 %v288
    %v1568 = vunpack.c.h.b16 %v288
    %v1569 = vunpack.c.l.b16 %v289
    %v1570 = vunpack.c.h.b16 %v289
    %v1571 = vunpack.c.l.b16 %v290
    %v1572 = vunpack.c.h.b16 %v290
    %v1573 = vunpack.c.l.b16 %v291
    %v1574 = vunpack.c.h.b16 %v291
    %v1575 = vunpack.c.l.b16 %v292
    %v1576 = vunpack.c.h.b16 %v292
    %v1577 = vunpack.c.l.b16 %v293
    %v1578 = vunpack.c.h.b16 %v293
    %v1579 = vunpack.c.l.b16 %v294
    %v1580 = vunpack.c.h.b16 %v294
    %v1581 = vunpack.c.l.b16 %v295
    %v1582 = vunpack.c.h.b16 %v295
    %v1583 = vunpack.c.l.b16 %v296
    %v1584 = vunpack.c.h.b16 %v296
    %v1585 = vunpack.c.l.b16 %v297
    %v1586 = vunpack.c.h.b16 %v297
    %v1587 = vunpack.c.l.b16 %v298
    %v1588 = vunpack.c.h.b16 %v298
    %v1589 = vunpack.c.l.b16 %v299
    %v1590 = vunpack.c.h.b16 %v299
    %v1591 = vunpack.c.l.b16 %v300
    %v1592 = vunpack.c.h.b16 %v300
    %v1593 = vunpack.c.l.b16 %v301
    %v1594 = vunpack.c.h.b16 %v301
    %v1595 = vunpack.c.l.b16 %v302
    %v1596 = vunpack.c.h.b16 %v302
    %v1597 = vunpack.c.l.b16 %v303
    %v1598 = vunpack.c.h.b16 %v303
    %v1599 = vunpack.c.l.b16 %v304
    %v1600 = vunpack.c.h.b16 %v304
    %v1601 = vunpack.c.l.b16 %v305
    %v1602 = vunpack.c.h.b16 %v305
    %v1603 = vunpack.c.l.b16 %v306
    %v1604 = vunpack.c.h.b16 %v306
    %v1605 = vunpack.c.l.b16 %v307
    %v1606 = vunpack.c.h.b16 %v307
    %v1607 = vunpack.c.l.b16 %v308
    %v1608 = vunpack.c.h.b16 %v308
    %v1609 = vunpack.c.l.b16 %v309
    %v1610 = vunpack.c.h.b16 %v309
    %v1611 = vunpack.c.l.b16 %v310
    %v1612 = vunpack.c.h.b16 %v310
    %v1613 = vunpack.c.l.b16 %v311
    %v1614 = vunpack.c.h.b16 %v311
    %v1615 = vunpack.c.l.b16 %v312
    %v1616 = vunpack.c.h.b16 %v312
    %v1617 = vunpack.c.l.b16 %v313
    %v1618 = vunpack.c.h.b16 %v313
    %v1619 = vunpack.c.l.b16 %v314
    %v1620 = vunpack.c.h.b16 %v314
    %v1621 = vunpack.c.l.b16 %v315
    %v1622 = vunpack.c.h.b16 %v315
    %v1623 = vunpack.c.l.b16 %v316
    %v1624 = vunpack.c.h.b16 %v316
    %v1625 = vunpack.c.l.b16 %v317
    %v1626 = vunpack.c.h.b16 %v317
    %v1627 = vunpack.c.l.b16 %v318
    %v1628 = vunpack.c.h.b16 %v318
    %v1629 = vunpack.c.l.b16 %v319
    %v1630 = vunpack.c.h.b16 %v319
    %v1631 = vunpack.c.l.b16 %v320
    %v1632 = vunpack.c.h.b16 %v320
    %v1633 = vunpack.c.l.b16 %v321
    %v1634 = vunpack.c.h.b16 %v321
    %v1635 = vunpack.c.l.b16 %v322
    %v1636 = vunpack.c.h.b16 %v322
    %v1637 = vunpack.c.l.b16 %v323
    %v1638 = vunpack.c.h.b16 %v323
    %v1639 = vunpack.c.l.b16 %v324
    %v1640 = vunpack.c.h.b16 %v324
    %v1641 = vunpack.c.l.b16 %v325
    %v1642 = vunpack.c.h.b16 %v325
    %v1643 = vunpack.c.l.b16 %v326
    %v1644 = vunpack.c.h.b16 %v326
    %v1645 = vunpack.c.l.b16 %v327
    %v1646 = vunpack.c.h.b16 %v327
    %v1647 = vunpack.c.l.b16 %v328
    %v1648 = vunpack.c.h.b16 %v328
    %v1649 = vunpack.c.l.b16 %v329
    %v1650 = vunpack.c.h.b16 %v329
    %v1651 = vunpack.c.l.b16 %v330
    %v1652 = vunpack.c.h.b16 %v330
    %v1653 = vunpack.c.l.b16 %v331
    %v1654 = vunpack.c.h.b16 %v331
    %v1655 = vunpack.c.l.b16 %v332
    %v1656 = vunpack.c.h.b16 %v332
    %v1657 = vunpack.c.l.b16 %v333
    %v1658 = vunpack.c.h.b16 %v333
    %v1659 = vunpack.c.l.b16 %v334
    %v1660 = vunpack.c.h.b16 %v334
    %v1661 = vunpack.c.l.b16 %v335
    %v1662 = vunpack.c.h.b16 %v335
    %v1663 = vunpack.c.l.b16 %v336
    %v1664 = vunpack.c.h.b16 %v336
    %v1665 = vunpack.c.l.b16 %v337
    %v1666 = vunpack.c.h.b16 %v337
    %v1667 = vunpack.c.l.b16 %v338
    %v1668 = vunpack.c.h.b16 %v338
    %v1669 = vunpack.c.l.b16 %v339
    %v1670 = vunpack.c.h.b16 %v339
    %v1671 = vunpack.c.l.b16 %v340
    %v1672 = vunpack.c.h.b16 %v340
    %v1673 = vunpack.c.l.b16 %v341
    %v1674 = vunpack.c.h.b16 %v341
    %v1675 = vunpack.c.l.b16 %v342
    %v1676 = vunpack.c.h.b16 %v342
    %v1677 = vunpack.c.l.b16 %v343
    %v1678 = vunpack.c.h.b16 %v343
    %v1679 = vunpack.c.l.b16 %v344
    %v1680 = vunpack.c.h.b16 %v344
    %v1681 = vunpack.c.l.b16 %v345
    %v1682 = vunpack.c.h.b16 %v345
    %v1683 = vunpack.c.l.b16 %v346
    %v1684 = vunpack.c.h.b16 %v346
    %v1685 = vunpack.c.l.b16 %v347
    %v1686 = vunpack.c.h.b16 %v347
    %v1687 = vunpack.c.l.b16 %v348
    %v1688 = vunpack.c.h.b16 %v348
    %v1689 = vunpack.c.l.b16 %v349
    %v1690 = vunpack.c.h.b16 %v349
    %v1691 = vunpack.c.l.b16 %v350
    %v1692 = vunpack.c.h.b16 %v350
    %v1693 = vunpack.c.l.b16 %v351
    %v1694 = vunpack.c.h.b16 %v351
    %v1695 = vunpack.c.l.b16 %v352
    %v1696 = vunpack.c.h.b16 %v352
    %v1697 = vunpack.c.l.b16 %v353
    %v1698 = vunpack.c.h.b16 %v353
    %v1699 = vunpack.c.l.b16 %v354
    %v1700 = vunpack.c.h.b16 %v354
    %v1701 = vunpack.c.l.b16 %v355
    %v1702 = vunpack.c.h.b16 %v355
    %v1703 = vunpack.c.l.b16 %v356
    %v1704 = vunpack.c.h.b16 %v356
    %v1705 = vunpack.c.l.b16 %v357
    %v1706 = vunpack.c.h.b16 %v357
    %v1707 = vunpack.c.l.b16 %v358
    %v1708 = vunpack.c.h.b16 %v358
    %v1709 = vunpack.c.l.b16 %v359
    %v1710 = vunpack.c.h.b16 %v359
    %v1711 = vunpack.c.l.b16 %v360
    %v1712 = vunpack.c.h.b16 %v360
    %v1713 = vunpack.c.l.b16 %v361
    %v1714 = vunpack.c.h.b16 %v361
    %v1715 = vunpack.c.l.b16 %v362
    %v1716 = vunpack.c.h.b16 %v362
    %v1717 = vunpack.c.l.b16 %v363
    %v1718 = vunpack.c.h.b16 %v363
    %v1719 = vunpack.c.l.b16 %v364
    %v1720 = vunpack.c.h.b16 %v364
    %v1721 = vunpack.c.l.b16 %v365
    %v1722 = vunpack.c.h.b16 %v365
    %v1723 = vunpack.c.l.b16 %v366
    %v1724 = vunpack.c.h.b16 %v366
    %v1725 = vunpack.c.l.b16 %v367
    %v1726 = vunpack.c.h.b16 %v367
    %v1727 = vunpack.c.l.b16 %v368
    %v1728 = vunpack.c.h.b16 %v368
    %v1729 = vunpack.c.l.b16 %v369
    %v1730 = vunpack.c.h.b16 %v369
    %v1731 = vunpack.c.l.b16 %v370
    %v1732 = vunpack.c.h.b16 %v370
    %v1733 = vunpack.c.l.b16 %v371
    %v1734 = vunpack.c.h.b16 %v371
    %v1735 = vunpack.c.l.b16 %v372
    %v1736 = vunpack.c.h.b16 %v372
    %v1737 = vunpack.c.l.b16 %v373
    %v1738 = vunpack.c.h.b16 %v373
    %v1739 = vunpack.c.l.b16 %v374
    %v1740 = vunpack.c.h.b16 %v374
    %v1741 = vunpack.c.l.b16 %v375
    %v1742 = vunpack.c.h.b16 %v375
    %v1743 = vunpack.c.l.b16 %v376
    %v1744 = vunpack.c.h.b16 %v376
    %v1745 = vunpack.c.l.b16 %v377
    %v1746 = vunpack.c.h.b16 %v377
    %v1747 = vunpack.c.l.b16 %v378
    %v1748 = vunpack.c.h.b16 %v378
    %v1749 = vunpack.c.l.b16 %v379
    %v1750 = vunpack.c.h.b16 %v379
    %v1751 = vunpack.c.l.b16 %v380
    %v1752 = vunpack.c.h.b16 %v380
    %v1753 = vunpack.c.l.b16 %v381
    %v1754 = vunpack.c.h.b16 %v381
    %v1755 = vunpack.c.l.b16 %v382
    %v1756 = vunpack.c.h.b16 %v382
    %v1757 = vunpack.c.l.b16 %v383
    %v1758 = vunpack.c.h.b16 %v383
    %v1759 = vunpack.c.l.b16 %v384
    %v1760 = vunpack.c.h.b16 %v384
    %v1761 = vunpack.c.l.b16 %v385
    %v1762 = vunpack.c.h.b16 %v385
    %v1763 = vunpack.c.l.b16 %v386
    %v1764 = vunpack.c.h.b16 %v386
    %v1765 = vunpack.c.l.b16 %v387
    %v1766 = vunpack.c.h.b16 %v387
    %v1767 = vunpack.c.l.b16 %v388
    %v1768 = vunpack.c.h.b16 %v388
    %v1769 = vunpack.c.l.b16 %v389
    %v1770 = vunpack.c.h.b16 %v389
    %v1771 = vunpack.c.l.b16 %v390
    %v1772 = vunpack.c.h.b16 %v390
    %v1773 = vunpack.c.l.b16 %v391
    %v1774 = vunpack.c.h.b16 %v391
    %v1775 = vunpack.c.l.b16 %v392
    %v1776 = vunpack.c.h.b16 %v392
    %v1777 = vunpack.c.l.b16 %v393
    %v1778 = vunpack.c.h.b16 %v393
    %v1779 = vunpack.c.l.b16 %v394
    %v1780 = vunpack.c.h.b16 %v394
    %v1781 = vunpack.c.l.b16 %v395
    %v1782 = vunpack.c.h.b16 %v395
    %v1783 = vunpack.c.l.b16 %v396
    %v1784 = vunpack.c.h.b16 %v396
    %v1785 = vunpack.c.l.b16 %v397
    %v1786 = vunpack.c.h.b16 %v397
    %v1787 = vunpack.c.l.b16 %v398
    %v1788 = vunpack.c.h.b16 %v398
    %v1789 = vunpack.c.l.b16 %v399
    %v1790 = vunpack.c.h.b16 %v399
    %v1791 = vunpack.c.l.b16 %v400
    %v1792 = vunpack.c.h.b16 %v400
    %v1793 = vunpack.c.l.b16 %v401
    %v1794 = vunpack.c.h.b16 %v401
    %v1795 = vunpack.c.l.b16 %v402
    %v1796 = vunpack.c.h.b16 %v402
    %v1797 = vunpack.c.l.b16 %v403
    %v1798 = vunpack.c.h.b16 %v403
    %v1799 = vunpack.c.l.b16 %v404
    %v1800 = vunpack.c.h.b16 %v404
    %v1801 = vunpack.c.l.b16 %v405
    %v1802 = vunpack.c.h.b16 %v405
    %v1803 = vunpack.c.l.b16 %v406
    %v1804 = vunpack.c.h.b16 %v406
    %v1805 = vunpack.c.l.b16 %v407
    %v1806 = vunpack.c.h.b16 %v407
    %v1807 = vunpack.c.l.b16 %v408
    %v1808 = vunpack.c.h.b16 %v408
    %v1809 = vunpack.c.l.b16 %v409
    %v1810 = vunpack.c.h.b16 %v409
    %v1811 = vunpack.c.l.b16 %v410
    %v1812 = vunpack.c.h.b16 %v410
    %v1813 = vunpack.c.l.b16 %v411
    %v1814 = vunpack.c.h.b16 %v411
    %v1815 = vunpack.c.l.b16 %v412
    %v1816 = vunpack.c.h.b16 %v412
    %v1817 = vunpack.c.l.b16 %v413
    %v1818 = vunpack.c.h.b16 %v413
    %v1819 = vunpack.c.l.b16 %v414
    %v1820 = vunpack.c.h.b16 %v414
    %v1821 = vunpack.c.l.b16 %v415
    %v1822 = vunpack.c.h.b16 %v415
    %v1823 = vunpack.c.l.b16 %v416
    %v1824 = vunpack.c.h.b16 %v416
    %v1825 = vunpack.c.l.b16 %v417
    %v1826 = vunpack.c.h.b16 %v417
    %v1827 = vunpack.c.l.b16 %v418
    %v1828 = vunpack.c.h.b16 %v418
    %v1829 = vunpack.c.l.b16 %v419
    %v1830 = vunpack.c.h.b16 %v419
    %v1831 = vunpack.c.l.b16 %v420
    %v1832 = vunpack.c.h.b16 %v420
    %v1833 = vunpack.c.l.b16 %v421
    %v1834 = vunpack.c.h.b16 %v421
    %v1835 = vunpack.c.l.b16 %v422
    %v1836 = vunpack.c.h.b16 %v422
    %v1837 = vunpack.c.l.b16 %v423
    %v1838 = vunpack.c.h.b16 %v423
    %v1839 = vunpack.c.l.b16 %v424
    %v1840 = vunpack.c.h.b16 %v424
    %v1841 = vunpack.c.l.b16 %v425
    %v1842 = vunpack.c.h.b16 %v425
    %v1843 = vunpack.c.l.b16 %v426
    %v1844 = vunpack.c.h.b16 %v426
    %v1845 = vunpack.c.l.b16 %v427
    %v1846 = vunpack.c.h.b16 %v427
    %v1847 = vunpack.c.l.b16 %v428
    %v1848 = vunpack.c.h.b16 %v428
    %v1849 = vunpack.c.l.b16 %v429
    %v1850 = vunpack.c.h.b16 %v429
    %v1851 = vunpack.c.l.b16 %v430
    %v1852 = vunpack.c.h.b16 %v430
    %v1853 = vunpack.c.l.b16 %v431
    %v1854 = vunpack.c.h.b16 %v431
    %v1855 = vunpack.c.l.b16 %v432
    %v1856 = vunpack.c.h.b16 %v432
    %v1857 = vunpack.c.l.b16 %v433
    %v1858 = vunpack.c.h.b16 %v433
    %v1859 = vunpack.c.l.b16 %v434
    %v1860 = vunpack.c.h.b16 %v434
    %v1861 = vunpack.c.l.b16 %v435
    %v1862 = vunpack.c.h.b16 %v435
    %v1863 = vunpack.c.l.b16 %v436
    %v1864 = vunpack.c.h.b16 %v436
    %v1865 = vunpack.c.l.b16 %v437
    %v1866 = vunpack.c.h.b16 %v437
    %v1867 = vunpack.c.l.b16 %v438
    %v1868 = vunpack.c.h.b16 %v438
    %v1869 = vunpack.c.l.b16 %v439
    %v1870 = vunpack.c.h.b16 %v439
    %v1871 = vunpack.c.l.b16 %v440
    %v1872 = vunpack.c.h.b16 %v440
    %v1873 = vunpack.c.l.b16 %v441
    %v1874 = vunpack.c.h.b16 %v441
    %v1875 = vunpack.c.l.b16 %v442
    %v1876 = vunpack.c.h.b16 %v442
    %v1877 = vunpack.c.l.b16 %v443
    %v1878 = vunpack.c.h.b16 %v443
    %v1879 = vunpack.c.l.b16 %v444
    %v1880 = vunpack.c.h.b16 %v444
    %v1881 = vunpack.c.l.b16 %v445
    %v1882 = vunpack.c.h.b16 %v445
    %v1883 = vunpack.c.l.b16 %v446
    %v1884 = vunpack.c.h.b16 %v446
    %v1885 = vunpack.c.l.b16 %v447
    %v1886 = vunpack.c.h.b16 %v447
    %v1887 = vunpack.c.l.b16 %v448
    %v1888 = vunpack.c.h.b16 %v448
    %v1889 = vunpack.c.l.b16 %v449
    %v1890 = vunpack.c.h.b16 %v449
    %v1891 = vunpack.c.l.b16 %v450
    %v1892 = vunpack.c.h.b16 %v450
    %v1893 = vunpack.c.l.b16 %v451
    %v1894 = vunpack.c.h.b16 %v451
    %v1895 = vunpack.c.l.b16 %v452
    %v1896 = vunpack.c.h.b16 %v452
    %v1897 = vunpack.c.l.b16 %v453
    %v1898 = vunpack.c.h.b16 %v453
    %v1899 = vunpack.c.l.b16 %v454
    %v1900 = vunpack.c.h.b16 %v454
    %v1901 = vunpack.c.l.b16 %v455
    %v1902 = vunpack.c.h.b16 %v455
    %v1903 = vunpack.c.l.b16 %v456
    %v1904 = vunpack.c.h.b16 %v456
    %v1905 = vunpack.c.l.b16 %v457
    %v1906 = vunpack.c.h.b16 %v457
    %v1907 = vunpack.c.l.b16 %v458
    %v1908 = vunpack.c.h.b16 %v458
    %v1909 = vunpack.c.l.b16 %v459
    %v1910 = vunpack.c.h.b16 %v459
    %v1911 = vunpack.c.l.b16 %v460
    %v1912 = vunpack.c.h.b16 %v460
    %v1913 = vunpack.c.l.b16 %v461
    %v1914 = vunpack.c.h.b16 %v461
    %v1915 = vunpack.c.l.b16 %v462
    %v1916 = vunpack.c.h.b16 %v462
    %v1917 = vunpack.c.l.b16 %v463
    %v1918 = vunpack.c.h.b16 %v463
    %v1919 = vunpack.c.l.b16 %v464
    %v1920 = vunpack.c.h.b16 %v464
    %v1921 = vunpack.c.l.b16 %v465
    %v1922 = vunpack.c.h.b16 %v465
    %v1923 = vunpack.c.l.b16 %v466
    %v1924 = vunpack.c.h.b16 %v466
    %v1925 = vunpack.c.l.b16 %v467
    %v1926 = vunpack.c.h.b16 %v467
    %v1927 = vunpack.c.l.b16 %v468
    %v1928 = vunpack.c.h.b16 %v468
    %v1929 = vunpack.c.l.b16 %v469
    %v1930 = vunpack.c.h.b16 %v469
    %v1931 = vunpack.c.l.b16 %v470
    %v1932 = vunpack.c.h.b16 %v470
    %v1933 = vunpack.c.l.b16 %v471
    %v1934 = vunpack.c.h.b16 %v471
    %v1935 = vunpack.c.l.b16 %v472
    %v1936 = vunpack.c.h.b16 %v472
    %v1937 = vunpack.c.l.b16 %v473
    %v1938 = vunpack.c.h.b16 %v473
    %v1939 = vunpack.c.l.b16 %v474
    %v1940 = vunpack.c.h.b16 %v474
    %v1941 = vunpack.c.l.b16 %v475
    %v1942 = vunpack.c.h.b16 %v475
    %v1943 = vunpack.c.l.b16 %v476
    %v1944 = vunpack.c.h.b16 %v476
    %v1945 = vunpack.c.l.b16 %v477
    %v1946 = vunpack.c.h.b16 %v477
    %v1947 = vunpack.c.l.b16 %v478
    %v1948 = vunpack.c.h.b16 %v478
    %v1949 = vunpack.c.l.b16 %v479
    %v1950 = vunpack.c.h.b16 %v479
    %v1951 = vunpack.c.l.b16 %v480
    %v1952 = vunpack.c.h.b16 %v480
    %v1953 = vunpack.c.l.b16 %v481
    %v1954 = vunpack.c.h.b16 %v481
    %v1955 = vunpack.c.l.b16 %v482
    %v1956 = vunpack.c.h.b16 %v482
    %v1957 = vunpack.c.l.b16 %v483
    %v1958 = vunpack.c.h.b16 %v483
    %v1959 = vunpack.c.l.b16 %v484
    %v1960 = vunpack.c.h.b16 %v484
    %v1961 = vunpack.c.l.b16 %v485
    %v1962 = vunpack.c.h.b16 %v485
    %v1963 = vunpack.c.l.b16 %v486
    %v1964 = vunpack.c.h.b16 %v486
    %v1965 = vunpack.c.l.b16 %v487
    %v1966 = vunpack.c.h.b16 %v487
    %v1967 = vunpack.c.l.b16 %v488
    %v1968 = vunpack.c.h.b16 %v488
    %v1969 = vunpack.c.l.b16 %v489
    %v1970 = vunpack.c.h.b16 %v489
    %v1971 = vunpack.c.l.b16 %v490
    %v1972 = vunpack.c.h.b16 %v490
    %v1973 = vunpack.c.l.b16 %v491
    %v1974 = vunpack.c.h.b16 %v491
    %v1975 = vunpack.c.l.b16 %v492
    %v1976 = vunpack.c.h.b16 %v492
    %v1977 = vunpack.c.l.b16 %v493
    %v1978 = vunpack.c.h.b16 %v493
    %v1979 = vunpack.c.l.b16 %v494
    %v1980 = vunpack.c.h.b16 %v494
    %v1981 = vunpack.c.l.b16 %v495
    %v1982 = vunpack.c.h.b16 %v495
    %v1983 = vunpack.c.l.b16 %v496
    %v1984 = vunpack.c.h.b16 %v496
    %v1985 = vunpack.c.l.b16 %v497
    %v1986 = vunpack.c.h.b16 %v497
    %v1987 = vunpack.c.l.b16 %v498
    %v1988 = vunpack.c.h.b16 %v498
    %v1989 = vunpack.c.l.b16 %v499
    %v1990 = vunpack.c.h.b16 %v499
    %v1991 = vunpack.c.l.b16 %v500
    %v1992 = vunpack.c.h.b16 %v500
    %v1993 = vunpack.c.l.b16 %v501
    %v1994 = vunpack.c.h.b16 %v501
    %v1995 = vunpack.c.l.b16 %v502
    %v1996 = vunpack.c.h.b16 %v502
    %v1997 = vunpack.c.l.b16 %v503
    %v1998 = vunpack.c.h.b16 %v503
    %v1999 = vunpack.c.l.b16 %v504
    %v2000 = vunpack.c.h.b16 %v504
    %v2001 = vunpack.c.l.b16 %v505
    %v2002 = vunpack.c.h.b16 %v505
    %v2003 = vunpack.c.l.b16 %v506
    %v2004 = vunpack.c.h.b16 %v506
    %v2005 = vunpack.c.l.b16 %v507
    %v2006 = vunpack.c.h.b16 %v507
    %v2007 = vunpack.c.l.b16 %v508
    %v2008 = vunpack.c.h.b16 %v508
    %v2009 = vunpack.c.l.b16 %v509
    %v2010 = vunpack.c.h.b16 %v509
    %v2011 = vunpack.c.l.b16 %v510
    %v2012 = vunpack.c.h.b16 %v510
    %v2013 = vunpack.c.l.b16 %v511
    %v2014 = vunpack.c.h.b16 %v511
    %v2015 = vunpack.c.l.b16 %v512
    %v2016 = vunpack.c.h.b16 %v512
    %v2017 = vunpack.c.l.b16 %v513
    %v2018 = vunpack.c.h.b16 %v513
    %v2019 = vunpack.c.l.b16 %v514
    %v2020 = vunpack.c.h.b16 %v514
    %v2021 = vunpack.c.l.b16 %v515
    %v2022 = vunpack.c.h.b16 %v515
    %v2023 = vunpack.c.l.b16 %v516
    %v2024 = vunpack.c.h.b16 %v516
    %v2025 = vunpack.c.l.b16 %v517
    %v2026 = vunpack.c.h.b16 %v517
    %v2027 = vunpack.c.l.b16 %v518
    %v2028 = vunpack.c.h.b16 %v518
    %v2029 = vunpack.c.l.b16 %v519
    %v2030 = vunpack.c.h.b16 %v519
    %v2031 = vunpack.c.l.b16 %v520
    %v2032 = vunpack.c.h.b16 %v520
    %v2033 = vunpack.c.l.b16 %v521
    %v2034 = vunpack.c.h.b16 %v521
    %v2035 = vunpack.c.l.b16 %v522
    %v2036 = vunpack.c.h.b16 %v522
    %v2037 = vunpack.c.l.b16 %v523
    %v2038 = vunpack.c.h.b16 %v523
    %v2039 = vunpack.c.l.b16 %v524
    %v2040 = vunpack.c.h.b16 %v524
    %v2041 = vunpack.c.l.b16 %v525
    %v2042 = vunpack.c.h.b16 %v525
    %v2043 = vunpack.c.l.b16 %v526
    %v2044 = vunpack.c.h.b16 %v526
    %v2045 = vunpack.c.l.b16 %v527
    %v2046 = vunpack.c.h.b16 %v527
    %v2047 = vunpack.c.l.b16 %v528
    %v2048 = vunpack.c.h.b16 %v528
    %v2049 = vunpack.c.l.b16 %v529
    %v2050 = vunpack.c.h.b16 %v529
    %v2051 = vunpack.c.l.b16 %v530
    %v2052 = vunpack.c.h.b16 %v530
    %v2053 = vunpack.c.l.b16 %v531
    %v2054 = vunpack.c.h.b16 %v531
    %v2055 = vunpack.c.l.b16 %v532
    %v2056 = vunpack.c.h.b16 %v532
    %v2057 = vunpack.c.l.b16 %v533
    %v2058 = vunpack.c.h.b16 %v533
    %v2059 = vunpack.c.l.b16 %v534
    %v2060 = vunpack.c.h.b16 %v534
    %v2061 = vunpack.c.l.b16 %v535
    %v2062 = vunpack.c.h.b16 %v535
    %v2063 = vunpack.c.l.b16 %v536
    %v2064 = vunpack.c.h.b16 %v536
    %v2065 = vunpack.c.l.b16 %v537
    %v2066 = vunpack.c.h.b16 %v537
    %v2067 = vunpack.c.l.b16 %v538
    %v2068 = vunpack.c.h.b16 %v538
    %v2069 = vunpack.c.l.b16 %v539
    %v2070 = vunpack.c.h.b16 %v539
    %v2071 = vunpack.c.l.b16 %v540
    %v2072 = vunpack.c.h.b16 %v540
    %v2073 = vunpack.c.l.b16 %v541
    %v2074 = vunpack.c.h.b16 %v541
    %v2075 = vunpack.c.l.b16 %v542
    %v2076 = vunpack.c.h.b16 %v542
    %v2077 = vunpack.c.l.b16 %v543
    %v2078 = vunpack.c.h.b16 %v543
    %v2079 = vunpack.c.l.b16 %v544
    %v2080 = vunpack.c.h.b16 %v544
    %v2081 = vunpack.c.l.b16 %v545
    %v2082 = vunpack.c.h.b16 %v545
    %v2083 = vunpack.c.l.b16 %v546
    %v2084 = vunpack.c.h.b16 %v546
    %v2085 = vunpack.c.l.b16 %v547
    %v2086 = vunpack.c.h.b16 %v547
    %v2087 = vunpack.c.l.b16 %v548
    %v2088 = vunpack.c.h.b16 %v548
    %v2089 = vunpack.c.l.b16 %v549
    %v2090 = vunpack.c.h.b16 %v549
    %v2091 = vunpack.c.l.b16 %v550
    %v2092 = vunpack.c.h.b16 %v550
    %v2093 = vunpack.c.l.b16 %v551
    %v2094 = vunpack.c.h.b16 %v551
    %v2095 = vunpack.c.l.b16 %v552
    %v2096 = vunpack.c.h.b16 %v552
    %v2097 = vunpack.c.l.b16 %v553
    %v2098 = vunpack.c.h.b16 %v553
    %v2099 = vunpack.c.l.b16 %v554
    %v2100 = vunpack.c.h.b16 %v554
    %v2101 = vunpack.c.l.b16 %v555
    %v2102 = vunpack.c.h.b16 %v555
    %v2103 = vunpack.c.l.b16 %v556
    %v2104 = vunpack.c.h.b16 %v556
    %v2105 = vunpack.c.l.b16 %v557
    %v2106 = vunpack.c.h.b16 %v557
    %v2107 = vunpack.c.l.b16 %v558
    %v2108 = vunpack.c.h.b16 %v558
    %v2109 = vunpack.c.l.b16 %v559
    %v2110 = vunpack.c.h.b16 %v559
    %v2111 = vunpack.c.l.b16 %v560
    %v2112 = vunpack.c.h.b16 %v560
    %v2113 = vunpack.c.l.b16 %v561
    %v2114 = vunpack.c.h.b16 %v561
    %v2115 = vunpack.c.l.b16 %v562
    %v2116 = vunpack.c.h.b16 %v562
    %v2117 = vunpack.c.l.b16 %v563
    %v2118 = vunpack.c.h.b16 %v563
    %v2119 = vunpack.c.l.b16 %v564
    %v2120 = vunpack.c.h.b16 %v564
    %v2121 = vunpack.c.l.b16 %v565
    %v2122 = vunpack.c.h.b16 %v565
    %v2123 = vunpack.c.l.b16 %v566
    %v2124 = vunpack.c.h.b16 %v566
    %v2125 = vunpack.c.l.b16 %v567
    %v2126 = vunpack.c.h.b16 %v567
    %v2127 = vunpack.c.l.b16 %v568
    %v2128 = vunpack.c.h.b16 %v568
    %v2129 = vunpack.c.l.b16 %v569
    %v2130 = vunpack.c.h.b16 %v569
    %v2131 = vunpack.c.l.b16 %v570
    %v2132 = vunpack.c.h.b16 %v570
    %v2133 = vunpack.c.l.b16 %v571
    %v2134 = vunpack.c.h.b16 %v571
    %v2135 = vunpack.c.l.b16 %v572
    %v2136 = vunpack.c.h.b16 %v572
    %v2137 = vpack.c.b16 %v1121, %v1113
    %v2138 = vpack.c.b16 %v1122, %v1114
    %v2139 = vpack.c.b16 %v1123, %v1115
    %v2140 = vpack.c.b16 %v1124, %v1116
    %v2141 = vpack.c.b16 %v1125, %v1117
    %v2142 = vpack.c.b16 %v1126, %v1118
    %v2143 = vpack.c.b16 %v1127, %v1119
    %v2144 = vpack.c.b16 %v1128, %v1120
    %v2145 = vpack.c.b16 %v1137, %v1129
    %v2146 = vpack.c.b16 %v1138, %v1130
    %v2147 = vpack.c.b16 %v1139, %v1131
    %v2148 = vpack.c.b16 %v1140, %v1132
    %v2149 = vpack.c.b16 %v1141, %v1133
    %v2150 = vpack.c.b16 %v1142, %v1134
    %v2151 = vpack.c.b16 %v1143, %v1135
    %v2152 = vpack.c.b16 %v1144, %v1136
    %v2153 = vpack.c.b16 %v1153, %v1145
    %v2154 = vpack.c.b16 %v1154, %v1146
    %v2155 = vpack.c.b16 %v1155, %v1147
    %v2156 = vpack.c.b16 %v1156, %v1148
    %v2157 = vpack.c.b16 %v1157, %v1149
    %v2158 = vpack.c.b16 %v1158, %v1150
    %v2159 = vpack.c.b16 %v1159, %v1151
    %v2160 = vpack.c.b16 %v1160, %v1152
    %v2161 = vpack.c.b16 %v1169, %v1161
    %v2162 = vpack.c.b16 %v1170, %v1162
    %v2163 = vpack.c.b16 %v1171, %v1163
    %v2164 = vpack.c.b16 %v1172, %v1164
    %v2165 = vpack.c.b16 %v1173, %v1165
    %v2166 = vpack.c.b16 %v1174, %v1166
    %v2167 = vpack.c.b16 %v1175, %v1167
    %v2168 = vpack.c.b16 %v1176, %v1168
    %v2169 = vpack.c.b16 %v1185, %v1177
    %v2170 = vpack.c.b16 %v1186, %v1178
    %v2171 = vpack.c.b16 %v1187, %v1179
    %v2172 = vpack.c.b16 %v1188, %v1180
    %v2173 = vpack.c.b16 %v1189, %v1181
    %v2174 = vpack.c.b16 %v1190, %v1182
    %v2175 = vpack.c.b16 %v1191, %v1183
    %v2176 = vpack.c.b16 %v1192, %v1184
    %v2177 = vpack.c.b16 %v1201, %v1193
    %v2178 = vpack.c.b16 %v1202, %v1194
    %v2179 = vpack.c.b16 %v1203, %v1195
    %v2180 = vpack.c.b16 %v1204, %v1196
    %v2181 = vpack.c.b16 %v1205, %v1197
    %v2182 = vpack.c.b16 %v1206, %v1198
    %v2183 = vpack.c.b16 %v1207, %v1199
    %v2184 = vpack.c.b16 %v1208, %v1200
    %v2185 = vpack.c.b16 %v1217, %v1209
    %v2186 = vpack.c.b16 %v1218, %v1210
    %v2187 = vpack.c.b16 %v1219, %v1211
    %v2188 = vpack.c.b16 %v1220, %v1212
    %v2189 = vpack.c.b16 %v1221, %v1213
    %v2190 = vpack.c.b16 %v1222, %v1214
    %v2191 = vpack.c.b16 %v1223, %v1215
    %v2192 = vpack.c.b16 %v1224, %v1216
    %v2193 = vpack.c.b16 %v1233, %v1225
    %v2194 = vpack.c.b16 %v1234, %v1226
    %v2195 = vpack.c.b16 %v1235, %v1227
    %v2196 = vpack.c.b16 %v1236, %v1228
    %v2197 = vpack.c.b16 %v1237, %v1229
    %v2198 = vpack.c.b16 %v1238, %v1230
    %v2199 = vpack.c.b16 %v1239, %v1231
    %v2200 = vpack.c.b16 %v1240, %v1232
    %v2201 = vpack.c.b16 %v1249, %v1241
    %v2202 = vpack.c.b16 %v1250, %v1242
    %v2203 = vpack.c.b16 %v1251, %v1243
    %v2204 = vpack.c.b16 %v1252, %v1244
    %v2205 = vpack.c.b16 %v1253, %v1245
    %v2206 = vpack.c.b16 %v1254, %v1246
    %v2207 = vpack.c.b16 %v1255, %v1247
    %v2208 = vpack.c.b16 %v1256, %v1248
    %v2209 = vpack.c.b16 %v1265, %v1257
    %v2210 = vpack.c.b16 %v1266, %v1258
    %v2211 = vpack.c.b16 %v1267, %v1259
    %v2212 = vpack.c.b16 %v1268, %v1260
    %v2213 = vpack.c.b16 %v1269, %v1261
    %v2214 = vpack.c.b16 %v1270, %v1262
    %v2215 = vpack.c.b16 %v1271, %v1263
    %v2216 = vpack.c.b16 %v1272, %v1264
    %v2217 = vpack.c.b16 %v1281, %v1273
    %v2218 = vpack.c.b16 %v1282, %v1274
    %v2219 = vpack.c.b16 %v1283, %v1275
    %v2220 = vpack.c.b16 %v1284, %v1276
    %v2221 = vpack.c.b16 %v1285, %v1277
    %v2222 = vpack.c.b16 %v1286, %v1278
    %v2223 = vpack.c.b16 %v1287, %v1279
    %v2224 = vpack.c.b16 %v1288, %v1280
    %v2225 = vpack.c.b16 %v1297, %v1289
    %v2226 = vpack.c.b16 %v1298, %v1290
    %v2227 = vpack.c.b16 %v1299, %v1291
    %v2228 = vpack.c.b16 %v1300, %v1292
    %v2229 = vpack.c.b16 %v1301, %v1293
    %v2230 = vpack.c.b16 %v1302, %v1294
    %v2231 = vpack.c.b16 %v1303, %v1295
    %v2232 = vpack.c.b16 %v1304, %v1296
    %v2233 = vpack.c.b16 %v1313, %v1305
    %v2234 = vpack.c.b16 %v1314, %v1306
    %v2235 = vpack.c.b16 %v1315, %v1307
    %v2236 = vpack.c.b16 %v1316, %v1308
    %v2237 = vpack.c.b16 %v1317, %v1309
    %v2238 = vpack.c.b16 %v1318, %v1310
    %v2239 = vpack.c.b16 %v1319, %v1311
    %v2240 = vpack.c.b16 %v1320, %v1312
    %v2241 = vpack.c.b16 %v1329, %v1321
    %v2242 = vpack.c.b16 %v1330, %v1322
    %v2243 = vpack.c.b16 %v1331, %v1323
    %v2244 = vpack.c.b16 %v1332, %v1324
    %v2245 = vpack.c.b16 %v1333, %v1325
    %v2246 = vpack.c.b16 %v1334, %v1326
    %v2247 = vpack.c.b16 %v1335, %v1327
    %v2248 = vpack.c.b16 %v1336, %v1328
    %v2249 = vpack.c.b16 %v1345, %v1337
    %v2250 = vpack.c.b16 %v1346, %v1338
    %v2251 = vpack.c.b16 %v1347, %v1339
    %v2252 = vpack.c.b16 %v1348, %v1340
    %v2253 = vpack.c.b16 %v1349, %v1341
    %v2254 = vpack.c.b16 %v1350, %v1342
    %v2255 = vpack.c.b16 %v1351, %v1343
    %v2256 = vpack.c.b16 %v1352, %v1344
    %v2257 = vpack.c.b16 %v1361, %v1353
    %v2258 = vpack.c.b16 %v1362, %v1354
    %v2259 = vpack.c.b16 %v1363, %v1355
    %v2260 = vpack.c.b16 %v1364, %v1356
    %v2261 = vpack.c.b16 %v1365, %v1357
    %v2262 = vpack.c.b16 %v1366, %v1358
    %v2263 = vpack.c.b16 %v1367, %v1359
    %v2264 = vpack.c.b16 %v1368, %v1360
    %v2265 = vpack.c.b16 %v1377, %v1369
    %v2266 = vpack.c.b16 %v1378, %v1370
    %v2267 = vpack.c.b16 %v1379, %v1371
    %v2268 = vpack.c.b16 %v1380, %v1372
    %v2269 = vpack.c.b16 %v1381, %v1373
    %v2270 = vpack.c.b16 %v1382, %v1374
    %v2271 = vpack.c.b16 %v1383, %v1375
    %v2272 = vpack.c.b16 %v1384, %v1376
    %v2273 = vpack.c.b16 %v1393, %v1385
    %v2274 = vpack.c.b16 %v1394, %v1386
    %v2275 = vpack.c.b16 %v1395, %v1387
    %v2276 = vpack.c.b16 %v1396, %v1388
    %v2277 = vpack.c.b16 %v1397, %v1389
    %v2278 = vpack.c.b16 %v1398, %v1390
    %v2279 = vpack.c.b16 %v1399, %v1391
    %v2280 = vpack.c.b16 %v1400, %v1392
    %v2281 = vpack.c.b16 %v1409, %v1401
    %v2282 = vpack.c.b16 %v1410, %v1402
    %v2283 = vpack.c.b16 %v1411, %v1403
    %v2284 = vpack.c.b16 %v1412, %v1404
    %v2285 = vpack.c.b16 %v1413, %v1405
    %v2286 = vpack.c.b16 %v1414, %v1406
    %v2287 = vpack.c.b16 %v1415, %v1407
    %v2288 = vpack.c.b16 %v1416, %v1408
    %v2289 = vpack.c.b16 %v1425, %v1417
    %v2290 = vpack.c.b16 %v1426, %v1418
    %v2291 = vpack.c.b16 %v1427, %v1419
    %v2292 = vpack.c.b16 %v1428, %v1420
    %v2293 = vpack.c.b16 %v1429, %v1421
    %v2294 = vpack.c.b16 %v1430, %v1422
    %v2295 = vpack.c.b16 %v1431, %v1423
    %v2296 = vpack.c.b16 %v1432, %v1424
    %v2297 = vpack.c.b16 %v1441, %v1433
    %v2298 = vpack.c.b16 %v1442, %v1434
    %v2299 = vpack.c.b16 %v1443, %v1435
    %v2300 = vpack.c.b16 %v1444, %v1436
    %v2301 = vpack.c.b16 %v1445, %v1437
    %v2302 = vpack.c.b16 %v1446, %v1438
    %v2303 = vpack.c.b16 %v1447, %v1439
    %v2304 = vpack.c.b16 %v1448, %v1440
    %v2305 = vpack.c.b16 %v1457, %v1449
    %v2306 = vpack.c.b16 %v1458, %v1450
    %v2307 = vpack.c.b16 %v1459, %v1451
    %v2308 = vpack.c.b16 %v1460, %v1452
    %v2309 = vpack.c.b16 %v1461, %v1453
    %v2310 = vpack.c.b16 %v1462, %v1454
    %v2311 = vpack.c.b16 %v1463, %v1455
    %v2312 = vpack.c.b16 %v1464, %v1456
    %v2313 = vpack.c.b16 %v1473, %v1465
    %v2314 = vpack.c.b16 %v1474, %v1466
    %v2315 = vpack.c.b16 %v1475, %v1467
    %v2316 = vpack.c.b16 %v1476, %v1468
    %v2317 = vpack.c.b16 %v1477, %v1469
    %v2318 = vpack.c.b16 %v1478, %v1470
    %v2319 = vpack.c.b16 %v1479, %v1471
    %v2320 = vpack.c.b16 %v1480, %v1472
    %v2321 = vpack.c.b16 %v1489, %v1481
    %v2322 = vpack.c.b16 %v1490, %v1482
    %v2323 = vpack.c.b16 %v1491, %v1483
    %v2324 = vpack.c.b16 %v1492, %v1484
    %v2325 = vpack.c.b16 %v1493, %v1485
    %v2326 = vpack.c.b16 %v1494, %v1486
    %v2327 = vpack.c.b16 %v1495, %v1487
    %v2328 = vpack.c.b16 %v1496, %v1488
    %v2329 = vpack.c.b16 %v1505, %v1497
    %v2330 = vpack.c.b16 %v1506, %v1498
    %v2331 = vpack.c.b16 %v1507, %v1499
    %v2332 = vpack.c.b16 %v1508, %v1500
    %v2333 = vpack.c.b16 %v1509, %v1501
    %v2334 = vpack.c.b16 %v1510, %v1502
    %v2335 = vpack.c.b16 %v1511, %v1503
    %v2336 = vpack.c.b16 %v1512, %v1504
    %v2337 = vpack.c.b16 %v1521, %v1513
    %v2338 = vpack.c.b16 %v1522, %v1514
    %v2339 = vpack.c.b16 %v1523, %v1515
    %v2340 = vpack.c.b16 %v1524, %v1516
    %v2341 = vpack.c.b16 %v1525, %v1517
    %v2342 = vpack.c.b16 %v1526, %v1518
    %v2343 = vpack.c.b16 %v1527, %v1519
    %v2344 = vpack.c.b16 %v1528, %v1520
    %v2345 = vpack.c.b16 %v1537, %v1529
    %v2346 = vpack.c.b16 %v1538, %v1530
    %v2347 = vpack.c.b16 %v1539, %v1531
    %v2348 = vpack.c.b16 %v1540, %v1532
    %v2349 = vpack.c.b16 %v1541, %v1533
    %v2350 = vpack.c.b16 %v1542, %v1534
    %v2351 = vpack.c.b16 %v1543, %v1535
    %v2352 = vpack.c.b16 %v1544, %v1536
    %v2353 = vpack.c.b16 %v1553, %v1545
    %v2354 = vpack.c.b16 %v1554, %v1546
    %v2355 = vpack.c.b16 %v1555, %v1547
    %v2356 = vpack.c.b16 %v1556, %v1548
    %v2357 = vpack.c.b16 %v1557, %v1549
    %v2358 = vpack.c.b16 %v1558, %v1550
    %v2359 = vpack.c.b16 %v1559, %v1551
    %v2360 = vpack.c.b16 %v1560, %v1552
    %v2361 = vpack.c.b16 %v1569, %v1561
    %v2362 = vpack.c.b16 %v1570, %v1562
    %v2363 = vpack.c.b16 %v1571, %v1563
    %v2364 = vpack.c.b16 %v1572, %v1564
    %v2365 = vpack.c.b16 %v1573, %v1565
    %v2366 = vpack.c.b16 %v1574, %v1566
    %v2367 = vpack.c.b16 %v1575, %v1567
    %v2368 = vpack.c.b16 %v1576, %v1568
    %v2369 = vpack.c.b16 %v1585, %v1577
    %v2370 = vpack.c.b16 %v1586, %v1578
    %v2371 = vpack.c.b16 %v1587, %v1579
    %v2372 = vpack.c.b16 %v1588, %v1580
    %v2373 = vpack.c.b16 %v1589, %v1581
    %v2374 = vpack.c.b16 %v1590, %v1582
    %v2375 = vpack.c.b16 %v1591, %v1583
    %v2376 = vpack.c.b16 %v1592, %v1584
    %v2377 = vpack.c.b16 %v1601, %v1593
    %v2378 = vpack.c.b16 %v1602, %v1594
    %v2379 = vpack.c.b16 %v1603, %v1595
    %v2380 = vpack.c.b16 %v1604, %v1596
    %v2381 = vpack.c.b16 %v1605, %v1597
    %v2382 = vpack.c.b16 %v1606, %v1598
    %v2383 = vpack.c.b16 %v1607, %v1599
    %v2384 = vpack.c.b16 %v1608, %v1600
    %v2385 = vpack.c.b16 %v1617, %v1609
    %v2386 = vpack.c.b16 %v1618, %v1610
    %v2387 = vpack.c.b16 %v1619, %v1611
    %v2388 = vpack.c.b16 %v1620, %v1612
    %v2389 = vpack.c.b16 %v1621, %v1613
    %v2390 = vpack.c.b16 %v1622, %v1614
    %v2391 = vpack.c.b16 %v1623, %v1615
    %v2392 = vpack.c.b16 %v1624, %v1616
    %v2393 = vpack.c.b16 %v1633, %v1625
    %v2394 = vpack.c.b16 %v1634, %v1626
    %v2395 = vpack.c.b16 %v1635, %v1627
    %v2396 = vpack.c.b16 %v1636, %v1628
    %v2397 = vpack.c.b16 %v1637, %v1629
    %v2398 = vpack.c.b16 %v1638, %v1630
    %v2399 = vpack.c.b16 %v1639, %v1631
    %v2400 = vpack.c.b16 %v1640, %v1632
    %v2401 = vpack.c.b16 %v1649, %v1641
    %v2402 = vpack.c.b16 %v1650, %v1642
    %v2403 = vpack.c.b16 %v1651, %v1643
    %v2404 = vpack.c.b16 %v1652, %v1644
    %v2405 = vpack.c.b16 %v1653, %v1645
    %v2406 = vpack.c.b16 %v1654, %v1646
    %v2407 = vpack.c.b16 %v1655, %v1647
    %v2408 = vpack.c.b16 %v1656, %v1648
    %v2409 = vpack.c.b16 %v1665, %v1657
    %v2410 = vpack.c.b16 %v1666, %v1658
    %v2411 = vpack.c.b16 %v1667, %v1659
    %v2412 = vpack.c.b16 %v1668, %v1660
    %v2413 = vpack.c.b16 %v1669, %v1661
    %v2414 = vpack.c.b16 %v1670, %v1662
    %v2415 = vpack.c.b16 %v1671, %v1663
    %v2416 = vpack.c.b16 %v1672, %v1664
    %v2417 = vpack.c.b16 %v1681, %v1673
    %v2418 = vpack.c.b16 %v1682, %v1674
    %v2419 = vpack.c.b16 %v1683, %v1675
    %v2420 = vpack.c.b16 %v1684, %v1676
    %v2421 = vpack.c.b16 %v1685, %v1677
    %v2422 = vpack.c.b16 %v1686, %v1678
    %v2423 = vpack.c.b16 %v1687, %v1679
    %v2424 = vpack.c.b16 %v1688, %v1680
    %v2425 = vpack.c.b16 %v1697, %v1689
    %v2426 = vpack.c.b16 %v1698, %v1690
    %v2427 = vpack.c.b16 %v1699, %v1691
    %v2428 = vpack.c.b16 %v1700, %v1692
    %v2429 = vpack.c.b16 %v1701, %v1693
    %v2430 = vpack.c.b16 %v1702, %v1694
    %v2431 = vpack.c.b16 %v1703, %v1695
    %v2432 = vpack.c.b16 %v1704, %v1696
    %v2433 = vpack.c.b16 %v1713, %v1705
    %v2434 = vpack.c.b16 %v1714, %v1706
    %v2435 = vpack.c.b16 %v1715, %v1707
    %v2436 = vpack.c.b16 %v1716, %v1708
    %v2437 = vpack.c.b16 %v1717, %v1709
    %v2438 = vpack.c.b16 %v1718, %v1710
    %v2439 = vpack.c.b16 %v1719, %v1711
    %v2440 = vpack.c.b16 %v1720, %v1712
    %v2441 = vpack.c.b16 %v1729, %v1721
    %v2442 = vpack.c.b16 %v1730, %v1722
    %v2443 = vpack.c.b16 %v1731, %v1723
    %v2444 = vpack.c.b16 %v1732, %v1724
    %v2445 = vpack.c.b16 %v1733, %v1725
    %v2446 = vpack.c.b16 %v1734, %v1726
    %v2447 = vpack.c.b16 %v1735, %v1727
    %v2448 = vpack.c.b16 %v1736, %v1728
    %v2449 = vpack.c.b16 %v1745, %v1737
    %v2450 = vpack.c.b16 %v1746, %v1738
    %v2451 = vpack.c.b16 %v1747, %v1739
    %v2452 = vpack.c.b16 %v1748, %v1740
    %v2453 = vpack.c.b16 %v1749, %v1741
    %v2454 = vpack.c.b16 %v1750, %v1742
    %v2455 = vpack.c.b16 %v1751, %v1743
    %v2456 = vpack.c.b16 %v1752, %v1744
    %v2457 = vpack.c.b16 %v1761, %v1753
    %v2458 = vpack.c.b16 %v1762, %v1754
    %v2459 = vpack.c.b16 %v1763, %v1755
    %v2460 = vpack.c.b16 %v1764, %v1756
    %v2461 = vpack.c.b16 %v1765, %v1757
    %v2462 = vpack.c.b16 %v1766, %v1758
    %v2463 = vpack.c.b16 %v1767, %v1759
    %v2464 = vpack.c.b16 %v1768, %v1760
    %v2465 = vpack.c.b16 %v1777, %v1769
    %v2466 = vpack.c.b16 %v1778, %v1770
    %v2467 = vpack.c.b16 %v1779, %v1771
    %v2468 = vpack.c.b16 %v1780, %v1772
    %v2469 = vpack.c.b16 %v1781, %v1773
    %v2470 = vpack.c.b16 %v1782, %v1774
    %v2471 = vpack.c.b16 %v1783, %v1775
    %v2472 = vpack.c.b16 %v1784, %v1776
    %v2473 = vpack.c.b16 %v1793, %v1785
    %v2474 = vpack.c.b16 %v1794, %v1786
    %v2475 = vpack.c.b16 %v1795, %v1787
    %v2476 = vpack.c.b16 %v1796, %v1788
    %v2477 = vpack.c.b16 %v1797, %v1789
    %v2478 = vpack.c.b16 %v1798, %v1790
    %v2479 = vpack.c.b16 %v1799, %v1791
    %v2480 = vpack.c.b16 %v1800, %v1792
    %v2481 = vpack.c.b16 %v1809, %v1801
    %v2482 = vpack.c.b16 %v1810, %v1802
    %v2483 = vpack.c.b16 %v1811, %v1803
    %v2484 = vpack.c.b16 %v1812, %v1804
    %v2485 = vpack.c.b16 %v1813, %v1805
    %v2486 = vpack.c.b16 %v1814, %v1806
    %v2487 = vpack.c.b16 %v1815, %v1807
    %v2488 = vpack.c.b16 %v1816, %v1808
    %v2489 = vpack.c.b16 %v1825, %v1817
    %v2490 = vpack.c.b16 %v1826, %v1818
    %v2491 = vpack.c.b16 %v1827, %v1819
    %v2492 = vpack.c.b16 %v1828, %v1820
    %v2493 = vpack.c.b16 %v1829, %v1821
    %v2494 = vpack.c.b16 %v1830, %v1822
    %v2495 = vpack.c.b16 %v1831, %v1823
    %v2496 = vpack.c.b16 %v1832, %v1824
    %v2497 = vpack.c.b16 %v1841, %v1833
    %v2498 = vpack.c.b16 %v1842, %v1834
    %v2499 = vpack.c.b16 %v1843, %v1835
    %v2500 = vpack.c.b16 %v1844, %v1836
    %v2501 = vpack.c.b16 %v1845, %v1837
    %v2502 = vpack.c.b16 %v1846, %v1838
    %v2503 = vpack.c.b16 %v1847, %v1839
    %v2504 = vpack.c.b16 %v1848, %v1840
    %v2505 = vpack.c.b16 %v1857, %v1849
    %v2506 = vpack.c.b16 %v1858, %v1850
    %v2507 = vpack.c.b16 %v1859, %v1851
    %v2508 = vpack.c.b16 %v1860, %v1852
    %v2509 = vpack.c.b16 %v1861, %v1853
    %v2510 = vpack.c.b16 %v1862, %v1854
    %v2511 = vpack.c.b16 %v1863, %v1855
    %v2512 = vpack.c.b16 %v1864, %v1856
    %v2513 = vpack.c.b16 %v1873, %v1865
    %v2514 = vpack.c.b16 %v1874, %v1866
    %v2515 = vpack.c.b16 %v1875, %v1867
    %v2516 = vpack.c.b16 %v1876, %v1868
    %v2517 = vpack.c.b16 %v1877, %v1869
    %v2518 = vpack.c.b16 %v1878, %v1870
    %v2519 = vpack.c.b16 %v1879, %v1871
    %v2520 = vpack.c.b16 %v1880, %v1872
    %v2521 = vpack.c.b16 %v1889, %v1881
    %v2522 = vpack.c.b16 %v1890, %v1882
    %v2523 = vpack.c.b16 %v1891, %v1883
    %v2524 = vpack.c.b16 %v1892, %v1884
    %v2525 = vpack.c.b16 %v1893, %v1885
    %v2526 = vpack.c.b16 %v1894, %v1886
    %v2527 = vpack.c.b16 %v1895, %v1887
    %v2528 = vpack.c.b16 %v1896, %v1888
    %v2529 = vpack.c.b16 %v1905, %v1897
    %v2530 = vpack.c.b16 %v1906, %v1898
    %v2531 = vpack.c.b16 %v1907, %v1899
    %v2532 = vpack.c.b16 %v1908, %v1900
    %v2533 = vpack.c.b16 %v1909, %v1901
    %v2534 = vpack.c.b16 %v1910, %v1902
    %v2535 = vpack.c.b16 %v1911, %v1903
    %v2536 = vpack.c.b16 %v1912, %v1904
    %v2537 = vpack.c.b16 %v1921, %v1913
    %v2538 = vpack.c.b16 %v1922, %v1914
    %v2539 = vpack.c.b16 %v1923, %v1915
    %v2540 = vpack.c.b16 %v1924, %v1916
    %v2541 = vpack.c.b16 %v1925, %v1917
    %v2542 = vpack.c.b16 %v1926, %v1918
    %v2543 = vpack.c.b16 %v1927, %v1919
    %v2544 = vpack.c.b16 %v1928, %v1920
    %v2545 = vpack.c.b16 %v1937, %v1929
    %v2546 = vpack.c.b16 %v1938, %v1930
    %v2547 = vpack.c.b16 %v1939, %v1931
    %v2548 = vpack.c.b16 %v1940, %v1932
    %v2549 = vpack.c.b16 %v1941, %v1933
    %v2550 = vpack.c.b16 %v1942, %v1934
    %v2551 = vpack.c.b16 %v1943, %v1935
    %v2552 = vpack.c.b16 %v1944, %v1936
    %v2553 = vpack.c.b16 %v1953, %v1945
    %v2554 = vpack.c.b16 %v1954, %v1946
    %v2555 = vpack.c.b16 %v1955, %v1947
    %v2556 = vpack.c.b16 %v1956, %v1948
    %v2557 = vpack.c.b16 %v1957, %v1949
    %v2558 = vpack.c.b16 %v1958, %v1950
    %v2559 = vpack.c.b16 %v1959, %v1951
    %v2560 = vpack.c.b16 %v1960, %v1952
    %v2561 = vpack.c.b16 %v1969, %v1961
    %v2562 = vpack.c.b16 %v1970, %v1962
    %v2563 = vpack.c.b16 %v1971, %v1963
    %v2564 = vpack.c.b16 %v1972, %v1964
    %v2565 = vpack.c.b16 %v1973, %v1965
    %v2566 = vpack.c.b16 %v1974, %v1966
    %v2567 = vpack.c.b16 %v1975, %v1967
    %v2568 = vpack.c.b16 %v1976, %v1968
    %v2569 = vpack.c.b16 %v1985, %v1977
    %v2570 = vpack.c.b16 %v1986, %v1978
    %v2571 = vpack.c.b16 %v1987, %v1979
    %v2572 = vpack.c.b16 %v1988, %v1980
    %v2573 = vpack.c.b16 %v1989, %v1981
    %v2574 = vpack.c.b16 %v1990, %v1982
    %v2575 = vpack.c.b16 %v1991, %v1983
    %v2576 = vpack.c.b16 %v1992, %v1984
    %v2577 = vpack.c.b16 %v2001, %v1993
    %v2578 = vpack.c.b16 %v2002, %v1994
    %v2579 = vpack.c.b16 %v2003, %v1995
    %v2580 = vpack.c.b16 %v2004, %v1996
    %v2581 = vpack.c.b16 %v2005, %v1997
    %v2582 = vpack.c.b16 %v2006, %v1998
    %v2583 = vpack.c.b16 %v2007, %v1999
    %v2584 = vpack.c.b16 %v2008, %v2000
    %v2585 = vpack.c.b16 %v2017, %v2009
    %v2586 = vpack.c.b16 %v2018, %v2010
    %v2587 = vpack.c.b16 %v2019, %v2011
    %v2588 = vpack.c.b16 %v2020, %v2012
    %v2589 = vpack.c.b16 %v2021, %v2013
    %v2590 = vpack.c.b16 %v2022, %v2014
    %v2591 = vpack.c.b16 %v2023, %v2015
    %v2592 = vpack.c.b16 %v2024, %v2016
    %v2593 = vpack.c.b16 %v2033, %v2025
    %v2594 = vpack.c.b16 %v2034, %v2026
    %v2595 = vpack.c.b16 %v2035, %v2027
    %v2596 = vpack.c.b16 %v2036, %v2028
    %v2597 = vpack.c.b16 %v2037, %v2029
    %v2598 = vpack.c.b16 %v2038, %v2030
    %v2599 = vpack.c.b16 %v2039, %v2031
    %v2600 = vpack.c.b16 %v2040, %v2032
    %v2601 = vpack.c.b16 %v2049, %v2041
    %v2602 = vpack.c.b16 %v2050, %v2042
    %v2603 = vpack.c.b16 %v2051, %v2043
    %v2604 = vpack.c.b16 %v2052, %v2044
    %v2605 = vpack.c.b16 %v2053, %v2045
    %v2606 = vpack.c.b16 %v2054, %v2046
    %v2607 = vpack.c.b16 %v2055, %v2047
    %v2608 = vpack.c.b16 %v2056, %v2048
    %v2609 = vpack.c.b16 %v2065, %v2057
    %v2610 = vpack.c.b16 %v2066, %v2058
    %v2611 = vpack.c.b16 %v2067, %v2059
    %v2612 = vpack.c.b16 %v2068, %v2060
    %v2613 = vpack.c.b16 %v2069, %v2061
    %v2614 = vpack.c.b16 %v2070, %v2062
    %v2615 = vpack.c.b16 %v2071, %v2063
    %v2616 = vpack.c.b16 %v2072, %v2064
    %v2617 = vpack.c.b16 %v2081, %v2073
    %v2618 = vpack.c.b16 %v2082, %v2074
    %v2619 = vpack.c.b16 %v2083, %v2075
    %v2620 = vpack.c.b16 %v2084, %v2076
    %v2621 = vpack.c.b16 %v2085, %v2077
    %v2622 = vpack.c.b16 %v2086, %v2078
    %v2623 = vpack.c.b16 %v2087, %v2079
    %v2624 = vpack.c.b16 %v2088, %v2080
    %v2625 = vpack.c.b16 %v2097, %v2089
    %v2626 = vpack.c.b16 %v2098, %v2090
    %v2627 = vpack.c.b16 %v2099, %v2091
    %v2628 = vpack.c.b16 %v2100, %v2092
    %v2629 = vpack.c.b16 %v2101, %v2093
    %v2630 = vpack.c.b16 %v2102, %v2094
    %v2631 = vpack.c.b16 %v2103, %v2095
    %v2632 = vpack.c.b16 %v2104, %v2096
    %v2633 = vpack.c.b16 %v2113, %v2105
    %v2634 = vpack.c.b16 %v2114, %v2106
    %v2635 = vpack.c.b16 %v2115, %v2107
    %v2636 = vpack.c.b16 %v2116, %v2108
    %v2637 = vpack.c.b16 %v2117, %v2109
    %v2638 = vpack.c.b16 %v2118, %v2110
    %v2639 = vpack.c.b16 %v2119, %v2111
    %v2640 = vpack.c.b16 %v2120, %v2112
    %v2641 = vpack.c.b16 %v2129, %v2121
    %v2642 = vpack.c.b16 %v2130, %v2122
    %v2643 = vpack.c.b16 %v2131, %v2123
    %v2644 = vpack.c.b16 %v2132, %v2124
    %v2645 = vpack.c.b16 %v2133, %v2125
    %v2646 = vpack.c.b16 %v2134, %v2126
    %v2647 = vpack.c.b16 %v2135, %v2127
    %v2648 = vpack.c.b16 %v2136, %v2128
    %3161 = vmatpush.bf16.msra.mxu0 %v2193
    %3162 = vmatpush.bf16.msra.mxu0 %v2185
    %3163 = vmatpush.bf16.msra.mxu0 %v2177
    %3164 = vmatpush.bf16.msra.mxu0 %v2169
    %3165 = vmatpush.bf16.msra.mxu0 %v2161
    %3166 = vmatpush.bf16.msra.mxu0 %v2153
    %3167 = vmatpush.bf16.msra.mxu0 %v2145
    %3168 = vmatpush.bf16.msra.mxu0 %v2137
    %3169 = vmatmul.bf16.gmra.mxu0 %v585
    %v3170 = vpop.f32.mrf.mxu0
    %v3171 = vadd.f32 0.0, %v3170
    %v3172 = vpop.f32.mrf.mxu0
    %3173 = vdwg.mxu0
    %3174 = vmatpush.bf16.msra.mxu0 %v2257
    %3175 = vmatpush.bf16.msra.mxu0 %v2249
    %3176 = vmatpush.bf16.msra.mxu0 %v2241
    %3177 = vmatpush.bf16.msra.mxu0 %v2233
    %3178 = vmatpush.bf16.msra.mxu0 %v2225
    %3179 = vmatpush.bf16.msra.mxu0 %v2217
    %3180 = vmatpush.bf16.msra.mxu0 %v2209
    %3181 = vmatpush.bf16.msra.mxu0 %v2201
    %3182 = vmatmul.bf16.gmra.mxu0 %v586
    %v3183 = vpop.f32.mrf.mxu0
    %v3184 = vadd.f32 %v3171, %v3183
    %v3185 = vpop.f32.mrf.mxu0
    %3186 = vdwg.mxu0
    %3187 = vmatpush.bf16.msra.mxu0 %v2321
    %3188 = vmatpush.bf16.msra.mxu0 %v2313
    %3189 = vmatpush.bf16.msra.mxu0 %v2305
    %3190 = vmatpush.bf16.msra.mxu0 %v2297
    %3191 = vmatpush.bf16.msra.mxu0 %v2289
    %3192 = vmatpush.bf16.msra.mxu0 %v2281
    %3193 = vmatpush.bf16.msra.mxu0 %v2273
    %3194 = vmatpush.bf16.msra.mxu0 %v2265
    %3195 = vmatmul.bf16.gmra.mxu0 %v587
    %v3196 = vpop.f32.mrf.mxu0
    %v3197 = vadd.f32 %v3184, %v3196
    %v3198 = vpop.f32.mrf.mxu0
    %3199 = vdwg.mxu0
    %3200 = vmatpush.bf16.msra.mxu0 %v2385
    %3201 = vmatpush.bf16.msra.mxu0 %v2377
    %3202 = vmatpush.bf16.msra.mxu0 %v2369
    %3203 = vmatpush.bf16.msra.mxu0 %v2361
    %3204 = vmatpush.bf16.msra.mxu0 %v2353
    %3205 = vmatpush.bf16.msra.mxu0 %v2345
    %3206 = vmatpush.bf16.msra.mxu0 %v2337
    %3207 = vmatpush.bf16.msra.mxu0 %v2329
    %3208 = vmatmul.bf16.gmra.mxu0 %v588
    %v3209 = vpop.f32.mrf.mxu0
    %v3210 = vadd.f32 %v3197, %v3209
    %v3211 = vpop.f32.mrf.mxu0
    %3212 = vdwg.mxu0
    %3213 = vmatpush.bf16.msra.mxu0 %v2449
    %3214 = vmatpush.bf16.msra.mxu0 %v2441
    %3215 = vmatpush.bf16.msra.mxu0 %v2433
    %3216 = vmatpush.bf16.msra.mxu0 %v2425
    %3217 = vmatpush.bf16.msra.mxu0 %v2417
    %3218 = vmatpush.bf16.msra.mxu0 %v2409
    %3219 = vmatpush.bf16.msra.mxu0 %v2401
    %3220 = vmatpush.bf16.msra.mxu0 %v2393
    %3221 = vmatmul.bf16.gmra.mxu0 %v589
    %v3222 = vpop.f32.mrf.mxu0
    %v3223 = vadd.f32 %v3210, %v3222
    %v3224 = vpop.f32.mrf.mxu0
    %3225 = vdwg.mxu0
    %3226 = vmatpush.bf16.msra.mxu0 %v2513
    %3227 = vmatpush.bf16.msra.mxu0 %v2505
    %3228 = vmatpush.bf16.msra.mxu0 %v2497
    %3229 = vmatpush.bf16.msra.mxu0 %v2489
    %3230 = vmatpush.bf16.msra.mxu0 %v2481
    %3231 = vmatpush.bf16.msra.mxu0 %v2473
    %3232 = vmatpush.bf16.msra.mxu0 %v2465
    %3233 = vmatpush.bf16.msra.mxu0 %v2457
    %3234 = vmatmul.bf16.gmra.mxu0 %v590
    %v3235 = vpop.f32.mrf.mxu0
    %v3236 = vadd.f32 %v3223, %v3235
    %v3237 = vpop.f32.mrf.mxu0
    %3238 = vdwg.mxu0
    %3239 = vmatpush.bf16.msra.mxu0 %v2577
    %3240 = vmatpush.bf16.msra.mxu0 %v2569
    %3241 = vmatpush.bf16.msra.mxu0 %v2561
    %3242 = vmatpush.bf16.msra.mxu0 %v2553
    %3243 = vmatpush.bf16.msra.mxu0 %v2545
    %3244 = vmatpush.bf16.msra.mxu0 %v2537
    %3245 = vmatpush.bf16.msra.mxu0 %v2529
    %3246 = vmatpush.bf16.msra.mxu0 %v2521
    %3247 = vmatmul.bf16.gmra.mxu0 %v591
    %v3248 = vpop.f32.mrf.mxu0
    %v3249 = vadd.f32 %v3236, %v3248
    %v3250 = vpop.f32.mrf.mxu0
    %3251 = vdwg.mxu0
    %3252 = vmatpush.bf16.msra.mxu0 %v2641
    %3253 = vmatpush.bf16.msra.mxu0 %v2633
    %3254 = vmatpush.bf16.msra.mxu0 %v2625
    %3255 = vmatpush.bf16.msra.mxu0 %v2617
    %3256 = vmatpush.bf16.msra.mxu0 %v2609
    %3257 = vmatpush.bf16.msra.mxu0 %v2601
    %3258 = vmatpush.bf16.msra.mxu0 %v2593
    %3259 = vmatpush.bf16.msra.mxu0 %v2585
    %3260 = vmatmul.bf16.gmra.mxu0 %v592
    %v3261 = vpop.f32.mrf.mxu0
    %v3262 = vadd.f32 %v3249, %v3261
    %v3263 = vpop.f32.mrf.mxu0
    %3264 = vdwg.mxu0
    %3265 = vmatpush.bf16.msra.mxu0 %v2194
    %3266 = vmatpush.bf16.msra.mxu0 %v2186
    %3267 = vmatpush.bf16.msra.mxu0 %v2178
    %3268 = vmatpush.bf16.msra.mxu0 %v2170
    %3269 = vmatpush.bf16.msra.mxu0 %v2162
    %3270 = vmatpush.bf16.msra.mxu0 %v2154
    %3271 = vmatpush.bf16.msra.mxu0 %v2146
    %3272 = vmatpush.bf16.msra.mxu0 %v2138
    %3273 = vmatmul.bf16.gmra.mxu0 %v585
    %v3274 = vpop.f32.mrf.mxu0
    %v3275 = vadd.f32 0.0, %v3274
    %v3276 = vpop.f32.mrf.mxu0
    %3277 = vdwg.mxu0
    %3278 = vmatpush.bf16.msra.mxu0 %v2258
    %3279 = vmatpush.bf16.msra.mxu0 %v2250
    %3280 = vmatpush.bf16.msra.mxu0 %v2242
    %3281 = vmatpush.bf16.msra.mxu0 %v2234
    %3282 = vmatpush.bf16.msra.mxu0 %v2226
    %3283 = vmatpush.bf16.msra.mxu0 %v2218
    %3284 = vmatpush.bf16.msra.mxu0 %v2210
    %3285 = vmatpush.bf16.msra.mxu0 %v2202
    %3286 = vmatmul.bf16.gmra.mxu0 %v586
    %v3287 = vpop.f32.mrf.mxu0
    %v3288 = vadd.f32 %v3275, %v3287
    %v3289 = vpop.f32.mrf.mxu0
    %3290 = vdwg.mxu0
    %3291 = vmatpush.bf16.msra.mxu0 %v2322
    %3292 = vmatpush.bf16.msra.mxu0 %v2314
    %3293 = vmatpush.bf16.msra.mxu0 %v2306
    %3294 = vmatpush.bf16.msra.mxu0 %v2298
    %3295 = vmatpush.bf16.msra.mxu0 %v2290
    %3296 = vmatpush.bf16.msra.mxu0 %v2282
    %3297 = vmatpush.bf16.msra.mxu0 %v2274
    %3298 = vmatpush.bf16.msra.mxu0 %v2266
    %3299 = vmatmul.bf16.gmra.mxu0 %v587
    %v3300 = vpop.f32.mrf.mxu0
    %v3301 = vadd.f32 %v3288, %v3300
    %v3302 = vpop.f32.mrf.mxu0
    %3303 = vdwg.mxu0
    %3304 = vmatpush.bf16.msra.mxu0 %v2386
    %3305 = vmatpush.bf16.msra.mxu0 %v2378
    %3306 = vmatpush.bf16.msra.mxu0 %v2370
    %3307 = vmatpush.bf16.msra.mxu0 %v2362
    %3308 = vmatpush.bf16.msra.mxu0 %v2354
    %3309 = vmatpush.bf16.msra.mxu0 %v2346
    %3310 = vmatpush.bf16.msra.mxu0 %v2338
    %3311 = vmatpush.bf16.msra.mxu0 %v2330
    %3312 = vmatmul.bf16.gmra.mxu0 %v588
    %v3313 = vpop.f32.mrf.mxu0
    %v3314 = vadd.f32 %v3301, %v3313
    %v3315 = vpop.f32.mrf.mxu0
    %3316 = vdwg.mxu0
    %3317 = vmatpush.bf16.msra.mxu0 %v2450
    %3318 = vmatpush.bf16.msra.mxu0 %v2442
    %3319 = vmatpush.bf16.msra.mxu0 %v2434
    %3320 = vmatpush.bf16.msra.mxu0 %v2426
    %3321 = vmatpush.bf16.msra.mxu0 %v2418
    %3322 = vmatpush.bf16.msra.mxu0 %v2410
    %3323 = vmatpush.bf16.msra.mxu0 %v2402
    %3324 = vmatpush.bf16.msra.mxu0 %v2394
    %3325 = vmatmul.bf16.gmra.mxu0 %v589
    %v3326 = vpop.f32.mrf.mxu0
    %v3327 = vadd.f32 %v3314, %v3326
    %v3328 = vpop.f32.mrf.mxu0
    %3329 = vdwg.mxu0
    %3330 = vmatpush.bf16.msra.mxu0 %v2514
    %3331 = vmatpush.bf16.msra.mxu0 %v2506
    %3332 = vmatpush.bf16.msra.mxu0 %v2498
    %3333 = vmatpush.bf16.msra.mxu0 %v2490
    %3334 = vmatpush.bf16.msra.mxu0 %v2482
    %3335 = vmatpush.bf16.msra.mxu0 %v2474
    %3336 = vmatpush.bf16.msra.mxu0 %v2466
    %3337 = vmatpush.bf16.msra.mxu0 %v2458
    %3338 = vmatmul.bf16.gmra.mxu0 %v590
    %v3339 = vpop.f32.mrf.mxu0
    %v3340 = vadd.f32 %v3327, %v3339
    %v3341 = vpop.f32.mrf.mxu0
    %3342 = vdwg.mxu0
    %3343 = vmatpush.bf16.msra.mxu0 %v2578
    %3344 = vmatpush.bf16.msra.mxu0 %v2570
    %3345 = vmatpush.bf16.msra.mxu0 %v2562
    %3346 = vmatpush.bf16.msra.mxu0 %v2554
    %3347 = vmatpush.bf16.msra.mxu0 %v2546
    %3348 = vmatpush.bf16.msra.mxu0 %v2538
    %3349 = vmatpush.bf16.msra.mxu0 %v2530
    %3350 = vmatpush.bf16.msra.mxu0 %v2522
    %3351 = vmatmul.bf16.gmra.mxu0 %v591
    %v3352 = vpop.f32.mrf.mxu0
    %v3353 = vadd.f32 %v3340, %v3352
    %v3354 = vpop.f32.mrf.mxu0
    %3355 = vdwg.mxu0
    %3356 = vmatpush.bf16.msra.mxu0 %v2642
    %3357 = vmatpush.bf16.msra.mxu0 %v2634
    %3358 = vmatpush.bf16.msra.mxu0 %v2626
    %3359 = vmatpush.bf16.msra.mxu0 %v2618
    %3360 = vmatpush.bf16.msra.mxu0 %v2610
    %3361 = vmatpush.bf16.msra.mxu0 %v2602
    %3362 = vmatpush.bf16.msra.mxu0 %v2594
    %3363 = vmatpush.bf16.msra.mxu0 %v2586
    %3364 = vmatmul.bf16.gmra.mxu0 %v592
    %v3365 = vpop.f32.mrf.mxu0
    %v3366 = vadd.f32 %v3353, %v3365
    %v3367 = vpop.f32.mrf.mxu0
    %3368 = vdwg.mxu0
    %3369 = vmatpush.bf16.msra.mxu0 %v2195
    %3370 = vmatpush.bf16.msra.mxu0 %v2187
    %3371 = vmatpush.bf16.msra.mxu0 %v2179
    %3372 = vmatpush.bf16.msra.mxu0 %v2171
    %3373 = vmatpush.bf16.msra.mxu0 %v2163
    %3374 = vmatpush.bf16.msra.mxu0 %v2155
    %3375 = vmatpush.bf16.msra.mxu0 %v2147
    %3376 = vmatpush.bf16.msra.mxu0 %v2139
    %3377 = vmatmul.bf16.gmra.mxu0 %v585
    %v3378 = vpop.f32.mrf.mxu0
    %v3379 = vadd.f32 0.0, %v3378
    %v3380 = vpop.f32.mrf.mxu0
    %3381 = vdwg.mxu0
    %3382 = vmatpush.bf16.msra.mxu0 %v2259
    %3383 = vmatpush.bf16.msra.mxu0 %v2251
    %3384 = vmatpush.bf16.msra.mxu0 %v2243
    %3385 = vmatpush.bf16.msra.mxu0 %v2235
    %3386 = vmatpush.bf16.msra.mxu0 %v2227
    %3387 = vmatpush.bf16.msra.mxu0 %v2219
    %3388 = vmatpush.bf16.msra.mxu0 %v2211
    %3389 = vmatpush.bf16.msra.mxu0 %v2203
    %3390 = vmatmul.bf16.gmra.mxu0 %v586
    %v3391 = vpop.f32.mrf.mxu0
    %v3392 = vadd.f32 %v3379, %v3391
    %v3393 = vpop.f32.mrf.mxu0
    %3394 = vdwg.mxu0
    %3395 = vmatpush.bf16.msra.mxu0 %v2323
    %3396 = vmatpush.bf16.msra.mxu0 %v2315
    %3397 = vmatpush.bf16.msra.mxu0 %v2307
    %3398 = vmatpush.bf16.msra.mxu0 %v2299
    %3399 = vmatpush.bf16.msra.mxu0 %v2291
    %3400 = vmatpush.bf16.msra.mxu0 %v2283
    %3401 = vmatpush.bf16.msra.mxu0 %v2275
    %3402 = vmatpush.bf16.msra.mxu0 %v2267
    %3403 = vmatmul.bf16.gmra.mxu0 %v587
    %v3404 = vpop.f32.mrf.mxu0
    %v3405 = vadd.f32 %v3392, %v3404
    %v3406 = vpop.f32.mrf.mxu0
    %3407 = vdwg.mxu0
    %3408 = vmatpush.bf16.msra.mxu0 %v2387
    %3409 = vmatpush.bf16.msra.mxu0 %v2379
    %3410 = vmatpush.bf16.msra.mxu0 %v2371
    %3411 = vmatpush.bf16.msra.mxu0 %v2363
    %3412 = vmatpush.bf16.msra.mxu0 %v2355
    %3413 = vmatpush.bf16.msra.mxu0 %v2347
    %3414 = vmatpush.bf16.msra.mxu0 %v2339
    %3415 = vmatpush.bf16.msra.mxu0 %v2331
    %3416 = vmatmul.bf16.gmra.mxu0 %v588
    %v3417 = vpop.f32.mrf.mxu0
    %v3418 = vadd.f32 %v3405, %v3417
    %v3419 = vpop.f32.mrf.mxu0
    %3420 = vdwg.mxu0
    %3421 = vmatpush.bf16.msra.mxu0 %v2451
    %3422 = vmatpush.bf16.msra.mxu0 %v2443
    %3423 = vmatpush.bf16.msra.mxu0 %v2435
    %3424 = vmatpush.bf16.msra.mxu0 %v2427
    %3425 = vmatpush.bf16.msra.mxu0 %v2419
    %3426 = vmatpush.bf16.msra.mxu0 %v2411
    %3427 = vmatpush.bf16.msra.mxu0 %v2403
    %3428 = vmatpush.bf16.msra.mxu0 %v2395
    %3429 = vmatmul.bf16.gmra.mxu0 %v589
    %v3430 = vpop.f32.mrf.mxu0
    %v3431 = vadd.f32 %v3418, %v3430
    %v3432 = vpop.f32.mrf.mxu0
    %3433 = vdwg.mxu0
    %3434 = vmatpush.bf16.msra.mxu0 %v2515
    %3435 = vmatpush.bf16.msra.mxu0 %v2507
    %3436 = vmatpush.bf16.msra.mxu0 %v2499
    %3437 = vmatpush.bf16.msra.mxu0 %v2491
    %3438 = vmatpush.bf16.msra.mxu0 %v2483
    %3439 = vmatpush.bf16.msra.mxu0 %v2475
    %3440 = vmatpush.bf16.msra.mxu0 %v2467
    %3441 = vmatpush.bf16.msra.mxu0 %v2459
    %3442 = vmatmul.bf16.gmra.mxu0 %v590
    %v3443 = vpop.f32.mrf.mxu0
    %v3444 = vadd.f32 %v3431, %v3443
    %v3445 = vpop.f32.mrf.mxu0
    %3446 = vdwg.mxu0
    %3447 = vmatpush.bf16.msra.mxu0 %v2579
    %3448 = vmatpush.bf16.msra.mxu0 %v2571
    %3449 = vmatpush.bf16.msra.mxu0 %v2563
    %3450 = vmatpush.bf16.msra.mxu0 %v2555
    %3451 = vmatpush.bf16.msra.mxu0 %v2547
    %3452 = vmatpush.bf16.msra.mxu0 %v2539
    %3453 = vmatpush.bf16.msra.mxu0 %v2531
    %3454 = vmatpush.bf16.msra.mxu0 %v2523
    %3455 = vmatmul.bf16.gmra.mxu0 %v591
    %v3456 = vpop.f32.mrf.mxu0
    %v3457 = vadd.f32 %v3444, %v3456
    %v3458 = vpop.f32.mrf.mxu0
    %3459 = vdwg.mxu0
    %3460 = vmatpush.bf16.msra.mxu0 %v2643
    %3461 = vmatpush.bf16.msra.mxu0 %v2635
    %3462 = vmatpush.bf16.msra.mxu0 %v2627
    %3463 = vmatpush.bf16.msra.mxu0 %v2619
    %3464 = vmatpush.bf16.msra.mxu0 %v2611
    %3465 = vmatpush.bf16.msra.mxu0 %v2603
    %3466 = vmatpush.bf16.msra.mxu0 %v2595
    %3467 = vmatpush.bf16.msra.mxu0 %v2587
    %3468 = vmatmul.bf16.gmra.mxu0 %v592
    %v3469 = vpop.f32.mrf.mxu0
    %v3470 = vadd.f32 %v3457, %v3469
    %v3471 = vpop.f32.mrf.mxu0
    %3472 = vdwg.mxu0
    %3473 = vmatpush.bf16.msra.mxu0 %v2196
    %3474 = vmatpush.bf16.msra.mxu0 %v2188
    %3475 = vmatpush.bf16.msra.mxu0 %v2180
    %3476 = vmatpush.bf16.msra.mxu0 %v2172
    %3477 = vmatpush.bf16.msra.mxu0 %v2164
    %3478 = vmatpush.bf16.msra.mxu0 %v2156
    %3479 = vmatpush.bf16.msra.mxu0 %v2148
    %3480 = vmatpush.bf16.msra.mxu0 %v2140
    %3481 = vmatmul.bf16.gmra.mxu0 %v585
    %v3482 = vpop.f32.mrf.mxu0
    %v3483 = vadd.f32 0.0, %v3482
    %v3484 = vpop.f32.mrf.mxu0
    %3485 = vdwg.mxu0
    %3486 = vmatpush.bf16.msra.mxu0 %v2260
    %3487 = vmatpush.bf16.msra.mxu0 %v2252
    %3488 = vmatpush.bf16.msra.mxu0 %v2244
    %3489 = vmatpush.bf16.msra.mxu0 %v2236
    %3490 = vmatpush.bf16.msra.mxu0 %v2228
    %3491 = vmatpush.bf16.msra.mxu0 %v2220
    %3492 = vmatpush.bf16.msra.mxu0 %v2212
    %3493 = vmatpush.bf16.msra.mxu0 %v2204
    %3494 = vmatmul.bf16.gmra.mxu0 %v586
    %v3495 = vpop.f32.mrf.mxu0
    %v3496 = vadd.f32 %v3483, %v3495
    %v3497 = vpop.f32.mrf.mxu0
    %3498 = vdwg.mxu0
    %3499 = vmatpush.bf16.msra.mxu0 %v2324
    %3500 = vmatpush.bf16.msra.mxu0 %v2316
    %3501 = vmatpush.bf16.msra.mxu0 %v2308
    %3502 = vmatpush.bf16.msra.mxu0 %v2300
    %3503 = vmatpush.bf16.msra.mxu0 %v2292
    %3504 = vmatpush.bf16.msra.mxu0 %v2284
    %3505 = vmatpush.bf16.msra.mxu0 %v2276
    %3506 = vmatpush.bf16.msra.mxu0 %v2268
    %3507 = vmatmul.bf16.gmra.mxu0 %v587
    %v3508 = vpop.f32.mrf.mxu0
    %v3509 = vadd.f32 %v3496, %v3508
    %v3510 = vpop.f32.mrf.mxu0
    %3511 = vdwg.mxu0
    %3512 = vmatpush.bf16.msra.mxu0 %v2388
    %3513 = vmatpush.bf16.msra.mxu0 %v2380
    %3514 = vmatpush.bf16.msra.mxu0 %v2372
    %3515 = vmatpush.bf16.msra.mxu0 %v2364
    %3516 = vmatpush.bf16.msra.mxu0 %v2356
    %3517 = vmatpush.bf16.msra.mxu0 %v2348
    %3518 = vmatpush.bf16.msra.mxu0 %v2340
    %3519 = vmatpush.bf16.msra.mxu0 %v2332
    %3520 = vmatmul.bf16.gmra.mxu0 %v588
    %v3521 = vpop.f32.mrf.mxu0
    %v3522 = vadd.f32 %v3509, %v3521
    %v3523 = vpop.f32.mrf.mxu0
    %3524 = vdwg.mxu0
    %3525 = vmatpush.bf16.msra.mxu0 %v2452
    %3526 = vmatpush.bf16.msra.mxu0 %v2444
    %3527 = vmatpush.bf16.msra.mxu0 %v2436
    %3528 = vmatpush.bf16.msra.mxu0 %v2428
    %3529 = vmatpush.bf16.msra.mxu0 %v2420
    %3530 = vmatpush.bf16.msra.mxu0 %v2412
    %3531 = vmatpush.bf16.msra.mxu0 %v2404
    %3532 = vmatpush.bf16.msra.mxu0 %v2396
    %3533 = vmatmul.bf16.gmra.mxu0 %v589
    %v3534 = vpop.f32.mrf.mxu0
    %v3535 = vadd.f32 %v3522, %v3534
    %v3536 = vpop.f32.mrf.mxu0
    %3537 = vdwg.mxu0
    %3538 = vmatpush.bf16.msra.mxu0 %v2516
    %3539 = vmatpush.bf16.msra.mxu0 %v2508
    %3540 = vmatpush.bf16.msra.mxu0 %v2500
    %3541 = vmatpush.bf16.msra.mxu0 %v2492
    %3542 = vmatpush.bf16.msra.mxu0 %v2484
    %3543 = vmatpush.bf16.msra.mxu0 %v2476
    %3544 = vmatpush.bf16.msra.mxu0 %v2468
    %3545 = vmatpush.bf16.msra.mxu0 %v2460
    %3546 = vmatmul.bf16.gmra.mxu0 %v590
    %v3547 = vpop.f32.mrf.mxu0
    %v3548 = vadd.f32 %v3535, %v3547
    %v3549 = vpop.f32.mrf.mxu0
    %3550 = vdwg.mxu0
    %3551 = vmatpush.bf16.msra.mxu0 %v2580
    %3552 = vmatpush.bf16.msra.mxu0 %v2572
    %3553 = vmatpush.bf16.msra.mxu0 %v2564
    %3554 = vmatpush.bf16.msra.mxu0 %v2556
    %3555 = vmatpush.bf16.msra.mxu0 %v2548
    %3556 = vmatpush.bf16.msra.mxu0 %v2540
    %3557 = vmatpush.bf16.msra.mxu0 %v2532
    %3558 = vmatpush.bf16.msra.mxu0 %v2524
    %3559 = vmatmul.bf16.gmra.mxu0 %v591
    %v3560 = vpop.f32.mrf.mxu0
    %v3561 = vadd.f32 %v3548, %v3560
    %v3562 = vpop.f32.mrf.mxu0
    %3563 = vdwg.mxu0
    %3564 = vmatpush.bf16.msra.mxu0 %v2644
    %3565 = vmatpush.bf16.msra.mxu0 %v2636
    %3566 = vmatpush.bf16.msra.mxu0 %v2628
    %3567 = vmatpush.bf16.msra.mxu0 %v2620
    %3568 = vmatpush.bf16.msra.mxu0 %v2612
    %3569 = vmatpush.bf16.msra.mxu0 %v2604
    %3570 = vmatpush.bf16.msra.mxu0 %v2596
    %3571 = vmatpush.bf16.msra.mxu0 %v2588
    %3572 = vmatmul.bf16.gmra.mxu0 %v592
    %v3573 = vpop.f32.mrf.mxu0
    %v3574 = vadd.f32 %v3561, %v3573
    %v3575 = vpop.f32.mrf.mxu0
    %3576 = vdwg.mxu0
    %3577 = vmatpush.bf16.msra.mxu0 %v2197
    %3578 = vmatpush.bf16.msra.mxu0 %v2189
    %3579 = vmatpush.bf16.msra.mxu0 %v2181
    %3580 = vmatpush.bf16.msra.mxu0 %v2173
    %3581 = vmatpush.bf16.msra.mxu0 %v2165
    %3582 = vmatpush.bf16.msra.mxu0 %v2157
    %3583 = vmatpush.bf16.msra.mxu0 %v2149
    %3584 = vmatpush.bf16.msra.mxu0 %v2141
    %3585 = vmatmul.bf16.gmra.mxu0 %v585
    %v3586 = vpop.f32.mrf.mxu0
    %v3587 = vadd.f32 0.0, %v3586
    %v3588 = vpop.f32.mrf.mxu0
    %3589 = vdwg.mxu0
    %3590 = vmatpush.bf16.msra.mxu0 %v2261
    %3591 = vmatpush.bf16.msra.mxu0 %v2253
    %3592 = vmatpush.bf16.msra.mxu0 %v2245
    %3593 = vmatpush.bf16.msra.mxu0 %v2237
    %3594 = vmatpush.bf16.msra.mxu0 %v2229
    %3595 = vmatpush.bf16.msra.mxu0 %v2221
    %3596 = vmatpush.bf16.msra.mxu0 %v2213
    %3597 = vmatpush.bf16.msra.mxu0 %v2205
    %3598 = vmatmul.bf16.gmra.mxu0 %v586
    %v3599 = vpop.f32.mrf.mxu0
    %v3600 = vadd.f32 %v3587, %v3599
    %v3601 = vpop.f32.mrf.mxu0
    %3602 = vdwg.mxu0
    %3603 = vmatpush.bf16.msra.mxu0 %v2325
    %3604 = vmatpush.bf16.msra.mxu0 %v2317
    %3605 = vmatpush.bf16.msra.mxu0 %v2309
    %3606 = vmatpush.bf16.msra.mxu0 %v2301
    %3607 = vmatpush.bf16.msra.mxu0 %v2293
    %3608 = vmatpush.bf16.msra.mxu0 %v2285
    %3609 = vmatpush.bf16.msra.mxu0 %v2277
    %3610 = vmatpush.bf16.msra.mxu0 %v2269
    %3611 = vmatmul.bf16.gmra.mxu0 %v587
    %v3612 = vpop.f32.mrf.mxu0
    %v3613 = vadd.f32 %v3600, %v3612
    %v3614 = vpop.f32.mrf.mxu0
    %3615 = vdwg.mxu0
    %3616 = vmatpush.bf16.msra.mxu0 %v2389
    %3617 = vmatpush.bf16.msra.mxu0 %v2381
    %3618 = vmatpush.bf16.msra.mxu0 %v2373
    %3619 = vmatpush.bf16.msra.mxu0 %v2365
    %3620 = vmatpush.bf16.msra.mxu0 %v2357
    %3621 = vmatpush.bf16.msra.mxu0 %v2349
    %3622 = vmatpush.bf16.msra.mxu0 %v2341
    %3623 = vmatpush.bf16.msra.mxu0 %v2333
    %3624 = vmatmul.bf16.gmra.mxu0 %v588
    %v3625 = vpop.f32.mrf.mxu0
    %v3626 = vadd.f32 %v3613, %v3625
    %v3627 = vpop.f32.mrf.mxu0
    %3628 = vdwg.mxu0
    %3629 = vmatpush.bf16.msra.mxu0 %v2453
    %3630 = vmatpush.bf16.msra.mxu0 %v2445
    %3631 = vmatpush.bf16.msra.mxu0 %v2437
    %3632 = vmatpush.bf16.msra.mxu0 %v2429
    %3633 = vmatpush.bf16.msra.mxu0 %v2421
    %3634 = vmatpush.bf16.msra.mxu0 %v2413
    %3635 = vmatpush.bf16.msra.mxu0 %v2405
    %3636 = vmatpush.bf16.msra.mxu0 %v2397
    %3637 = vmatmul.bf16.gmra.mxu0 %v589
    %v3638 = vpop.f32.mrf.mxu0
    %v3639 = vadd.f32 %v3626, %v3638
    %v3640 = vpop.f32.mrf.mxu0
    %3641 = vdwg.mxu0
    %3642 = vmatpush.bf16.msra.mxu0 %v2517
    %3643 = vmatpush.bf16.msra.mxu0 %v2509
    %3644 = vmatpush.bf16.msra.mxu0 %v2501
    %3645 = vmatpush.bf16.msra.mxu0 %v2493
    %3646 = vmatpush.bf16.msra.mxu0 %v2485
    %3647 = vmatpush.bf16.msra.mxu0 %v2477
    %3648 = vmatpush.bf16.msra.mxu0 %v2469
    %3649 = vmatpush.bf16.msra.mxu0 %v2461
    %3650 = vmatmul.bf16.gmra.mxu0 %v590
    %v3651 = vpop.f32.mrf.mxu0
    %v3652 = vadd.f32 %v3639, %v3651
    %v3653 = vpop.f32.mrf.mxu0
    %3654 = vdwg.mxu0
    %3655 = vmatpush.bf16.msra.mxu0 %v2581
    %3656 = vmatpush.bf16.msra.mxu0 %v2573
    %3657 = vmatpush.bf16.msra.mxu0 %v2565
    %3658 = vmatpush.bf16.msra.mxu0 %v2557
    %3659 = vmatpush.bf16.msra.mxu0 %v2549
    %3660 = vmatpush.bf16.msra.mxu0 %v2541
    %3661 = vmatpush.bf16.msra.mxu0 %v2533
    %3662 = vmatpush.bf16.msra.mxu0 %v2525
    %3663 = vmatmul.bf16.gmra.mxu0 %v591
    %v3664 = vpop.f32.mrf.mxu0
    %v3665 = vadd.f32 %v3652, %v3664
    %v3666 = vpop.f32.mrf.mxu0
    %3667 = vdwg.mxu0
    %3668 = vmatpush.bf16.msra.mxu0 %v2645
    %3669 = vmatpush.bf16.msra.mxu0 %v2637
    %3670 = vmatpush.bf16.msra.mxu0 %v2629
    %3671 = vmatpush.bf16.msra.mxu0 %v2621
    %3672 = vmatpush.bf16.msra.mxu0 %v2613
    %3673 = vmatpush.bf16.msra.mxu0 %v2605
    %3674 = vmatpush.bf16.msra.mxu0 %v2597
    %3675 = vmatpush.bf16.msra.mxu0 %v2589
    %3676 = vmatmul.bf16.gmra.mxu0 %v592
    %v3677 = vpop.f32.mrf.mxu0
    %v3678 = vadd.f32 %v3665, %v3677
    %v3679 = vpop.f32.mrf.mxu0
    %3680 = vdwg.mxu0
    %3681 = vmatpush.bf16.msra.mxu0 %v2198
    %3682 = vmatpush.bf16.msra.mxu0 %v2190
    %3683 = vmatpush.bf16.msra.mxu0 %v2182
    %3684 = vmatpush.bf16.msra.mxu0 %v2174
    %3685 = vmatpush.bf16.msra.mxu0 %v2166
    %3686 = vmatpush.bf16.msra.mxu0 %v2158
    %3687 = vmatpush.bf16.msra.mxu0 %v2150
    %3688 = vmatpush.bf16.msra.mxu0 %v2142
    %3689 = vmatmul.bf16.gmra.mxu0 %v585
    %v3690 = vpop.f32.mrf.mxu0
    %v3691 = vadd.f32 0.0, %v3690
    %v3692 = vpop.f32.mrf.mxu0
    %3693 = vdwg.mxu0
    %3694 = vmatpush.bf16.msra.mxu0 %v2262
    %3695 = vmatpush.bf16.msra.mxu0 %v2254
    %3696 = vmatpush.bf16.msra.mxu0 %v2246
    %3697 = vmatpush.bf16.msra.mxu0 %v2238
    %3698 = vmatpush.bf16.msra.mxu0 %v2230
    %3699 = vmatpush.bf16.msra.mxu0 %v2222
    %3700 = vmatpush.bf16.msra.mxu0 %v2214
    %3701 = vmatpush.bf16.msra.mxu0 %v2206
    %3702 = vmatmul.bf16.gmra.mxu0 %v586
    %v3703 = vpop.f32.mrf.mxu0
    %v3704 = vadd.f32 %v3691, %v3703
    %v3705 = vpop.f32.mrf.mxu0
    %3706 = vdwg.mxu0
    %3707 = vmatpush.bf16.msra.mxu0 %v2326
    %3708 = vmatpush.bf16.msra.mxu0 %v2318
    %3709 = vmatpush.bf16.msra.mxu0 %v2310
    %3710 = vmatpush.bf16.msra.mxu0 %v2302
    %3711 = vmatpush.bf16.msra.mxu0 %v2294
    %3712 = vmatpush.bf16.msra.mxu0 %v2286
    %3713 = vmatpush.bf16.msra.mxu0 %v2278
    %3714 = vmatpush.bf16.msra.mxu0 %v2270
    %3715 = vmatmul.bf16.gmra.mxu0 %v587
    %v3716 = vpop.f32.mrf.mxu0
    %v3717 = vadd.f32 %v3704, %v3716
    %v3718 = vpop.f32.mrf.mxu0
    %3719 = vdwg.mxu0
    %3720 = vmatpush.bf16.msra.mxu0 %v2390
    %3721 = vmatpush.bf16.msra.mxu0 %v2382
    %3722 = vmatpush.bf16.msra.mxu0 %v2374
    %3723 = vmatpush.bf16.msra.mxu0 %v2366
    %3724 = vmatpush.bf16.msra.mxu0 %v2358
    %3725 = vmatpush.bf16.msra.mxu0 %v2350
    %3726 = vmatpush.bf16.msra.mxu0 %v2342
    %3727 = vmatpush.bf16.msra.mxu0 %v2334
    %3728 = vmatmul.bf16.gmra.mxu0 %v588
    %v3729 = vpop.f32.mrf.mxu0
    %v3730 = vadd.f32 %v3717, %v3729
    %v3731 = vpop.f32.mrf.mxu0
    %3732 = vdwg.mxu0
    %3733 = vmatpush.bf16.msra.mxu0 %v2454
    %3734 = vmatpush.bf16.msra.mxu0 %v2446
    %3735 = vmatpush.bf16.msra.mxu0 %v2438
    %3736 = vmatpush.bf16.msra.mxu0 %v2430
    %3737 = vmatpush.bf16.msra.mxu0 %v2422
    %3738 = vmatpush.bf16.msra.mxu0 %v2414
    %3739 = vmatpush.bf16.msra.mxu0 %v2406
    %3740 = vmatpush.bf16.msra.mxu0 %v2398
    %3741 = vmatmul.bf16.gmra.mxu0 %v589
    %v3742 = vpop.f32.mrf.mxu0
    %v3743 = vadd.f32 %v3730, %v3742
    %v3744 = vpop.f32.mrf.mxu0
    %3745 = vdwg.mxu0
    %3746 = vmatpush.bf16.msra.mxu0 %v2518
    %3747 = vmatpush.bf16.msra.mxu0 %v2510
    %3748 = vmatpush.bf16.msra.mxu0 %v2502
    %3749 = vmatpush.bf16.msra.mxu0 %v2494
    %3750 = vmatpush.bf16.msra.mxu0 %v2486
    %3751 = vmatpush.bf16.msra.mxu0 %v2478
    %3752 = vmatpush.bf16.msra.mxu0 %v2470
    %3753 = vmatpush.bf16.msra.mxu0 %v2462
    %3754 = vmatmul.bf16.gmra.mxu0 %v590
    %v3755 = vpop.f32.mrf.mxu0
    %v3756 = vadd.f32 %v3743, %v3755
    %v3757 = vpop.f32.mrf.mxu0
    %3758 = vdwg.mxu0
    %3759 = vmatpush.bf16.msra.mxu0 %v2582
    %3760 = vmatpush.bf16.msra.mxu0 %v2574
    %3761 = vmatpush.bf16.msra.mxu0 %v2566
    %3762 = vmatpush.bf16.msra.mxu0 %v2558
    %3763 = vmatpush.bf16.msra.mxu0 %v2550
    %3764 = vmatpush.bf16.msra.mxu0 %v2542
    %3765 = vmatpush.bf16.msra.mxu0 %v2534
    %3766 = vmatpush.bf16.msra.mxu0 %v2526
    %3767 = vmatmul.bf16.gmra.mxu0 %v591
    %v3768 = vpop.f32.mrf.mxu0
    %v3769 = vadd.f32 %v3756, %v3768
    %v3770 = vpop.f32.mrf.mxu0
    %3771 = vdwg.mxu0
    %3772 = vmatpush.bf16.msra.mxu0 %v2646
    %3773 = vmatpush.bf16.msra.mxu0 %v2638
    %3774 = vmatpush.bf16.msra.mxu0 %v2630
    %3775 = vmatpush.bf16.msra.mxu0 %v2622
    %3776 = vmatpush.bf16.msra.mxu0 %v2614
    %3777 = vmatpush.bf16.msra.mxu0 %v2606
    %3778 = vmatpush.bf16.msra.mxu0 %v2598
    %3779 = vmatpush.bf16.msra.mxu0 %v2590
    %3780 = vmatmul.bf16.gmra.mxu0 %v592
    %v3781 = vpop.f32.mrf.mxu0
    %v3782 = vadd.f32 %v3769, %v3781
    %v3783 = vpop.f32.mrf.mxu0
    %3784 = vdwg.mxu0
    %3785 = vmatpush.bf16.msra.mxu0 %v2199
    %3786 = vmatpush.bf16.msra.mxu0 %v2191
    %3787 = vmatpush.bf16.msra.mxu0 %v2183
    %3788 = vmatpush.bf16.msra.mxu0 %v2175
    %3789 = vmatpush.bf16.msra.mxu0 %v2167
    %3790 = vmatpush.bf16.msra.mxu0 %v2159
    %3791 = vmatpush.bf16.msra.mxu0 %v2151
    %3792 = vmatpush.bf16.msra.mxu0 %v2143
    %3793 = vmatmul.bf16.gmra.mxu0 %v585
    %v3794 = vpop.f32.mrf.mxu0
    %v3795 = vadd.f32 0.0, %v3794
    %v3796 = vpop.f32.mrf.mxu0
    %3797 = vdwg.mxu0
    %3798 = vmatpush.bf16.msra.mxu0 %v2263
    %3799 = vmatpush.bf16.msra.mxu0 %v2255
    %3800 = vmatpush.bf16.msra.mxu0 %v2247
    %3801 = vmatpush.bf16.msra.mxu0 %v2239
    %3802 = vmatpush.bf16.msra.mxu0 %v2231
    %3803 = vmatpush.bf16.msra.mxu0 %v2223
    %3804 = vmatpush.bf16.msra.mxu0 %v2215
    %3805 = vmatpush.bf16.msra.mxu0 %v2207
    %3806 = vmatmul.bf16.gmra.mxu0 %v586
    %v3807 = vpop.f32.mrf.mxu0
    %v3808 = vadd.f32 %v3795, %v3807
    %v3809 = vpop.f32.mrf.mxu0
    %3810 = vdwg.mxu0
    %3811 = vmatpush.bf16.msra.mxu0 %v2327
    %3812 = vmatpush.bf16.msra.mxu0 %v2319
    %3813 = vmatpush.bf16.msra.mxu0 %v2311
    %3814 = vmatpush.bf16.msra.mxu0 %v2303
    %3815 = vmatpush.bf16.msra.mxu0 %v2295
    %3816 = vmatpush.bf16.msra.mxu0 %v2287
    %3817 = vmatpush.bf16.msra.mxu0 %v2279
    %3818 = vmatpush.bf16.msra.mxu0 %v2271
    %3819 = vmatmul.bf16.gmra.mxu0 %v587
    %v3820 = vpop.f32.mrf.mxu0
    %v3821 = vadd.f32 %v3808, %v3820
    %v3822 = vpop.f32.mrf.mxu0
    %3823 = vdwg.mxu0
    %3824 = vmatpush.bf16.msra.mxu0 %v2391
    %3825 = vmatpush.bf16.msra.mxu0 %v2383
    %3826 = vmatpush.bf16.msra.mxu0 %v2375
    %3827 = vmatpush.bf16.msra.mxu0 %v2367
    %3828 = vmatpush.bf16.msra.mxu0 %v2359
    %3829 = vmatpush.bf16.msra.mxu0 %v2351
    %3830 = vmatpush.bf16.msra.mxu0 %v2343
    %3831 = vmatpush.bf16.msra.mxu0 %v2335
    %3832 = vmatmul.bf16.gmra.mxu0 %v588
    %v3833 = vpop.f32.mrf.mxu0
    %v3834 = vadd.f32 %v3821, %v3833
    %v3835 = vpop.f32.mrf.mxu0
    %3836 = vdwg.mxu0
    %3837 = vmatpush.bf16.msra.mxu0 %v2455
    %3838 = vmatpush.bf16.msra.mxu0 %v2447
    %3839 = vmatpush.bf16.msra.mxu0 %v2439
    %3840 = vmatpush.bf16.msra.mxu0 %v2431
    %3841 = vmatpush.bf16.msra.mxu0 %v2423
    %3842 = vmatpush.bf16.msra.mxu0 %v2415
    %3843 = vmatpush.bf16.msra.mxu0 %v2407
    %3844 = vmatpush.bf16.msra.mxu0 %v2399
    %3845 = vmatmul.bf16.gmra.mxu0 %v589
    %v3846 = vpop.f32.mrf.mxu0
    %v3847 = vadd.f32 %v3834, %v3846
    %v3848 = vpop.f32.mrf.mxu0
    %3849 = vdwg.mxu0
    %3850 = vmatpush.bf16.msra.mxu0 %v2519
    %3851 = vmatpush.bf16.msra.mxu0 %v2511
    %3852 = vmatpush.bf16.msra.mxu0 %v2503
    %3853 = vmatpush.bf16.msra.mxu0 %v2495
    %3854 = vmatpush.bf16.msra.mxu0 %v2487
    %3855 = vmatpush.bf16.msra.mxu0 %v2479
    %3856 = vmatpush.bf16.msra.mxu0 %v2471
    %3857 = vmatpush.bf16.msra.mxu0 %v2463
    %3858 = vmatmul.bf16.gmra.mxu0 %v590
    %v3859 = vpop.f32.mrf.mxu0
    %v3860 = vadd.f32 %v3847, %v3859
    %v3861 = vpop.f32.mrf.mxu0
    %3862 = vdwg.mxu0
    %3863 = vmatpush.bf16.msra.mxu0 %v2583
    %3864 = vmatpush.bf16.msra.mxu0 %v2575
    %3865 = vmatpush.bf16.msra.mxu0 %v2567
    %3866 = vmatpush.bf16.msra.mxu0 %v2559
    %3867 = vmatpush.bf16.msra.mxu0 %v2551
    %3868 = vmatpush.bf16.msra.mxu0 %v2543
    %3869 = vmatpush.bf16.msra.mxu0 %v2535
    %3870 = vmatpush.bf16.msra.mxu0 %v2527
    %3871 = vmatmul.bf16.gmra.mxu0 %v591
    %v3872 = vpop.f32.mrf.mxu0
    %v3873 = vadd.f32 %v3860, %v3872
    %v3874 = vpop.f32.mrf.mxu0
    %3875 = vdwg.mxu0
    %3876 = vmatpush.bf16.msra.mxu0 %v2647
    %3877 = vmatpush.bf16.msra.mxu0 %v2639
    %3878 = vmatpush.bf16.msra.mxu0 %v2631
    %3879 = vmatpush.bf16.msra.mxu0 %v2623
    %3880 = vmatpush.bf16.msra.mxu0 %v2615
    %3881 = vmatpush.bf16.msra.mxu0 %v2607
    %3882 = vmatpush.bf16.msra.mxu0 %v2599
    %3883 = vmatpush.bf16.msra.mxu0 %v2591
    %3884 = vmatmul.bf16.gmra.mxu0 %v592
    %v3885 = vpop.f32.mrf.mxu0
    %v3886 = vadd.f32 %v3873, %v3885
    %v3887 = vpop.f32.mrf.mxu0
    %3888 = vdwg.mxu0
    %3889 = vmatpush.bf16.msra.mxu0 %v2200
    %3890 = vmatpush.bf16.msra.mxu0 %v2192
    %3891 = vmatpush.bf16.msra.mxu0 %v2184
    %3892 = vmatpush.bf16.msra.mxu0 %v2176
    %3893 = vmatpush.bf16.msra.mxu0 %v2168
    %3894 = vmatpush.bf16.msra.mxu0 %v2160
    %3895 = vmatpush.bf16.msra.mxu0 %v2152
    %3896 = vmatpush.bf16.msra.mxu0 %v2144
    %3897 = vmatmul.bf16.gmra.mxu0 %v585
    %v3898 = vpop.f32.mrf.mxu0
    %v3899 = vadd.f32 0.0, %v3898
    %v3900 = vpop.f32.mrf.mxu0
    %3901 = vdwg.mxu0
    %3902 = vmatpush.bf16.msra.mxu0 %v2264
    %3903 = vmatpush.bf16.msra.mxu0 %v2256
    %3904 = vmatpush.bf16.msra.mxu0 %v2248
    %3905 = vmatpush.bf16.msra.mxu0 %v2240
    %3906 = vmatpush.bf16.msra.mxu0 %v2232
    %3907 = vmatpush.bf16.msra.mxu0 %v2224
    %3908 = vmatpush.bf16.msra.mxu0 %v2216
    %3909 = vmatpush.bf16.msra.mxu0 %v2208
    %3910 = vmatmul.bf16.gmra.mxu0 %v586
    %v3911 = vpop.f32.mrf.mxu0
    %v3912 = vadd.f32 %v3899, %v3911
    %v3913 = vpop.f32.mrf.mxu0
    %3914 = vdwg.mxu0
    %3915 = vmatpush.bf16.msra.mxu0 %v2328
    %3916 = vmatpush.bf16.msra.mxu0 %v2320
    %3917 = vmatpush.bf16.msra.mxu0 %v2312
    %3918 = vmatpush.bf16.msra.mxu0 %v2304
    %3919 = vmatpush.bf16.msra.mxu0 %v2296
    %3920 = vmatpush.bf16.msra.mxu0 %v2288
    %3921 = vmatpush.bf16.msra.mxu0 %v2280
    %3922 = vmatpush.bf16.msra.mxu0 %v2272
    %3923 = vmatmul.bf16.gmra.mxu0 %v587
    %v3924 = vpop.f32.mrf.mxu0
    %v3925 = vadd.f32 %v3912, %v3924
    %v3926 = vpop.f32.mrf.mxu0
    %3927 = vdwg.mxu0
    %3928 = vmatpush.bf16.msra.mxu0 %v2392
    %3929 = vmatpush.bf16.msra.mxu0 %v2384
    %3930 = vmatpush.bf16.msra.mxu0 %v2376
    %3931 = vmatpush.bf16.msra.mxu0 %v2368
    %3932 = vmatpush.bf16.msra.mxu0 %v2360
    %3933 = vmatpush.bf16.msra.mxu0 %v2352
    %3934 = vmatpush.bf16.msra.mxu0 %v2344
    %3935 = vmatpush.bf16.msra.mxu0 %v2336
    %3936 = vmatmul.bf16.gmra.mxu0 %v588
    %v3937 = vpop.f32.mrf.mxu0
    %v3938 = vadd.f32 %v3925, %v3937
    %v3939 = vpop.f32.mrf.mxu0
    %3940 = vdwg.mxu0
    %3941 = vmatpush.bf16.msra.mxu0 %v2456
    %3942 = vmatpush.bf16.msra.mxu0 %v2448
    %3943 = vmatpush.bf16.msra.mxu0 %v2440
    %3944 = vmatpush.bf16.msra.mxu0 %v2432
    %3945 = vmatpush.bf16.msra.mxu0 %v2424
    %3946 = vmatpush.bf16.msra.mxu0 %v2416
    %3947 = vmatpush.bf16.msra.mxu0 %v2408
    %3948 = vmatpush.bf16.msra.mxu0 %v2400
    %3949 = vmatmul.bf16.gmra.mxu0 %v589
    %v3950 = vpop.f32.mrf.mxu0
    %v3951 = vadd.f32 %v3938, %v3950
    %v3952 = vpop.f32.mrf.mxu0
    %3953 = vdwg.mxu0
    %3954 = vmatpush.bf16.msra.mxu0 %v2520
    %3955 = vmatpush.bf16.msra.mxu0 %v2512
    %3956 = vmatpush.bf16.msra.mxu0 %v2504
    %3957 = vmatpush.bf16.msra.mxu0 %v2496
    %3958 = vmatpush.bf16.msra.mxu0 %v2488
    %3959 = vmatpush.bf16.msra.mxu0 %v2480
    %3960 = vmatpush.bf16.msra.mxu0 %v2472
    %3961 = vmatpush.bf16.msra.mxu0 %v2464
    %3962 = vmatmul.bf16.gmra.mxu0 %v590
    %v3963 = vpop.f32.mrf.mxu0
    %v3964 = vadd.f32 %v3951, %v3963
    %v3965 = vpop.f32.mrf.mxu0
    %3966 = vdwg.mxu0
    %3967 = vmatpush.bf16.msra.mxu0 %v2584
    %3968 = vmatpush.bf16.msra.mxu0 %v2576
    %3969 = vmatpush.bf16.msra.mxu0 %v2568
    %3970 = vmatpush.bf16.msra.mxu0 %v2560
    %3971 = vmatpush.bf16.msra.mxu0 %v2552
    %3972 = vmatpush.bf16.msra.mxu0 %v2544
    %3973 = vmatpush.bf16.msra.mxu0 %v2536
    %3974 = vmatpush.bf16.msra.mxu0 %v2528
    %3975 = vmatmul.bf16.gmra.mxu0 %v591
    %v3976 = vpop.f32.mrf.mxu0
    %v3977 = vadd.f32 %v3964, %v3976
    %v3978 = vpop.f32.mrf.mxu0
    %3979 = vdwg.mxu0
    %3980 = vmatpush.bf16.msra.mxu0 %v2648
    %3981 = vmatpush.bf16.msra.mxu0 %v2640
    %3982 = vmatpush.bf16.msra.mxu0 %v2632
    %3983 = vmatpush.bf16.msra.mxu0 %v2624
    %3984 = vmatpush.bf16.msra.mxu0 %v2616
    %3985 = vmatpush.bf16.msra.mxu0 %v2608
    %3986 = vmatpush.bf16.msra.mxu0 %v2600
    %3987 = vmatpush.bf16.msra.mxu0 %v2592
    %3988 = vmatmul.bf16.gmra.mxu0 %v592
    %v3989 = vpop.f32.mrf.mxu0
    %v3990 = vadd.f32 %v3977, %v3989
    %v3991 = vpop.f32.mrf.mxu0
    %3992 = vdwg.mxu0
    %v3993 = vrot.slane %v3262, 4
    %v3994 = vadd.f32 %v3262, %v3993
    %v3995 = vrot.slane %v3994, 2
    %v3996 = vadd.f32 %v3994, %v3995
    %v3997 = vrot.slane %v3996, 1
    %v3998 = vadd.f32 %v3996, %v3997
    %v3999 = vrot.slane %v3366, 4
    %v4000 = vadd.f32 %v3366, %v3999
    %v4001 = vrot.slane %v4000, 2
    %v4002 = vadd.f32 %v4000, %v4001
    %v4003 = vrot.slane %v4002, 1
    %v4004 = vadd.f32 %v4002, %v4003
    %v4005 = vrot.slane %v3470, 4
    %v4006 = vadd.f32 %v3470, %v4005
    %v4007 = vrot.slane %v4006, 2
    %v4008 = vadd.f32 %v4006, %v4007
    %v4009 = vrot.slane %v4008, 1
    %v4010 = vadd.f32 %v4008, %v4009
    %v4011 = vrot.slane %v3574, 4
    %v4012 = vadd.f32 %v3574, %v4011
    %v4013 = vrot.slane %v4012, 2
    %v4014 = vadd.f32 %v4012, %v4013
    %v4015 = vrot.slane %v4014, 1
    %v4016 = vadd.f32 %v4014, %v4015
    %v4017 = vrot.slane %v3678, 4
    %v4018 = vadd.f32 %v3678, %v4017
    %v4019 = vrot.slane %v4018, 2
    %v4020 = vadd.f32 %v4018, %v4019
    %v4021 = vrot.slane %v4020, 1
    %v4022 = vadd.f32 %v4020, %v4021
    %v4023 = vrot.slane %v3782, 4
    %v4024 = vadd.f32 %v3782, %v4023
    %v4025 = vrot.slane %v4024, 2
    %v4026 = vadd.f32 %v4024, %v4025
    %v4027 = vrot.slane %v4026, 1
    %v4028 = vadd.f32 %v4026, %v4027
    %v4029 = vrot.slane %v3886, 4
    %v4030 = vadd.f32 %v3886, %v4029
    %v4031 = vrot.slane %v4030, 2
    %v4032 = vadd.f32 %v4030, %v4031
    %v4033 = vrot.slane %v4032, 1
    %v4034 = vadd.f32 %v4032, %v4033
    %v4035 = vrot.slane %v3990, 4
    %v4036 = vadd.f32 %v3990, %v4035
    %v4037 = vrot.slane %v4036, 2
    %v4038 = vadd.f32 %v4036, %v4037
    %v4039 = vrot.slane %v4038, 1
    %v4040 = vadd.f32 %v4038, %v4039
    %v4041 = vrcp.pop 8.0
    %v4042 = vmul.f32 8.0, %v4041
    %v4043 = vsub.f32 1.0, %v4042
    %v4044 = vmul.f32 %v4041, %v4043
    %v4045 = vadd.f32 %v4041, %v4044
    %vm4046 = vweird.f32 %v4041
    %v4047 = vsel %vm4046, %v4041, %v4045
    %v4048 = vmul.f32 %v3998, %v4047
    %v4049 = vmul.f32 %v4004, %v4047
    %v4050 = vmul.f32 %v4010, %v4047
    %v4051 = vmul.f32 %v4016, %v4047
    %v4052 = vmul.f32 %v4022, %v4047
    %v4053 = vmul.f32 %v4028, %v4047
    %v4054 = vmul.f32 %v4034, %v4047
    %v4055 = vmul.f32 %v4040, %v4047
    %v4056 = vsub.f32 %v3262, %v4048
    %v4057 = vsub.f32 %v3366, %v4049
    %v4058 = vsub.f32 %v3470, %v4050
    %v4059 = vsub.f32 %v3574, %v4051
    %v4060 = vsub.f32 %v3678, %v4052
    %v4061 = vsub.f32 %v3782, %v4053
    %v4062 = vsub.f32 %v3886, %v4054
    %v4063 = vsub.f32 %v3990, %v4055
    %v4064 = vmul.f32 %v4056, %v4056
    %v4065 = vmul.f32 %v4057, %v4057
    %v4066 = vmul.f32 %v4058, %v4058
    %v4067 = vmul.f32 %v4059, %v4059
    %v4068 = vmul.f32 %v4060, %v4060
    %v4069 = vmul.f32 %v4061, %v4061
    %v4070 = vmul.f32 %v4062, %v4062
    %v4071 = vmul.f32 %v4063, %v4063
    %v4072 = vrot.slane %v4064, 4
    %v4073 = vadd.f32 %v4064, %v4072
    %v4074 = vrot.slane %v4073, 2
    %v4075 = vadd.f32 %v4073, %v4074
    %v4076 = vrot.slane %v4075, 1
    %v4077 = vadd.f32 %v4075, %v4076
    %v4078 = vrot.slane %v4065, 4
    %v4079 = vadd.f32 %v4065, %v4078
    %v4080 = vrot.slane %v4079, 2
    %v4081 = vadd.f32 %v4079, %v4080
    %v4082 = vrot.slane %v4081, 1
    %v4083 = vadd.f32 %v4081, %v4082
    %v4084 = vrot.slane %v4066, 4
    %v4085 = vadd.f32 %v4066, %v4084
    %v4086 = vrot.slane %v4085, 2
    %v4087 = vadd.f32 %v4085, %v4086
    %v4088 = vrot.slane %v4087, 1
    %v4089 = vadd.f32 %v4087, %v4088
    %v4090 = vrot.slane %v4067, 4
    %v4091 = vadd.f32 %v4067, %v4090
    %v4092 = vrot.slane %v4091, 2
    %v4093 = vadd.f32 %v4091, %v4092
    %v4094 = vrot.slane %v4093, 1
    %v4095 = vadd.f32 %v4093, %v4094
    %v4096 = vrot.slane %v4068, 4
    %v4097 = vadd.f32 %v4068, %v4096
    %v4098 = vrot.slane %v4097, 2
    %v4099 = vadd.f32 %v4097, %v4098
    %v4100 = vrot.slane %v4099, 1
    %v4101 = vadd.f32 %v4099, %v4100
    %v4102 = vrot.slane %v4069, 4
    %v4103 = vadd.f32 %v4069, %v4102
    %v4104 = vrot.slane %v4103, 2
    %v4105 = vadd.f32 %v4103, %v4104
    %v4106 = vrot.slane %v4105, 1
    %v4107 = vadd.f32 %v4105, %v4106
    %v4108 = vrot.slane %v4070, 4
    %v4109 = vadd.f32 %v4070, %v4108
    %v4110 = vrot.slane %v4109, 2
    %v4111 = vadd.f32 %v4109, %v4110
    %v4112 = vrot.slane %v4111, 1
    %v4113 = vadd.f32 %v4111, %v4112
    %v4114 = vrot.slane %v4071, 4
    %v4115 = vadd.f32 %v4071, %v4114
    %v4116 = vrot.slane %v4115, 2
    %v4117 = vadd.f32 %v4115, %v4116
    %v4118 = vrot.slane %v4117, 1
    %v4119 = vadd.f32 %v4117, %v4118
    %v4120 = vmul.f32 %v4077, %v4047
    %v4121 = vmul.f32 %v4083, %v4047
    %v4122 = vmul.f32 %v4089, %v4047
    %v4123 = vmul.f32 %v4095, %v4047
    %v4124 = vmul.f32 %v4101, %v4047
    %v4125 = vmul.f32 %v4107, %v4047
    %v4126 = vmul.f32 %v4113, %v4047
    %v4127 = vmul.f32 %v4119, %v4047
    %v4128 = vld [vmem:[#allocation6] sm:$0xff]
    %v4129 = vadd.f32 %v4120, 1e-05
    %v4130 = vadd.f32 %v4121, 1e-05
    %v4131 = vadd.f32 %v4122, 1e-05
    %v4132 = vadd.f32 %v4123, 1e-05
    %v4133 = vadd.f32 %v4124, 1e-05
    %v4134 = vadd.f32 %v4125, 1e-05
    %v4135 = vadd.f32 %v4126, 1e-05
    %v4136 = vadd.f32 %v4127, 1e-05
    %v4137 = vrsqrt.pop %v4129
    %v4138 = vmul.f32 %v4137, %v4129
    %v4139 = vmul.f32 %v4138, %v4137
    %v4140 = vmul.f32 0.5, %v4139
    %v4141 = vsub.f32 1.5, %v4140
    %v4142 = vmul.f32 %v4137, %v4141
    %vm4143 = vweird.f32 %v4129
    %vm4144 = vweird.f32 %v4137
    %vm4145 = vmor %vm4143, %vm4144
    %v4146 = vsel %vm4145, %v4137, %v4142
    %v4147 = vrsqrt.pop %v4130
    %v4148 = vmul.f32 %v4147, %v4130
    %v4149 = vmul.f32 %v4148, %v4147
    %v4150 = vmul.f32 0.5, %v4149
    %v4151 = vsub.f32 1.5, %v4150
    %v4152 = vmul.f32 %v4147, %v4151
    %vm4153 = vweird.f32 %v4130
    %vm4154 = vweird.f32 %v4147
    %vm4155 = vmor %vm4153, %vm4154
    %v4156 = vsel %vm4155, %v4147, %v4152
    %v4157 = vrsqrt.pop %v4131
    %v4158 = vmul.f32 %v4157, %v4131
    %v4159 = vmul.f32 %v4158, %v4157
    %v4160 = vmul.f32 0.5, %v4159
    %v4161 = vsub.f32 1.5, %v4160
    %v4162 = vmul.f32 %v4157, %v4161
    %vm4163 = vweird.f32 %v4131
    %vm4164 = vweird.f32 %v4157
    %vm4165 = vmor %vm4163, %vm4164
    %v4166 = vsel %vm4165, %v4157, %v4162
    %v4167 = vrsqrt.pop %v4132
    %v4168 = vmul.f32 %v4167, %v4132
    %v4169 = vmul.f32 %v4168, %v4167
    %v4170 = vmul.f32 0.5, %v4169
    %v4171 = vsub.f32 1.5, %v4170
    %v4172 = vmul.f32 %v4167, %v4171
    %vm4173 = vweird.f32 %v4132
    %vm4174 = vweird.f32 %v4167
    %vm4175 = vmor %vm4173, %vm4174
    %v4176 = vsel %vm4175, %v4167, %v4172
    %v4177 = vrsqrt.pop %v4133
    %v4178 = vmul.f32 %v4177, %v4133
    %v4179 = vmul.f32 %v4178, %v4177
    %v4180 = vmul.f32 0.5, %v4179
    %v4181 = vsub.f32 1.5, %v4180
    %v4182 = vmul.f32 %v4177, %v4181
    %vm4183 = vweird.f32 %v4133
    %vm4184 = vweird.f32 %v4177
    %vm4185 = vmor %vm4183, %vm4184
    %v4186 = vsel %vm4185, %v4177, %v4182
    %v4187 = vrsqrt.pop %v4134
    %v4188 = vmul.f32 %v4187, %v4134
    %v4189 = vmul.f32 %v4188, %v4187
    %v4190 = vmul.f32 0.5, %v4189
    %v4191 = vsub.f32 1.5, %v4190
    %v4192 = vmul.f32 %v4187, %v4191
    %vm4193 = vweird.f32 %v4134
    %vm4194 = vweird.f32 %v4187
    %vm4195 = vmor %vm4193, %vm4194
    %v4196 = vsel %vm4195, %v4187, %v4192
    %v4197 = vrsqrt.pop %v4135
    %v4198 = vmul.f32 %v4197, %v4135
    %v4199 = vmul.f32 %v4198, %v4197
    %v4200 = vmul.f32 0.5, %v4199
    %v4201 = vsub.f32 1.5, %v4200
    %v4202 = vmul.f32 %v4197, %v4201
    %vm4203 = vweird.f32 %v4135
    %vm4204 = vweird.f32 %v4197
    %vm4205 = vmor %vm4203, %vm4204
    %v4206 = vsel %vm4205, %v4197, %v4202
    %v4207 = vrsqrt.pop %v4136
    %v4208 = vmul.f32 %v4207, %v4136
    %v4209 = vmul.f32 %v4208, %v4207
    %v4210 = vmul.f32 0.5, %v4209
    %v4211 = vsub.f32 1.5, %v4210
    %v4212 = vmul.f32 %v4207, %v4211
    %vm4213 = vweird.f32 %v4136
    %vm4214 = vweird.f32 %v4207
    %vm4215 = vmor %vm4213, %vm4214
    %v4216 = vsel %vm4215, %v4207, %v4212
    %v4225 = vrot.slane %v4156, 7
    %v4226 = vrot.slane %v4166, 6
    %v4227 = vrot.slane %v4176, 5
    %v4228 = vrot.slane %v4186, 4
    %v4229 = vrot.slane %v4196, 3
    %v4230 = vrot.slane %v4206, 2
    %v4231 = vrot.slane %v4216, 1
    %vm4232 = vcmask 1040384
    %v4233 = vsel %vm4232, %v4146, %v4225
    %vm4234 = vcmask 1042434
    %v4235 = vsel %vm4234, %v4226, %v4227
    %vm4236 = vcmask 1041408
    %v4237 = vsel %vm4236, %v4233, %v4235
    %vm4238 = vcmask 1044484
    %v4239 = vsel %vm4238, %v4228, %v4229
    %vm4240 = vcmask 1046534
    %v4241 = vsel %vm4240, %v4230, %v4231
    %vm4242 = vcmask 1045508
    %v4243 = vsel %vm4242, %v4239, %v4241
    %vm4244 = vcmask 1043456
    %v4245 = vsel %vm4244, %v4237, %v4243
    %v4247 = vmul.f32 %v4128, %v4245
    %v4249 = vperm.slane %v4247, 0
    %v4250 = vperm.slane %v4247, 1
    %v4251 = vperm.slane %v4247, 2
    %v4252 = vperm.slane %v4247, 3
    %v4253 = vperm.slane %v4247, 4
    %v4254 = vperm.slane %v4247, 5
    %v4255 = vperm.slane %v4247, 6
    %v4256 = vperm.slane %v4247, 7
    %v4265 = vmul.f32 %v4056, %v4249
    %v4266 = vmul.f32 %v4057, %v4250
    %v4267 = vmul.f32 %v4058, %v4251
    %v4268 = vmul.f32 %v4059, %v4252
    %v4269 = vmul.f32 %v4060, %v4253
    %v4270 = vmul.f32 %v4061, %v4254
    %v4271 = vmul.f32 %v4062, %v4255
    %v4272 = vmul.f32 %v4063, %v4256
    %v4273 = vadd.f32 %v4265, %v4266
    %v4274 = vadd.f32 %v4273, %v4267
    %v4275 = vadd.f32 %v4274, %v4268
    %v4276 = vadd.f32 %v4275, %v4269
    %v4277 = vadd.f32 %v4276, %v4270
    %v4278 = vadd.f32 %v4277, %v4271
    %v4279 = vadd.f32 %v4278, %v4272
    %4280 = vadd.xlane.f32.xlu0 %v4279
    %v4281 = vpop.xlane.xlu0 %4280
    %vm4282 = vcmask 7168
    %4283 = vst.msk [vmem:[%s3] sm:$0xff] %vm4282, %v4281
    // Predicated region
    $region26: #{model_forward.1} parent=1 // pred_check
      _
    $region27: #{model_forward.1} parent=1 // pred_check_branch
      %4285 = sbr.rel (0) target = $region29
    $region28: #{model_forward.1} parent=1 // pred_region
      _
    $region29: #{model_forward.1} parent=1 // pred_fallthru
      _
    // Predicated region
    $region30: #{model_forward.1} parent=1 // pred_check
      _
    $region31: #{model_forward.1} parent=1 // pred_check_branch
      %4287 = sbr.rel (0) target = $region33
    $region32: #{model_forward.1} parent=1 // pred_region
      _
    $region33: #{model_forward.1} parent=1 // pred_fallthru
      _
    %4288 = vsyncpa [#allocation3], 1
    %4289 = vsyncpa [#allocation5], 1

</llo_original>
